<compile_context>
chip_gen: v7x
topology: tpu7x:2x2x1
jax: 0.10.0
libtpu: 0.0.40
codegen_flags: <defaults>
</compile_context>

<pallas_src>
import jax
import jax.numpy as jnp
from jax import lax
from jax.experimental import pallas as pl
from jax.experimental.pallas import tpu as pltpu


def _ceil_to(v, m):
    return ((v + m - 1) // m) * m


def _bilstm_class_kernel(x_ref, wih_f_ref, whh_f_ref, wih_b_ref, whh_b_ref,
                         wd_f_ref, wd_b_ref, bd_ref, out_ref):
    M, Bb, _ = x_ref.shape           # seq length, batch rows (mult of 8), padded feats
    Hp = whh_f_ref.shape[0]          # padded hidden size (multiple of 128)
    mid = M // 2
    nf = mid + 1                     # fwd consumes x[0 .. mid]
    nb = M - mid                     # bwd consumes x[M-1 .. mid]   (nb <= nf always)
    nchunk = Hp // 128

    # bf16 gate-fused weights, resident for the whole recurrence.
    wih_f = wih_f_ref[...]
    whh_f = whh_f_ref[...]
    wih_b = wih_b_ref[...]
    whh_b = whh_b_ref[...]

    def sigm(v):                     # sigmoid(x) = 0.5*(1 + tanh(x/2)) -> 1 EUP push
        return 0.5 * jnp.tanh(0.5 * v) + 0.5

    def cell(gates, c):
        # PyTorch gate order (i, f, g, o); 128-lane chunks cap live vregs between
        # the MXU result and the VPU/EUP phase.  Gate slices are 128-aligned.
        hs, cs = [], []
        for j in range(nchunk):
            lo, hi = j * 128, (j + 1) * 128
            i = sigm(gates[:, 0 * Hp + lo:0 * Hp + hi])
            f = sigm(gates[:, 1 * Hp + lo:1 * Hp + hi])
            g = jnp.tanh(gates[:, 2 * Hp + lo:2 * Hp + hi])
            o = sigm(gates[:, 3 * Hp + lo:3 * Hp + hi])
            cj = f * c[:, lo:hi] + i * g
            cs.append(cj)
            hs.append(o * jnp.tanh(cj))
        if nchunk == 1:
            return hs[0], cs[0]
        return jnp.concatenate(hs, axis=-1), jnp.concatenate(cs, axis=-1)

    def dir_step(t, h, c, wih, whh):
        # gates = [x_t, 1, 0...] @ Wih' + h @ Whh'   (bias folded into Wih ones-row)
        x_t = x_ref[t].astype(jnp.bfloat16)
        gates = (jnp.dot(h.astype(jnp.bfloat16), whh,
                         preferred_element_type=jnp.float32)
                 + jnp.dot(x_t, wih, preferred_element_type=jnp.float32))
        return cell(gates, c)

    def fwd_step(s, h, c):
        return dir_step(s, h, c, wih_f, whh_f)

    def bwd_step(s, h, c):
        return dir_step(M - 1 - s, h, c, wih_b, whh_b)

    zeros = jnp.zeros((Bb, Hp), jnp.float32)

    # Interleave the (data-independent) fwd / bwd recurrences.  Bounded unroll so
    # long sequences don't blow the vreg budget / bundle stream.
    def merged_body(s, carry):
        hf, cf, hb, cb = carry
        hf, cf = fwd_step(s, hf, cf)
        hb, cb = bwd_step(s, hb, cb)
        return hf, cf, hb, cb

    unroll = True if nb <= 6 else 2
    hf, cf, hb, cb = lax.fori_loop(0, nb, merged_body,
                                   (zeros, zeros, zeros, zeros), unroll=unroll)
    if nf > nb:                      # static Python branch: only hit for even M
        hf, cf = fwd_step(nb, hf, cf)

    # Dense layer on the centre-timestep hidden states: split the [2H, classes]
    # weight into fwd/bwd halves (identical math to concat([h_f, h_b]) @ W).
    out = (jnp.dot(hf, wd_f_ref[...], preferred_element_type=jnp.float32)
           + jnp.dot(hb, wd_b_ref[...], preferred_element_type=jnp.float32)
           + bd_ref[...])
    out_ref[...] = out.astype(out_ref.dtype)


def _fuse_gate_weights(w, in_pad, H, Hp):
    """PyTorch packs w as [4H, K] in gate order (i, f, g, o).

    Returns the lane-fused, zero-padded, transposed weight [in_pad, 4*Hp] so the
    kernel computes  gates = inp @ fused  with 128-aligned gate slices.
    """
    K = w.shape[1]
    w4 = jnp.transpose(w.reshape(4, H, K), (2, 0, 1))          # [K, 4, H]
    w4 = jnp.pad(w4, ((0, in_pad - K), (0, 0), (0, Hp - H)))   # [in_pad, 4, Hp]
    return w4.reshape(in_pad, 4 * Hp)


def _fuse_direction(params, tag, Dp, H, Hp):
    w_ih = params[f'w_ih_{tag}']
    w_hh = params[f'w_hh_{tag}']
    b = params[f'b_ih_{tag}'] + params[f'b_hh_{tag}']
    # Append the bias as one extra "input feature" row; the wrapper appends a
    # matching ones column to x, so the bias add rides the per-step x matmul.
    wih_aug = jnp.concatenate([w_ih, b[:, None]], axis=1)       # [4H, D+1]
    wih = _fuse_gate_weights(wih_aug, Dp, H, Hp).astype(jnp.bfloat16)
    whh = _fuse_gate_weights(w_hh, Hp, H, Hp).astype(jnp.bfloat16)
    return wih, whh


def _full_spec(arr):
    nd = arr.ndim
    return pl.BlockSpec(arr.shape, lambda b, _nd=nd: (0,) * _nd)


def _pick_batch_block(B):
    """Batch rows per grid program (multiple of 8)."""
    Bp8 = _ceil_to(B, 8)
    if B >= 256:
        return 128                               # full MXU rows (v5e) and G >= 2
    if B >= 16:
        # >= 2 programs so a 2-TensorCore part (v7x) uses both cores.
        return min(64, _ceil_to((Bp8 + 1) // 2, 8))
    return Bp8                                   # tiny batch: one block


def init_params(key, classes=16, Nmodes=2, hidden_size=226):
    D = 2 * Nmodes
    H = hidden_size
    ks = jax.random.split(key, 10)
    std = 1.0 / jnp.sqrt(jnp.float32(H))

    def u(k, shape):
        return jax.random.uniform(k, shape, jnp.float32, -std, std)

    return dict(
        w_ih_f=u(ks[0], (4 * H, D)), w_hh_f=u(ks[1], (4 * H, H)),
        b_ih_f=u(ks[2], (4 * H,)),  b_hh_f=u(ks[3], (4 * H,)),
        w_ih_b=u(ks[4], (4 * H, D)), w_hh_b=u(ks[5], (4 * H, H)),
        b_ih_b=u(ks[6], (4 * H,)),  b_hh_b=u(ks[7], (4 * H,)),
        # nn.init.normal_(dense.weight, mean=0.0, std=0.01)
        w_dense=0.01 * jax.random.normal(ks[8], (classes, 2 * H), jnp.float32),
        b_dense=u(ks[9], (classes,)),
    )


def eq_bilstm_class_forward(x, task_info, params, classes):
    """x: complex [B, M, Nmodes]; task_info unused by the reference forward."""
    del task_info  # TODO(synk): P = get_power(task_info, ...) is computed upstream but never used.
    B, M, Nmodes = x.shape
    D = 2 * Nmodes
    H = params['w_hh_f'].shape[1]
    Hp = _ceil_to(H, 128)            # padded hidden -> 128-aligned gate slices
    Din = D + 1                      # +1 ones column carries the LSTM bias
    Dp = _ceil_to(Din, 8)

    Bblk = _pick_batch_block(B)
    Bp = _ceil_to(B, Bblk)
    G = Bp // Bblk

    # Real/imag features (+ ones column), batch-padded, grouped and time-major per
    # batch chunk: [G, M, Bblk, Dp].  Per-step the kernel reads x_ref[t] directly.
    x_real = jnp.concatenate([x.real, x.imag], axis=-1).astype(jnp.float32)   # [B, M, D]
    ones = jnp.ones((B, M, 1), jnp.float32)
    x_feat = jnp.concatenate([x_real, ones], axis=-1)                          # [B, M, Din]
    x_feat = jnp.pad(x_feat, ((0, Bp - B), (0, 0), (0, Dp - Din)))             # [Bp, M, Dp]
    x_grp = x_feat.reshape(G, Bblk, M, Dp).transpose(0, 2, 1, 3)               # [G, M, Bblk, Dp]

    wih_f, whh_f = _fuse_direction(params, 'f', Dp, H, Hp)
    wih_b, whh_b = _fuse_direction(params, 'b', Dp, H, Hp)

    wd = jnp.transpose(params['w_dense'])                    # [2H, classes]
    wd_f = jnp.pad(wd[:H, :], ((0, Hp - H), (0, 0)))         # [Hp, classes]
    wd_b = jnp.pad(wd[H:, :], ((0, Hp - H), (0, 0)))         # [Hp, classes]
    bd = params['b_dense'].reshape(1, classes)

    # VMEM footprint (conservative: double-buffered, lane-padded) -> explicit limit.
    cl = _ceil_to(classes, 128)
    est = (2 * M * Bblk * max(Dp, 128) * 4           # x block (lanes pad to 128)
           + 2 * 2 * Hp * 4 * Hp * 2                 # whh_f / whh_b (bf16)
           + 2 * 2 * Dp * 4 * Hp * 2                 # wih_f / wih_b (bf16)
           + 2 * 2 * Hp * cl * 4                     # wd_f / wd_b
           + 2 * Bblk * cl * 4)                      # out block
    vmem_limit = int(min(max(2 * est, 16 << 20), 48 << 20))

    out = pl.pallas_call(
        _bilstm_class_kernel,
        out_shape=jax.ShapeDtypeStruct((Bp, classes), jnp.float32),
        grid=(G,),
        in_specs=[
            pl.BlockSpec((None, M, Bblk, Dp), lambda b: (b, 0, 0, 0)),
            _full_spec(wih_f), _full_spec(whh_f),
            _full_spec(wih_b), _full_spec(whh_b),
            _full_spec(wd_f), _full_spec(wd_b), _full_spec(bd),
        ],
        out_specs=pl.BlockSpec((Bblk, classes), lambda b: (b, 0)),
        compiler_params=pltpu.CompilerParams(
            dimension_semantics=("parallel",),
            vmem_limit_bytes=vmem_limit),
    )(x_grp, wih_f, whh_f, wih_b, whh_b, wd_f, wd_b, bd)
    return out[:B]


def reference_forward(x, params, classes):
    """Pure-JAX reference mirroring torch.nn.LSTM(bidirectional) + Linear."""
    B, M, Nmodes = x.shape
    H = params['w_hh_f'].shape[1]
    xr = jnp.concatenate([x.real, x.imag], axis=-1).astype(jnp.float32)  # [B, M, D]

    def run_dir(xseq, w_ih, w_hh, b_ih, b_hh):
        def step(carry, x_t):
            h, c = carry
            gates = x_t @ w_ih.T + h @ w_hh.T + b_ih + b_hh
            i, f, g, o = jnp.split(gates, 4, axis=-1)
            i, f, o = jax.nn.sigmoid(i), jax.nn.sigmoid(f), jax.nn.sigmoid(o)
            g = jnp.tanh(g)
            c = f * c + i * g
            h = o * jnp.tanh(c)
            return (h, c), h
        h0 = jnp.zeros((B, H), jnp.float32)
        c0 = jnp.zeros((B, H), jnp.float32)
        _, hs = lax.scan(step, (h0, c0), jnp.transpose(xseq, (1, 0, 2)))
        return jnp.transpose(hs, (1, 0, 2))  # [B, M, H]

    h_f = run_dir(xr, params['w_ih_f'], params['w_hh_f'],
                  params['b_ih_f'], params['b_hh_f'])
    h_b = run_dir(xr[:, ::-1, :], params['w_ih_b'], params['w_hh_b'],
                  params['b_ih_b'], params['b_hh_b'])[:, ::-1, :]
    out_seq = jnp.concatenate([h_f, h_b], axis=-1)      # [B, M, 2H]
    feat = out_seq[:, M // 2, :]                        # [B, 2H]
    return feat @ params['w_dense'].T + params['b_dense']


if __name__ == "__main__":
    # Small shapes consistent with the module: complex x [B, M, Nmodes].
    B, M, Nmodes, H, classes = 4, 9, 2, 32, 16

    key = jax.random.PRNGKey(0)
    kx_r, kx_i, kt, kp = jax.random.split(key, 4)
    x = (jax.random.normal(kx_r, (B, M, Nmodes), jnp.float32)
         + 1j * jax.random.normal(kx_i, (B, M, Nmodes), jnp.float32)).astype(jnp.complex64)
    task_info = jax.random.normal(kt, (B, 4), jnp.float32)  # unused by forward

    params = init_params(kp, classes=classes, Nmodes=Nmodes, hidden_size=H)

    out = eq_bilstm_class_forward(x, task_info, params, classes)
    out = jax.block_until_ready(out)

    ref = reference_forward(x, params, classes)
    assert out.shape == (B, classes)
    # bf16 recurrent matmuls -> loosened tolerance vs. the f32 reference.
    assert jnp.allclose(out, ref, rtol=5e-2, atol=1.5e-2), (
        f"max abs diff = {jnp.max(jnp.abs(out - ref))}")

    print("KERNEL_OK")
</pallas_src>

<mosaic_0001>
module attributes {stable_mosaic.version = 11 : i64} {
  func.func @_bilstm_class_kernel(%arg0: i32, %arg1: memref<1x9x8x8xf32, #tpu.memory_space<vmem>>, %arg2: memref<8x512xbf16, #tpu.memory_space<vmem>>, %arg3: memref<128x512xbf16, #tpu.memory_space<vmem>>, %arg4: memref<8x512xbf16, #tpu.memory_space<vmem>>, %arg5: memref<128x512xbf16, #tpu.memory_space<vmem>>, %arg6: memref<128x16xf32, #tpu.memory_space<vmem>>, %arg7: memref<128x16xf32, #tpu.memory_space<vmem>>, %arg8: memref<1x16xf32, #tpu.memory_space<vmem>>, %arg9: memref<8x16xf32, #tpu.memory_space<vmem>>) attributes {dimension_semantics = [#tpu.dimension_semantics<parallel>], iteration_bounds = array<i64: 1>, scalar_prefetch = 0 : i64, scratch_operands = 0 : i64, tpu.core_type = #tpu.core_type<tc>, window_params = [{transform_indices = @transform_0, window_bounds = array<i64: 1, 9, 8, 8>}, {pipeline_mode = #tpu.pipeline_mode<synchronous>, transform_indices = @transform_1, window_bounds = array<i64: 8, 512>}, {pipeline_mode = #tpu.pipeline_mode<synchronous>, transform_indices = @transform_2, window_bounds = array<i64: 128, 512>}, {pipeline_mode = #tpu.pipeline_mode<synchronous>, transform_indices = @transform_3, window_bounds = array<i64: 8, 512>}, {pipeline_mode = #tpu.pipeline_mode<synchronous>, transform_indices = @transform_4, window_bounds = array<i64: 128, 512>}, {pipeline_mode = #tpu.pipeline_mode<synchronous>, transform_indices = @transform_5, window_bounds = array<i64: 128, 16>}, {pipeline_mode = #tpu.pipeline_mode<synchronous>, transform_indices = @transform_6, window_bounds = array<i64: 128, 16>}, {pipeline_mode = #tpu.pipeline_mode<synchronous>, transform_indices = @transform_7, window_bounds = array<i64: 1, 16>}, {transform_indices = @transform_8, window_bounds = array<i64: 8, 16>}]} {
    %c0 = arith.constant 0 : index
    %c0_0 = arith.constant 0 : index
    %0 = vector.load %arg2[%c0, %c0_0] : memref<8x512xbf16, #tpu.memory_space<vmem>>, vector<8x512xbf16>
    %c0_1 = arith.constant 0 : index
    %c0_2 = arith.constant 0 : index
    %1 = vector.load %arg3[%c0_1, %c0_2] : memref<128x512xbf16, #tpu.memory_space<vmem>>, vector<128x512xbf16>
    %c0_3 = arith.constant 0 : index
    %c0_4 = arith.constant 0 : index
    %2 = vector.load %arg4[%c0_3, %c0_4] : memref<8x512xbf16, #tpu.memory_space<vmem>>, vector<8x512xbf16>
    %c0_5 = arith.constant 0 : index
    %c0_6 = arith.constant 0 : index
    %3 = vector.load %arg5[%c0_5, %c0_6] : memref<128x512xbf16, #tpu.memory_space<vmem>>, vector<128x512xbf16>
    %cst = arith.constant 0.000000e+00 : f32
    %4 = vector.broadcast %cst : f32 to vector<8x128xf32>
    %c0_i32 = arith.constant 0 : i32
    %c0_7 = arith.constant 0 : index
    %5 = arith.index_cast %c0_i32 : i32 to index
    %c0_8 = arith.constant 0 : index
    %c0_9 = arith.constant 0 : index
    %6 = vector.load %arg1[%c0_7, %5, %c0_8, %c0_9] : memref<1x9x8x8xf32, #tpu.memory_space<vmem>>, vector<1x1x8x8xf32>
    %7 = vector.shape_cast %6 : vector<1x1x8x8xf32> to vector<8x8xf32>
    %8 = arith.truncf %7 : vector<8x8xf32> to vector<8x8xbf16>
    %9 = arith.truncf %4 : vector<8x128xf32> to vector<8x128xbf16>
    %cst_10 = arith.constant dense<0.000000e+00> : vector<8x512xf32>
    %10 = tpu.matmul %9, %1, %cst_10 {dimension_numbers = #tpu.dot_dimension_numbers<[1], [0], [0], [1], [0, 0, 1, 1], [], []>} : vector<8x128xbf16>, vector<128x512xbf16>, vector<8x512xf32> -> vector<8x512xf32>
    %cst_11 = arith.constant dense<0.000000e+00> : vector<8x512xf32>
    %11 = tpu.matmul %8, %0, %cst_11 {dimension_numbers = #tpu.dot_dimension_numbers<[1], [0], [0], [1], [0, 0, 1, 1], [], []>} : vector<8x8xbf16>, vector<8x512xbf16>, vector<8x512xf32> -> vector<8x512xf32>
    %12 = arith.addf %10, %11 : vector<8x512xf32>
    %13 = vector.extract_strided_slice %12 {offsets = [0, 0], sizes = [8, 128], strides = [1, 1]} : vector<8x512xf32> to vector<8x128xf32>
    %cst_12 = arith.constant 5.000000e-01 : f32
    %14 = vector.broadcast %cst_12 : f32 to vector<8x128xf32>
    %15 = arith.mulf %14, %13 : vector<8x128xf32>
    %16 = math.tanh %15 : vector<8x128xf32>
    %cst_13 = arith.constant 5.000000e-01 : f32
    %17 = vector.broadcast %cst_13 : f32 to vector<8x128xf32>
    %18 = arith.mulf %17, %16 : vector<8x128xf32>
    %cst_14 = arith.constant 5.000000e-01 : f32
    %19 = vector.broadcast %cst_14 : f32 to vector<8x128xf32>
    %20 = arith.addf %18, %19 : vector<8x128xf32>
    %21 = vector.extract_strided_slice %12 {offsets = [0, 128], sizes = [8, 128], strides = [1, 1]} : vector<8x512xf32> to vector<8x128xf32>
    %cst_15 = arith.constant 5.000000e-01 : f32
    %22 = vector.broadcast %cst_15 : f32 to vector<8x128xf32>
    %23 = arith.mulf %22, %21 : vector<8x128xf32>
    %24 = math.tanh %23 : vector<8x128xf32>
    %cst_16 = arith.constant 5.000000e-01 : f32
    %25 = vector.broadcast %cst_16 : f32 to vector<8x128xf32>
    %26 = arith.mulf %25, %24 : vector<8x128xf32>
    %cst_17 = arith.constant 5.000000e-01 : f32
    %27 = vector.broadcast %cst_17 : f32 to vector<8x128xf32>
    %28 = arith.addf %26, %27 : vector<8x128xf32>
    %29 = vector.extract_strided_slice %12 {offsets = [0, 256], sizes = [8, 128], strides = [1, 1]} : vector<8x512xf32> to vector<8x128xf32>
    %30 = math.tanh %29 : vector<8x128xf32>
    %31 = vector.extract_strided_slice %12 {offsets = [0, 384], sizes = [8, 128], strides = [1, 1]} : vector<8x512xf32> to vector<8x128xf32>
    %cst_18 = arith.constant 5.000000e-01 : f32
    %32 = vector.broadcast %cst_18 : f32 to vector<8x128xf32>
    %33 = arith.mulf %32, %31 : vector<8x128xf32>
    %34 = math.tanh %33 : vector<8x128xf32>
    %cst_19 = arith.constant 5.000000e-01 : f32
    %35 = vector.broadcast %cst_19 : f32 to vector<8x128xf32>
    %36 = arith.mulf %35, %34 : vector<8x128xf32>
    %cst_20 = arith.constant 5.000000e-01 : f32
    %37 = vector.broadcast %cst_20 : f32 to vector<8x128xf32>
    %38 = arith.addf %36, %37 : vector<8x128xf32>
    %39 = arith.mulf %28, %4 : vector<8x128xf32>
    %40 = arith.mulf %20, %30 : vector<8x128xf32>
    %41 = arith.addf %39, %40 : vector<8x128xf32>
    %42 = math.tanh %41 : vector<8x128xf32>
    %43 = arith.mulf %38, %42 : vector<8x128xf32>
    %c8_i32 = arith.constant 8 : i32
    %44 = arith.subi %c8_i32, %c0_i32 : i32
    %c0_21 = arith.constant 0 : index
    %45 = arith.index_cast %44 : i32 to index
    %c0_22 = arith.constant 0 : index
    %c0_23 = arith.constant 0 : index
    %46 = vector.load %arg1[%c0_21, %45, %c0_22, %c0_23] : memref<1x9x8x8xf32, #tpu.memory_space<vmem>>, vector<1x1x8x8xf32>
    %47 = vector.shape_cast %46 : vector<1x1x8x8xf32> to vector<8x8xf32>
    %48 = arith.truncf %47 : vector<8x8xf32> to vector<8x8xbf16>
    %49 = arith.truncf %4 : vector<8x128xf32> to vector<8x128xbf16>
    %cst_24 = arith.constant dense<0.000000e+00> : vector<8x512xf32>
    %50 = tpu.matmul %49, %3, %cst_24 {dimension_numbers = #tpu.dot_dimension_numbers<[1], [0], [0], [1], [0, 0, 1, 1], [], []>} : vector<8x128xbf16>, vector<128x512xbf16>, vector<8x512xf32> -> vector<8x512xf32>
    %cst_25 = arith.constant dense<0.000000e+00> : vector<8x512xf32>
    %51 = tpu.matmul %48, %2, %cst_25 {dimension_numbers = #tpu.dot_dimension_numbers<[1], [0], [0], [1], [0, 0, 1, 1], [], []>} : vector<8x8xbf16>, vector<8x512xbf16>, vector<8x512xf32> -> vector<8x512xf32>
    %52 = arith.addf %50, %51 : vector<8x512xf32>
    %53 = vector.extract_strided_slice %52 {offsets = [0, 0], sizes = [8, 128], strides = [1, 1]} : vector<8x512xf32> to vector<8x128xf32>
    %cst_26 = arith.constant 5.000000e-01 : f32
    %54 = vector.broadcast %cst_26 : f32 to vector<8x128xf32>
    %55 = arith.mulf %54, %53 : vector<8x128xf32>
    %56 = math.tanh %55 : vector<8x128xf32>
    %cst_27 = arith.constant 5.000000e-01 : f32
    %57 = vector.broadcast %cst_27 : f32 to vector<8x128xf32>
    %58 = arith.mulf %57, %56 : vector<8x128xf32>
    %cst_28 = arith.constant 5.000000e-01 : f32
    %59 = vector.broadcast %cst_28 : f32 to vector<8x128xf32>
    %60 = arith.addf %58, %59 : vector<8x128xf32>
    %61 = vector.extract_strided_slice %52 {offsets = [0, 128], sizes = [8, 128], strides = [1, 1]} : vector<8x512xf32> to vector<8x128xf32>
    %cst_29 = arith.constant 5.000000e-01 : f32
    %62 = vector.broadcast %cst_29 : f32 to vector<8x128xf32>
    %63 = arith.mulf %62, %61 : vector<8x128xf32>
    %64 = math.tanh %63 : vector<8x128xf32>
    %cst_30 = arith.constant 5.000000e-01 : f32
    %65 = vector.broadcast %cst_30 : f32 to vector<8x128xf32>
    %66 = arith.mulf %65, %64 : vector<8x128xf32>
    %cst_31 = arith.constant 5.000000e-01 : f32
    %67 = vector.broadcast %cst_31 : f32 to vector<8x128xf32>
    %68 = arith.addf %66, %67 : vector<8x128xf32>
    %69 = vector.extract_strided_slice %52 {offsets = [0, 256], sizes = [8, 128], strides = [1, 1]} : vector<8x512xf32> to vector<8x128xf32>
    %70 = math.tanh %69 : vector<8x128xf32>
    %71 = vector.extract_strided_slice %52 {offsets = [0, 384], sizes = [8, 128], strides = [1, 1]} : vector<8x512xf32> to vector<8x128xf32>
    %cst_32 = arith.constant 5.000000e-01 : f32
    %72 = vector.broadcast %cst_32 : f32 to vector<8x128xf32>
    %73 = arith.mulf %72, %71 : vector<8x128xf32>
    %74 = math.tanh %73 : vector<8x128xf32>
    %cst_33 = arith.constant 5.000000e-01 : f32
    %75 = vector.broadcast %cst_33 : f32 to vector<8x128xf32>
    %76 = arith.mulf %75, %74 : vector<8x128xf32>
    %cst_34 = arith.constant 5.000000e-01 : f32
    %77 = vector.broadcast %cst_34 : f32 to vector<8x128xf32>
    %78 = arith.addf %76, %77 : vector<8x128xf32>
    %79 = arith.mulf %68, %4 : vector<8x128xf32>
    %80 = arith.mulf %60, %70 : vector<8x128xf32>
    %81 = arith.addf %79, %80 : vector<8x128xf32>
    %82 = math.tanh %81 : vector<8x128xf32>
    %83 = arith.mulf %78, %82 : vector<8x128xf32>
    %c1_i32 = arith.constant 1 : i32
    %c0_35 = arith.constant 0 : index
    %84 = arith.index_cast %c1_i32 : i32 to index
    %c0_36 = arith.constant 0 : index
    %c0_37 = arith.constant 0 : index
    %85 = vector.load %arg1[%c0_35, %84, %c0_36, %c0_37] : memref<1x9x8x8xf32, #tpu.memory_space<vmem>>, vector<1x1x8x8xf32>
    %86 = vector.shape_cast %85 : vector<1x1x8x8xf32> to vector<8x8xf32>
    %87 = arith.truncf %86 : vector<8x8xf32> to vector<8x8xbf16>
    %88 = arith.truncf %43 : vector<8x128xf32> to vector<8x128xbf16>
    %cst_38 = arith.constant dense<0.000000e+00> : vector<8x512xf32>
    %89 = tpu.matmul %88, %1, %cst_38 {dimension_numbers = #tpu.dot_dimension_numbers<[1], [0], [0], [1], [0, 0, 1, 1], [], []>} : vector<8x128xbf16>, vector<128x512xbf16>, vector<8x512xf32> -> vector<8x512xf32>
    %cst_39 = arith.constant dense<0.000000e+00> : vector<8x512xf32>
    %90 = tpu.matmul %87, %0, %cst_39 {dimension_numbers = #tpu.dot_dimension_numbers<[1], [0], [0], [1], [0, 0, 1, 1], [], []>} : vector<8x8xbf16>, vector<8x512xbf16>, vector<8x512xf32> -> vector<8x512xf32>
    %91 = arith.addf %89, %90 : vector<8x512xf32>
    %92 = vector.extract_strided_slice %91 {offsets = [0, 0], sizes = [8, 128], strides = [1, 1]} : vector<8x512xf32> to vector<8x128xf32>
    %cst_40 = arith.constant 5.000000e-01 : f32
    %93 = vector.broadcast %cst_40 : f32 to vector<8x128xf32>
    %94 = arith.mulf %93, %92 : vector<8x128xf32>
    %95 = math.tanh %94 : vector<8x128xf32>
    %cst_41 = arith.constant 5.000000e-01 : f32
    %96 = vector.broadcast %cst_41 : f32 to vector<8x128xf32>
    %97 = arith.mulf %96, %95 : vector<8x128xf32>
    %cst_42 = arith.constant 5.000000e-01 : f32
    %98 = vector.broadcast %cst_42 : f32 to vector<8x128xf32>
    %99 = arith.addf %97, %98 : vector<8x128xf32>
    %100 = vector.extract_strided_slice %91 {offsets = [0, 128], sizes = [8, 128], strides = [1, 1]} : vector<8x512xf32> to vector<8x128xf32>
    %cst_43 = arith.constant 5.000000e-01 : f32
    %101 = vector.broadcast %cst_43 : f32 to vector<8x128xf32>
    %102 = arith.mulf %101, %100 : vector<8x128xf32>
    %103 = math.tanh %102 : vector<8x128xf32>
    %cst_44 = arith.constant 5.000000e-01 : f32
    %104 = vector.broadcast %cst_44 : f32 to vector<8x128xf32>
    %105 = arith.mulf %104, %103 : vector<8x128xf32>
    %cst_45 = arith.constant 5.000000e-01 : f32
    %106 = vector.broadcast %cst_45 : f32 to vector<8x128xf32>
    %107 = arith.addf %105, %106 : vector<8x128xf32>
    %108 = vector.extract_strided_slice %91 {offsets = [0, 256], sizes = [8, 128], strides = [1, 1]} : vector<8x512xf32> to vector<8x128xf32>
    %109 = math.tanh %108 : vector<8x128xf32>
    %110 = vector.extract_strided_slice %91 {offsets = [0, 384], sizes = [8, 128], strides = [1, 1]} : vector<8x512xf32> to vector<8x128xf32>
    %cst_46 = arith.constant 5.000000e-01 : f32
    %111 = vector.broadcast %cst_46 : f32 to vector<8x128xf32>
    %112 = arith.mulf %111, %110 : vector<8x128xf32>
    %113 = math.tanh %112 : vector<8x128xf32>
    %cst_47 = arith.constant 5.000000e-01 : f32
    %114 = vector.broadcast %cst_47 : f32 to vector<8x128xf32>
    %115 = arith.mulf %114, %113 : vector<8x128xf32>
    %cst_48 = arith.constant 5.000000e-01 : f32
    %116 = vector.broadcast %cst_48 : f32 to vector<8x128xf32>
    %117 = arith.addf %115, %116 : vector<8x128xf32>
    %118 = arith.mulf %107, %41 : vector<8x128xf32>
    %119 = arith.mulf %99, %109 : vector<8x128xf32>
    %120 = arith.addf %118, %119 : vector<8x128xf32>
    %121 = math.tanh %120 : vector<8x128xf32>
    %122 = arith.mulf %117, %121 : vector<8x128xf32>
    %c8_i32_49 = arith.constant 8 : i32
    %123 = arith.subi %c8_i32_49, %c1_i32 : i32
    %c0_50 = arith.constant 0 : index
    %124 = arith.index_cast %123 : i32 to index
    %c0_51 = arith.constant 0 : index
    %c0_52 = arith.constant 0 : index
    %125 = vector.load %arg1[%c0_50, %124, %c0_51, %c0_52] : memref<1x9x8x8xf32, #tpu.memory_space<vmem>>, vector<1x1x8x8xf32>
    %126 = vector.shape_cast %125 : vector<1x1x8x8xf32> to vector<8x8xf32>
    %127 = arith.truncf %126 : vector<8x8xf32> to vector<8x8xbf16>
    %128 = arith.truncf %83 : vector<8x128xf32> to vector<8x128xbf16>
    %cst_53 = arith.constant dense<0.000000e+00> : vector<8x512xf32>
    %129 = tpu.matmul %128, %3, %cst_53 {dimension_numbers = #tpu.dot_dimension_numbers<[1], [0], [0], [1], [0, 0, 1, 1], [], []>} : vector<8x128xbf16>, vector<128x512xbf16>, vector<8x512xf32> -> vector<8x512xf32>
    %cst_54 = arith.constant dense<0.000000e+00> : vector<8x512xf32>
    %130 = tpu.matmul %127, %2, %cst_54 {dimension_numbers = #tpu.dot_dimension_numbers<[1], [0], [0], [1], [0, 0, 1, 1], [], []>} : vector<8x8xbf16>, vector<8x512xbf16>, vector<8x512xf32> -> vector<8x512xf32>
    %131 = arith.addf %129, %130 : vector<8x512xf32>
    %132 = vector.extract_strided_slice %131 {offsets = [0, 0], sizes = [8, 128], strides = [1, 1]} : vector<8x512xf32> to vector<8x128xf32>
    %cst_55 = arith.constant 5.000000e-01 : f32
    %133 = vector.broadcast %cst_55 : f32 to vector<8x128xf32>
    %134 = arith.mulf %133, %132 : vector<8x128xf32>
    %135 = math.tanh %134 : vector<8x128xf32>
    %cst_56 = arith.constant 5.000000e-01 : f32
    %136 = vector.broadcast %cst_56 : f32 to vector<8x128xf32>
    %137 = arith.mulf %136, %135 : vector<8x128xf32>
    %cst_57 = arith.constant 5.000000e-01 : f32
    %138 = vector.broadcast %cst_57 : f32 to vector<8x128xf32>
    %139 = arith.addf %137, %138 : vector<8x128xf32>
    %140 = vector.extract_strided_slice %131 {offsets = [0, 128], sizes = [8, 128], strides = [1, 1]} : vector<8x512xf32> to vector<8x128xf32>
    %cst_58 = arith.constant 5.000000e-01 : f32
    %141 = vector.broadcast %cst_58 : f32 to vector<8x128xf32>
    %142 = arith.mulf %141, %140 : vector<8x128xf32>
    %143 = math.tanh %142 : vector<8x128xf32>
    %cst_59 = arith.constant 5.000000e-01 : f32
    %144 = vector.broadcast %cst_59 : f32 to vector<8x128xf32>
    %145 = arith.mulf %144, %143 : vector<8x128xf32>
    %cst_60 = arith.constant 5.000000e-01 : f32
    %146 = vector.broadcast %cst_60 : f32 to vector<8x128xf32>
    %147 = arith.addf %145, %146 : vector<8x128xf32>
    %148 = vector.extract_strided_slice %131 {offsets = [0, 256], sizes = [8, 128], strides = [1, 1]} : vector<8x512xf32> to vector<8x128xf32>
    %149 = math.tanh %148 : vector<8x128xf32>
    %150 = vector.extract_strided_slice %131 {offsets = [0, 384], sizes = [8, 128], strides = [1, 1]} : vector<8x512xf32> to vector<8x128xf32>
    %cst_61 = arith.constant 5.000000e-01 : f32
    %151 = vector.broadcast %cst_61 : f32 to vector<8x128xf32>
    %152 = arith.mulf %151, %150 : vector<8x128xf32>
    %153 = math.tanh %152 : vector<8x128xf32>
    %cst_62 = arith.constant 5.000000e-01 : f32
    %154 = vector.broadcast %cst_62 : f32 to vector<8x128xf32>
    %155 = arith.mulf %154, %153 : vector<8x128xf32>
    %cst_63 = arith.constant 5.000000e-01 : f32
    %156 = vector.broadcast %cst_63 : f32 to vector<8x128xf32>
    %157 = arith.addf %155, %156 : vector<8x128xf32>
    %158 = arith.mulf %147, %81 : vector<8x128xf32>
    %159 = arith.mulf %139, %149 : vector<8x128xf32>
    %160 = arith.addf %158, %159 : vector<8x128xf32>
    %161 = math.tanh %160 : vector<8x128xf32>
    %162 = arith.mulf %157, %161 : vector<8x128xf32>
    %c2_i32 = arith.constant 2 : i32
    %c0_64 = arith.constant 0 : index
    %163 = arith.index_cast %c2_i32 : i32 to index
    %c0_65 = arith.constant 0 : index
    %c0_66 = arith.constant 0 : index
    %164 = vector.load %arg1[%c0_64, %163, %c0_65, %c0_66] : memref<1x9x8x8xf32, #tpu.memory_space<vmem>>, vector<1x1x8x8xf32>
    %165 = vector.shape_cast %164 : vector<1x1x8x8xf32> to vector<8x8xf32>
    %166 = arith.truncf %165 : vector<8x8xf32> to vector<8x8xbf16>
    %167 = arith.truncf %122 : vector<8x128xf32> to vector<8x128xbf16>
    %cst_67 = arith.constant dense<0.000000e+00> : vector<8x512xf32>
    %168 = tpu.matmul %167, %1, %cst_67 {dimension_numbers = #tpu.dot_dimension_numbers<[1], [0], [0], [1], [0, 0, 1, 1], [], []>} : vector<8x128xbf16>, vector<128x512xbf16>, vector<8x512xf32> -> vector<8x512xf32>
    %cst_68 = arith.constant dense<0.000000e+00> : vector<8x512xf32>
    %169 = tpu.matmul %166, %0, %cst_68 {dimension_numbers = #tpu.dot_dimension_numbers<[1], [0], [0], [1], [0, 0, 1, 1], [], []>} : vector<8x8xbf16>, vector<8x512xbf16>, vector<8x512xf32> -> vector<8x512xf32>
    %170 = arith.addf %168, %169 : vector<8x512xf32>
    %171 = vector.extract_strided_slice %170 {offsets = [0, 0], sizes = [8, 128], strides = [1, 1]} : vector<8x512xf32> to vector<8x128xf32>
    %cst_69 = arith.constant 5.000000e-01 : f32
    %172 = vector.broadcast %cst_69 : f32 to vector<8x128xf32>
    %173 = arith.mulf %172, %171 : vector<8x128xf32>
    %174 = math.tanh %173 : vector<8x128xf32>
    %cst_70 = arith.constant 5.000000e-01 : f32
    %175 = vector.broadcast %cst_70 : f32 to vector<8x128xf32>
    %176 = arith.mulf %175, %174 : vector<8x128xf32>
    %cst_71 = arith.constant 5.000000e-01 : f32
    %177 = vector.broadcast %cst_71 : f32 to vector<8x128xf32>
    %178 = arith.addf %176, %177 : vector<8x128xf32>
    %179 = vector.extract_strided_slice %170 {offsets = [0, 128], sizes = [8, 128], strides = [1, 1]} : vector<8x512xf32> to vector<8x128xf32>
    %cst_72 = arith.constant 5.000000e-01 : f32
    %180 = vector.broadcast %cst_72 : f32 to vector<8x128xf32>
    %181 = arith.mulf %180, %179 : vector<8x128xf32>
    %182 = math.tanh %181 : vector<8x128xf32>
    %cst_73 = arith.constant 5.000000e-01 : f32
    %183 = vector.broadcast %cst_73 : f32 to vector<8x128xf32>
    %184 = arith.mulf %183, %182 : vector<8x128xf32>
    %cst_74 = arith.constant 5.000000e-01 : f32
    %185 = vector.broadcast %cst_74 : f32 to vector<8x128xf32>
    %186 = arith.addf %184, %185 : vector<8x128xf32>
    %187 = vector.extract_strided_slice %170 {offsets = [0, 256], sizes = [8, 128], strides = [1, 1]} : vector<8x512xf32> to vector<8x128xf32>
    %188 = math.tanh %187 : vector<8x128xf32>
    %189 = vector.extract_strided_slice %170 {offsets = [0, 384], sizes = [8, 128], strides = [1, 1]} : vector<8x512xf32> to vector<8x128xf32>
    %cst_75 = arith.constant 5.000000e-01 : f32
    %190 = vector.broadcast %cst_75 : f32 to vector<8x128xf32>
    %191 = arith.mulf %190, %189 : vector<8x128xf32>
    %192 = math.tanh %191 : vector<8x128xf32>
    %cst_76 = arith.constant 5.000000e-01 : f32
    %193 = vector.broadcast %cst_76 : f32 to vector<8x128xf32>
    %194 = arith.mulf %193, %192 : vector<8x128xf32>
    %cst_77 = arith.constant 5.000000e-01 : f32
    %195 = vector.broadcast %cst_77 : f32 to vector<8x128xf32>
    %196 = arith.addf %194, %195 : vector<8x128xf32>
    %197 = arith.mulf %186, %120 : vector<8x128xf32>
    %198 = arith.mulf %178, %188 : vector<8x128xf32>
    %199 = arith.addf %197, %198 : vector<8x128xf32>
    %200 = math.tanh %199 : vector<8x128xf32>
    %201 = arith.mulf %196, %200 : vector<8x128xf32>
    %c8_i32_78 = arith.constant 8 : i32
    %202 = arith.subi %c8_i32_78, %c2_i32 : i32
    %c0_79 = arith.constant 0 : index
    %203 = arith.index_cast %202 : i32 to index
    %c0_80 = arith.constant 0 : index
    %c0_81 = arith.constant 0 : index
    %204 = vector.load %arg1[%c0_79, %203, %c0_80, %c0_81] : memref<1x9x8x8xf32, #tpu.memory_space<vmem>>, vector<1x1x8x8xf32>
    %205 = vector.shape_cast %204 : vector<1x1x8x8xf32> to vector<8x8xf32>
    %206 = arith.truncf %205 : vector<8x8xf32> to vector<8x8xbf16>
    %207 = arith.truncf %162 : vector<8x128xf32> to vector<8x128xbf16>
    %cst_82 = arith.constant dense<0.000000e+00> : vector<8x512xf32>
    %208 = tpu.matmul %207, %3, %cst_82 {dimension_numbers = #tpu.dot_dimension_numbers<[1], [0], [0], [1], [0, 0, 1, 1], [], []>} : vector<8x128xbf16>, vector<128x512xbf16>, vector<8x512xf32> -> vector<8x512xf32>
    %cst_83 = arith.constant dense<0.000000e+00> : vector<8x512xf32>
    %209 = tpu.matmul %206, %2, %cst_83 {dimension_numbers = #tpu.dot_dimension_numbers<[1], [0], [0], [1], [0, 0, 1, 1], [], []>} : vector<8x8xbf16>, vector<8x512xbf16>, vector<8x512xf32> -> vector<8x512xf32>
    %210 = arith.addf %208, %209 : vector<8x512xf32>
    %211 = vector.extract_strided_slice %210 {offsets = [0, 0], sizes = [8, 128], strides = [1, 1]} : vector<8x512xf32> to vector<8x128xf32>
    %cst_84 = arith.constant 5.000000e-01 : f32
    %212 = vector.broadcast %cst_84 : f32 to vector<8x128xf32>
    %213 = arith.mulf %212, %211 : vector<8x128xf32>
    %214 = math.tanh %213 : vector<8x128xf32>
    %cst_85 = arith.constant 5.000000e-01 : f32
    %215 = vector.broadcast %cst_85 : f32 to vector<8x128xf32>
    %216 = arith.mulf %215, %214 : vector<8x128xf32>
    %cst_86 = arith.constant 5.000000e-01 : f32
    %217 = vector.broadcast %cst_86 : f32 to vector<8x128xf32>
    %218 = arith.addf %216, %217 : vector<8x128xf32>
    %219 = vector.extract_strided_slice %210 {offsets = [0, 128], sizes = [8, 128], strides = [1, 1]} : vector<8x512xf32> to vector<8x128xf32>
    %cst_87 = arith.constant 5.000000e-01 : f32
    %220 = vector.broadcast %cst_87 : f32 to vector<8x128xf32>
    %221 = arith.mulf %220, %219 : vector<8x128xf32>
    %222 = math.tanh %221 : vector<8x128xf32>
    %cst_88 = arith.constant 5.000000e-01 : f32
    %223 = vector.broadcast %cst_88 : f32 to vector<8x128xf32>
    %224 = arith.mulf %223, %222 : vector<8x128xf32>
    %cst_89 = arith.constant 5.000000e-01 : f32
    %225 = vector.broadcast %cst_89 : f32 to vector<8x128xf32>
    %226 = arith.addf %224, %225 : vector<8x128xf32>
    %227 = vector.extract_strided_slice %210 {offsets = [0, 256], sizes = [8, 128], strides = [1, 1]} : vector<8x512xf32> to vector<8x128xf32>
    %228 = math.tanh %227 : vector<8x128xf32>
    %229 = vector.extract_strided_slice %210 {offsets = [0, 384], sizes = [8, 128], strides = [1, 1]} : vector<8x512xf32> to vector<8x128xf32>
    %cst_90 = arith.constant 5.000000e-01 : f32
    %230 = vector.broadcast %cst_90 : f32 to vector<8x128xf32>
    %231 = arith.mulf %230, %229 : vector<8x128xf32>
    %232 = math.tanh %231 : vector<8x128xf32>
    %cst_91 = arith.constant 5.000000e-01 : f32
    %233 = vector.broadcast %cst_91 : f32 to vector<8x128xf32>
    %234 = arith.mulf %233, %232 : vector<8x128xf32>
    %cst_92 = arith.constant 5.000000e-01 : f32
    %235 = vector.broadcast %cst_92 : f32 to vector<8x128xf32>
    %236 = arith.addf %234, %235 : vector<8x128xf32>
    %237 = arith.mulf %226, %160 : vector<8x128xf32>
    %238 = arith.mulf %218, %228 : vector<8x128xf32>
    %239 = arith.addf %237, %238 : vector<8x128xf32>
    %240 = math.tanh %239 : vector<8x128xf32>
    %241 = arith.mulf %236, %240 : vector<8x128xf32>
    %c3_i32 = arith.constant 3 : i32
    %c0_93 = arith.constant 0 : index
    %242 = arith.index_cast %c3_i32 : i32 to index
    %c0_94 = arith.constant 0 : index
    %c0_95 = arith.constant 0 : index
    %243 = vector.load %arg1[%c0_93, %242, %c0_94, %c0_95] : memref<1x9x8x8xf32, #tpu.memory_space<vmem>>, vector<1x1x8x8xf32>
    %244 = vector.shape_cast %243 : vector<1x1x8x8xf32> to vector<8x8xf32>
    %245 = arith.truncf %244 : vector<8x8xf32> to vector<8x8xbf16>
    %246 = arith.truncf %201 : vector<8x128xf32> to vector<8x128xbf16>
    %cst_96 = arith.constant dense<0.000000e+00> : vector<8x512xf32>
    %247 = tpu.matmul %246, %1, %cst_96 {dimension_numbers = #tpu.dot_dimension_numbers<[1], [0], [0], [1], [0, 0, 1, 1], [], []>} : vector<8x128xbf16>, vector<128x512xbf16>, vector<8x512xf32> -> vector<8x512xf32>
    %cst_97 = arith.constant dense<0.000000e+00> : vector<8x512xf32>
    %248 = tpu.matmul %245, %0, %cst_97 {dimension_numbers = #tpu.dot_dimension_numbers<[1], [0], [0], [1], [0, 0, 1, 1], [], []>} : vector<8x8xbf16>, vector<8x512xbf16>, vector<8x512xf32> -> vector<8x512xf32>
    %249 = arith.addf %247, %248 : vector<8x512xf32>
    %250 = vector.extract_strided_slice %249 {offsets = [0, 0], sizes = [8, 128], strides = [1, 1]} : vector<8x512xf32> to vector<8x128xf32>
    %cst_98 = arith.constant 5.000000e-01 : f32
    %251 = vector.broadcast %cst_98 : f32 to vector<8x128xf32>
    %252 = arith.mulf %251, %250 : vector<8x128xf32>
    %253 = math.tanh %252 : vector<8x128xf32>
    %cst_99 = arith.constant 5.000000e-01 : f32
    %254 = vector.broadcast %cst_99 : f32 to vector<8x128xf32>
    %255 = arith.mulf %254, %253 : vector<8x128xf32>
    %cst_100 = arith.constant 5.000000e-01 : f32
    %256 = vector.broadcast %cst_100 : f32 to vector<8x128xf32>
    %257 = arith.addf %255, %256 : vector<8x128xf32>
    %258 = vector.extract_strided_slice %249 {offsets = [0, 128], sizes = [8, 128], strides = [1, 1]} : vector<8x512xf32> to vector<8x128xf32>
    %cst_101 = arith.constant 5.000000e-01 : f32
    %259 = vector.broadcast %cst_101 : f32 to vector<8x128xf32>
    %260 = arith.mulf %259, %258 : vector<8x128xf32>
    %261 = math.tanh %260 : vector<8x128xf32>
    %cst_102 = arith.constant 5.000000e-01 : f32
    %262 = vector.broadcast %cst_102 : f32 to vector<8x128xf32>
    %263 = arith.mulf %262, %261 : vector<8x128xf32>
    %cst_103 = arith.constant 5.000000e-01 : f32
    %264 = vector.broadcast %cst_103 : f32 to vector<8x128xf32>
    %265 = arith.addf %263, %264 : vector<8x128xf32>
    %266 = vector.extract_strided_slice %249 {offsets = [0, 256], sizes = [8, 128], strides = [1, 1]} : vector<8x512xf32> to vector<8x128xf32>
    %267 = math.tanh %266 : vector<8x128xf32>
    %268 = vector.extract_strided_slice %249 {offsets = [0, 384], sizes = [8, 128], strides = [1, 1]} : vector<8x512xf32> to vector<8x128xf32>
    %cst_104 = arith.constant 5.000000e-01 : f32
    %269 = vector.broadcast %cst_104 : f32 to vector<8x128xf32>
    %270 = arith.mulf %269, %268 : vector<8x128xf32>
    %271 = math.tanh %270 : vector<8x128xf32>
    %cst_105 = arith.constant 5.000000e-01 : f32
    %272 = vector.broadcast %cst_105 : f32 to vector<8x128xf32>
    %273 = arith.mulf %272, %271 : vector<8x128xf32>
    %cst_106 = arith.constant 5.000000e-01 : f32
    %274 = vector.broadcast %cst_106 : f32 to vector<8x128xf32>
    %275 = arith.addf %273, %274 : vector<8x128xf32>
    %276 = arith.mulf %265, %199 : vector<8x128xf32>
    %277 = arith.mulf %257, %267 : vector<8x128xf32>
    %278 = arith.addf %276, %277 : vector<8x128xf32>
    %279 = math.tanh %278 : vector<8x128xf32>
    %280 = arith.mulf %275, %279 : vector<8x128xf32>
    %c8_i32_107 = arith.constant 8 : i32
    %281 = arith.subi %c8_i32_107, %c3_i32 : i32
    %c0_108 = arith.constant 0 : index
    %282 = arith.index_cast %281 : i32 to index
    %c0_109 = arith.constant 0 : index
    %c0_110 = arith.constant 0 : index
    %283 = vector.load %arg1[%c0_108, %282, %c0_109, %c0_110] : memref<1x9x8x8xf32, #tpu.memory_space<vmem>>, vector<1x1x8x8xf32>
    %284 = vector.shape_cast %283 : vector<1x1x8x8xf32> to vector<8x8xf32>
    %285 = arith.truncf %284 : vector<8x8xf32> to vector<8x8xbf16>
    %286 = arith.truncf %241 : vector<8x128xf32> to vector<8x128xbf16>
    %cst_111 = arith.constant dense<0.000000e+00> : vector<8x512xf32>
    %287 = tpu.matmul %286, %3, %cst_111 {dimension_numbers = #tpu.dot_dimension_numbers<[1], [0], [0], [1], [0, 0, 1, 1], [], []>} : vector<8x128xbf16>, vector<128x512xbf16>, vector<8x512xf32> -> vector<8x512xf32>
    %cst_112 = arith.constant dense<0.000000e+00> : vector<8x512xf32>
    %288 = tpu.matmul %285, %2, %cst_112 {dimension_numbers = #tpu.dot_dimension_numbers<[1], [0], [0], [1], [0, 0, 1, 1], [], []>} : vector<8x8xbf16>, vector<8x512xbf16>, vector<8x512xf32> -> vector<8x512xf32>
    %289 = arith.addf %287, %288 : vector<8x512xf32>
    %290 = vector.extract_strided_slice %289 {offsets = [0, 0], sizes = [8, 128], strides = [1, 1]} : vector<8x512xf32> to vector<8x128xf32>
    %cst_113 = arith.constant 5.000000e-01 : f32
    %291 = vector.broadcast %cst_113 : f32 to vector<8x128xf32>
    %292 = arith.mulf %291, %290 : vector<8x128xf32>
    %293 = math.tanh %292 : vector<8x128xf32>
    %cst_114 = arith.constant 5.000000e-01 : f32
    %294 = vector.broadcast %cst_114 : f32 to vector<8x128xf32>
    %295 = arith.mulf %294, %293 : vector<8x128xf32>
    %cst_115 = arith.constant 5.000000e-01 : f32
    %296 = vector.broadcast %cst_115 : f32 to vector<8x128xf32>
    %297 = arith.addf %295, %296 : vector<8x128xf32>
    %298 = vector.extract_strided_slice %289 {offsets = [0, 128], sizes = [8, 128], strides = [1, 1]} : vector<8x512xf32> to vector<8x128xf32>
    %cst_116 = arith.constant 5.000000e-01 : f32
    %299 = vector.broadcast %cst_116 : f32 to vector<8x128xf32>
    %300 = arith.mulf %299, %298 : vector<8x128xf32>
    %301 = math.tanh %300 : vector<8x128xf32>
    %cst_117 = arith.constant 5.000000e-01 : f32
    %302 = vector.broadcast %cst_117 : f32 to vector<8x128xf32>
    %303 = arith.mulf %302, %301 : vector<8x128xf32>
    %cst_118 = arith.constant 5.000000e-01 : f32
    %304 = vector.broadcast %cst_118 : f32 to vector<8x128xf32>
    %305 = arith.addf %303, %304 : vector<8x128xf32>
    %306 = vector.extract_strided_slice %289 {offsets = [0, 256], sizes = [8, 128], strides = [1, 1]} : vector<8x512xf32> to vector<8x128xf32>
    %307 = math.tanh %306 : vector<8x128xf32>
    %308 = vector.extract_strided_slice %289 {offsets = [0, 384], sizes = [8, 128], strides = [1, 1]} : vector<8x512xf32> to vector<8x128xf32>
    %cst_119 = arith.constant 5.000000e-01 : f32
    %309 = vector.broadcast %cst_119 : f32 to vector<8x128xf32>
    %310 = arith.mulf %309, %308 : vector<8x128xf32>
    %311 = math.tanh %310 : vector<8x128xf32>
    %cst_120 = arith.constant 5.000000e-01 : f32
    %312 = vector.broadcast %cst_120 : f32 to vector<8x128xf32>
    %313 = arith.mulf %312, %311 : vector<8x128xf32>
    %cst_121 = arith.constant 5.000000e-01 : f32
    %314 = vector.broadcast %cst_121 : f32 to vector<8x128xf32>
    %315 = arith.addf %313, %314 : vector<8x128xf32>
    %316 = arith.mulf %305, %239 : vector<8x128xf32>
    %317 = arith.mulf %297, %307 : vector<8x128xf32>
    %318 = arith.addf %316, %317 : vector<8x128xf32>
    %319 = math.tanh %318 : vector<8x128xf32>
    %320 = arith.mulf %315, %319 : vector<8x128xf32>
    %c4_i32 = arith.constant 4 : i32
    %c0_122 = arith.constant 0 : index
    %321 = arith.index_cast %c4_i32 : i32 to index
    %c0_123 = arith.constant 0 : index
    %c0_124 = arith.constant 0 : index
    %322 = vector.load %arg1[%c0_122, %321, %c0_123, %c0_124] : memref<1x9x8x8xf32, #tpu.memory_space<vmem>>, vector<1x1x8x8xf32>
    %323 = vector.shape_cast %322 : vector<1x1x8x8xf32> to vector<8x8xf32>
    %324 = arith.truncf %323 : vector<8x8xf32> to vector<8x8xbf16>
    %325 = arith.truncf %280 : vector<8x128xf32> to vector<8x128xbf16>
    %cst_125 = arith.constant dense<0.000000e+00> : vector<8x512xf32>
    %326 = tpu.matmul %325, %1, %cst_125 {dimension_numbers = #tpu.dot_dimension_numbers<[1], [0], [0], [1], [0, 0, 1, 1], [], []>} : vector<8x128xbf16>, vector<128x512xbf16>, vector<8x512xf32> -> vector<8x512xf32>
    %cst_126 = arith.constant dense<0.000000e+00> : vector<8x512xf32>
    %327 = tpu.matmul %324, %0, %cst_126 {dimension_numbers = #tpu.dot_dimension_numbers<[1], [0], [0], [1], [0, 0, 1, 1], [], []>} : vector<8x8xbf16>, vector<8x512xbf16>, vector<8x512xf32> -> vector<8x512xf32>
    %328 = arith.addf %326, %327 : vector<8x512xf32>
    %329 = vector.extract_strided_slice %328 {offsets = [0, 0], sizes = [8, 128], strides = [1, 1]} : vector<8x512xf32> to vector<8x128xf32>
    %cst_127 = arith.constant 5.000000e-01 : f32
    %330 = vector.broadcast %cst_127 : f32 to vector<8x128xf32>
    %331 = arith.mulf %330, %329 : vector<8x128xf32>
    %332 = math.tanh %331 : vector<8x128xf32>
    %cst_128 = arith.constant 5.000000e-01 : f32
    %333 = vector.broadcast %cst_128 : f32 to vector<8x128xf32>
    %334 = arith.mulf %333, %332 : vector<8x128xf32>
    %cst_129 = arith.constant 5.000000e-01 : f32
    %335 = vector.broadcast %cst_129 : f32 to vector<8x128xf32>
    %336 = arith.addf %334, %335 : vector<8x128xf32>
    %337 = vector.extract_strided_slice %328 {offsets = [0, 128], sizes = [8, 128], strides = [1, 1]} : vector<8x512xf32> to vector<8x128xf32>
    %cst_130 = arith.constant 5.000000e-01 : f32
    %338 = vector.broadcast %cst_130 : f32 to vector<8x128xf32>
    %339 = arith.mulf %338, %337 : vector<8x128xf32>
    %340 = math.tanh %339 : vector<8x128xf32>
    %cst_131 = arith.constant 5.000000e-01 : f32
    %341 = vector.broadcast %cst_131 : f32 to vector<8x128xf32>
    %342 = arith.mulf %341, %340 : vector<8x128xf32>
    %cst_132 = arith.constant 5.000000e-01 : f32
    %343 = vector.broadcast %cst_132 : f32 to vector<8x128xf32>
    %344 = arith.addf %342, %343 : vector<8x128xf32>
    %345 = vector.extract_strided_slice %328 {offsets = [0, 256], sizes = [8, 128], strides = [1, 1]} : vector<8x512xf32> to vector<8x128xf32>
    %346 = math.tanh %345 : vector<8x128xf32>
    %347 = vector.extract_strided_slice %328 {offsets = [0, 384], sizes = [8, 128], strides = [1, 1]} : vector<8x512xf32> to vector<8x128xf32>
    %cst_133 = arith.constant 5.000000e-01 : f32
    %348 = vector.broadcast %cst_133 : f32 to vector<8x128xf32>
    %349 = arith.mulf %348, %347 : vector<8x128xf32>
    %350 = math.tanh %349 : vector<8x128xf32>
    %cst_134 = arith.constant 5.000000e-01 : f32
    %351 = vector.broadcast %cst_134 : f32 to vector<8x128xf32>
    %352 = arith.mulf %351, %350 : vector<8x128xf32>
    %cst_135 = arith.constant 5.000000e-01 : f32
    %353 = vector.broadcast %cst_135 : f32 to vector<8x128xf32>
    %354 = arith.addf %352, %353 : vector<8x128xf32>
    %355 = arith.mulf %344, %278 : vector<8x128xf32>
    %356 = arith.mulf %336, %346 : vector<8x128xf32>
    %357 = arith.addf %355, %356 : vector<8x128xf32>
    %358 = math.tanh %357 : vector<8x128xf32>
    %359 = arith.mulf %354, %358 : vector<8x128xf32>
    %c8_i32_136 = arith.constant 8 : i32
    %360 = arith.subi %c8_i32_136, %c4_i32 : i32
    %c0_137 = arith.constant 0 : index
    %361 = arith.index_cast %360 : i32 to index
    %c0_138 = arith.constant 0 : index
    %c0_139 = arith.constant 0 : index
    %362 = vector.load %arg1[%c0_137, %361, %c0_138, %c0_139] : memref<1x9x8x8xf32, #tpu.memory_space<vmem>>, vector<1x1x8x8xf32>
    %363 = vector.shape_cast %362 : vector<1x1x8x8xf32> to vector<8x8xf32>
    %364 = arith.truncf %363 : vector<8x8xf32> to vector<8x8xbf16>
    %365 = arith.truncf %320 : vector<8x128xf32> to vector<8x128xbf16>
    %cst_140 = arith.constant dense<0.000000e+00> : vector<8x512xf32>
    %366 = tpu.matmul %365, %3, %cst_140 {dimension_numbers = #tpu.dot_dimension_numbers<[1], [0], [0], [1], [0, 0, 1, 1], [], []>} : vector<8x128xbf16>, vector<128x512xbf16>, vector<8x512xf32> -> vector<8x512xf32>
    %cst_141 = arith.constant dense<0.000000e+00> : vector<8x512xf32>
    %367 = tpu.matmul %364, %2, %cst_141 {dimension_numbers = #tpu.dot_dimension_numbers<[1], [0], [0], [1], [0, 0, 1, 1], [], []>} : vector<8x8xbf16>, vector<8x512xbf16>, vector<8x512xf32> -> vector<8x512xf32>
    %368 = arith.addf %366, %367 : vector<8x512xf32>
    %369 = vector.extract_strided_slice %368 {offsets = [0, 0], sizes = [8, 128], strides = [1, 1]} : vector<8x512xf32> to vector<8x128xf32>
    %cst_142 = arith.constant 5.000000e-01 : f32
    %370 = vector.broadcast %cst_142 : f32 to vector<8x128xf32>
    %371 = arith.mulf %370, %369 : vector<8x128xf32>
    %372 = math.tanh %371 : vector<8x128xf32>
    %cst_143 = arith.constant 5.000000e-01 : f32
    %373 = vector.broadcast %cst_143 : f32 to vector<8x128xf32>
    %374 = arith.mulf %373, %372 : vector<8x128xf32>
    %cst_144 = arith.constant 5.000000e-01 : f32
    %375 = vector.broadcast %cst_144 : f32 to vector<8x128xf32>
    %376 = arith.addf %374, %375 : vector<8x128xf32>
    %377 = vector.extract_strided_slice %368 {offsets = [0, 128], sizes = [8, 128], strides = [1, 1]} : vector<8x512xf32> to vector<8x128xf32>
    %cst_145 = arith.constant 5.000000e-01 : f32
    %378 = vector.broadcast %cst_145 : f32 to vector<8x128xf32>
    %379 = arith.mulf %378, %377 : vector<8x128xf32>
    %380 = math.tanh %379 : vector<8x128xf32>
    %cst_146 = arith.constant 5.000000e-01 : f32
    %381 = vector.broadcast %cst_146 : f32 to vector<8x128xf32>
    %382 = arith.mulf %381, %380 : vector<8x128xf32>
    %cst_147 = arith.constant 5.000000e-01 : f32
    %383 = vector.broadcast %cst_147 : f32 to vector<8x128xf32>
    %384 = arith.addf %382, %383 : vector<8x128xf32>
    %385 = vector.extract_strided_slice %368 {offsets = [0, 256], sizes = [8, 128], strides = [1, 1]} : vector<8x512xf32> to vector<8x128xf32>
    %386 = math.tanh %385 : vector<8x128xf32>
    %387 = vector.extract_strided_slice %368 {offsets = [0, 384], sizes = [8, 128], strides = [1, 1]} : vector<8x512xf32> to vector<8x128xf32>
    %cst_148 = arith.constant 5.000000e-01 : f32
    %388 = vector.broadcast %cst_148 : f32 to vector<8x128xf32>
    %389 = arith.mulf %388, %387 : vector<8x128xf32>
    %390 = math.tanh %389 : vector<8x128xf32>
    %cst_149 = arith.constant 5.000000e-01 : f32
    %391 = vector.broadcast %cst_149 : f32 to vector<8x128xf32>
    %392 = arith.mulf %391, %390 : vector<8x128xf32>
    %cst_150 = arith.constant 5.000000e-01 : f32
    %393 = vector.broadcast %cst_150 : f32 to vector<8x128xf32>
    %394 = arith.addf %392, %393 : vector<8x128xf32>
    %395 = arith.mulf %384, %318 : vector<8x128xf32>
    %396 = arith.mulf %376, %386 : vector<8x128xf32>
    %397 = arith.addf %395, %396 : vector<8x128xf32>
    %398 = math.tanh %397 : vector<8x128xf32>
    %399 = arith.mulf %394, %398 : vector<8x128xf32>
    %c5_i32 = arith.constant 5 : i32
    %c0_151 = arith.constant 0 : index
    %c0_152 = arith.constant 0 : index
    %400 = vector.load %arg6[%c0_151, %c0_152] : memref<128x16xf32, #tpu.memory_space<vmem>>, vector<128x16xf32>
    %cst_153 = arith.constant dense<0.000000e+00> : vector<8x16xf32>
    %401 = tpu.matmul %359, %400, %cst_153 {dimension_numbers = #tpu.dot_dimension_numbers<[1], [0], [0], [1], [0, 0, 1, 1], [], []>} : vector<8x128xf32>, vector<128x16xf32>, vector<8x16xf32> -> vector<8x16xf32>
    %c0_154 = arith.constant 0 : index
    %c0_155 = arith.constant 0 : index
    %402 = vector.load %arg7[%c0_154, %c0_155] : memref<128x16xf32, #tpu.memory_space<vmem>>, vector<128x16xf32>
    %cst_156 = arith.constant dense<0.000000e+00> : vector<8x16xf32>
    %403 = tpu.matmul %399, %402, %cst_156 {dimension_numbers = #tpu.dot_dimension_numbers<[1], [0], [0], [1], [0, 0, 1, 1], [], []>} : vector<8x128xf32>, vector<128x16xf32>, vector<8x16xf32> -> vector<8x16xf32>
    %404 = arith.addf %401, %403 : vector<8x16xf32>
    %c0_157 = arith.constant 0 : index
    %c0_158 = arith.constant 0 : index
    %405 = vector.load %arg8[%c0_157, %c0_158] : memref<1x16xf32, #tpu.memory_space<vmem>>, vector<1x16xf32>
    %406 = vector.broadcast %405 : vector<1x16xf32> to vector<8x16xf32>
    %407 = arith.addf %404, %406 : vector<8x16xf32>
    %c0_159 = arith.constant 0 : index
    %c0_160 = arith.constant 0 : index
    %408 = vector.load %arg9[%c0_159, %c0_160] : memref<8x16xf32, #tpu.memory_space<vmem>>, vector<8x16xf32>
    tpu.vector_store %arg9[%c0_159, %c0_160], %407 {strides = array<i32>} : memref<8x16xf32, #tpu.memory_space<vmem>>, vector<8x16xf32>,
    return
  }
  func.func @transform_0(%arg0: i32) -> (i32, i32, i32, i32) {
    %c0_i32 = arith.constant 0 : i32
    %c0_i32_0 = arith.constant 0 : i32
    %c0_i32_1 = arith.constant 0 : i32
    %c0_i32_2 = arith.constant 0 : i32
    return %arg0, %c0_i32, %c0_i32_0, %c0_i32_1 : i32, i32, i32, i32
  }
  func.func @transform_1(%arg0: i32) -> (i32, i32) {
    %c0_i32 = arith.constant 0 : i32
    %c0_i32_0 = arith.constant 0 : i32
    %c0_i32_1 = arith.constant 0 : i32
    return %c0_i32, %c0_i32_0 : i32, i32
  }
  func.func @transform_2(%arg0: i32) -> (i32, i32) {
    %c0_i32 = arith.constant 0 : i32
    %c0_i32_0 = arith.constant 0 : i32
    %c0_i32_1 = arith.constant 0 : i32
    return %c0_i32, %c0_i32_0 : i32, i32
  }
  func.func @transform_3(%arg0: i32) -> (i32, i32) {
    %c0_i32 = arith.constant 0 : i32
    %c0_i32_0 = arith.constant 0 : i32
    %c0_i32_1 = arith.constant 0 : i32
    return %c0_i32, %c0_i32_0 : i32, i32
  }
  func.func @transform_4(%arg0: i32) -> (i32, i32) {
    %c0_i32 = arith.constant 0 : i32
    %c0_i32_0 = arith.constant 0 : i32
    %c0_i32_1 = arith.constant 0 : i32
    return %c0_i32, %c0_i32_0 : i32, i32
  }
  func.func @transform_5(%arg0: i32) -> (i32, i32) {
    %c0_i32 = arith.constant 0 : i32
    %c0_i32_0 = arith.constant 0 : i32
    %c0_i32_1 = arith.constant 0 : i32
    return %c0_i32, %c0_i32_0 : i32, i32
  }
  func.func @transform_6(%arg0: i32) -> (i32, i32) {
    %c0_i32 = arith.constant 0 : i32
    %c0_i32_0 = arith.constant 0 : i32
    %c0_i32_1 = arith.constant 0 : i32
    return %c0_i32, %c0_i32_0 : i32, i32
  }
  func.func @transform_7(%arg0: i32) -> (i32, i32) {
    %c0_i32 = arith.constant 0 : i32
    %c0_i32_0 = arith.constant 0 : i32
    %c0_i32_1 = arith.constant 0 : i32
    return %c0_i32, %c0_i32_0 : i32, i32
  }
  func.func @transform_8(%arg0: i32) -> (i32, i32) {
    %c0_i32 = arith.constant 0 : i32
    %c0_i32_0 = arith.constant 0 : i32
    return %arg0, %c0_i32 : i32, i32
  }
}

</mosaic_0001>

<llo_original>
// kernel: tpu_custom_call.1
$region0: #{tpu_custom_call.1}
  #allocation0 [shape = 'u32[]', space=smem, size = 0x4, offset = 0x4, fixed_abs, tag = 'smem constant byte address 0x4 - core index']
  #allocation1 [shape = 'u32[144,128]{1,0:T(1,128)}', space=vmem, size = 0x12000, scoped, tag = 'internal scratch']
  %s0 = inlined_call_operand.vmem [shape: f32[1,9,8,8], index: 0, kind: input, shape index: {}]
  %s1 = inlined_call_operand.vmem [shape: bf16[8,512], index: 1, kind: input, shape index: {}]
  %s2 = inlined_call_operand.vmem [shape: bf16[128,512], index: 2, kind: input, shape index: {}]
  %s3 = inlined_call_operand.vmem [shape: bf16[8,512], index: 3, kind: input, shape index: {}]
  %s4 = inlined_call_operand.hbm [shape: bf16[128,512], index: 4, kind: input, shape index: {}]
  %s5 = inlined_call_operand.vmem [shape: f32[128,16], index: 5, kind: input, shape index: {}]
  %s6 = inlined_call_operand.vmem [shape: f32[128,16], index: 6, kind: input, shape index: {}]
  %s7 = inlined_call_operand.vmem [shape: f32[1,16], index: 7, kind: input, shape index: {}]
  %s8 = inlined_call_operand.hbm [shape: f32[8,16], index: 8, kind: output, shape index: {}]
  %s9 = sld [smem:[#allocation0]]
  $region46: #{tpu_custom_call.1} parent=0
    _
  %s11 = ssub.s32 1, %s9
  %s12 = scalar_select 0, %s11, %s9
  $region1: #{tpu_custom_call.1} parent=0
    #allocation2 [shape = 'u8[131072]{0}', space=vmem, size = 0x20000, scoped, tag = 'input window, operand 4, single buffered']
    #allocation3 [shape = 's32[1]{0}', space=sflag, size = 0x4, scoped, tag = 'scoped memory for tpu_custom_call.1']
    #allocation4 [shape = 's32[1]{0}', space=sflag, size = 0x4, scoped, tag = 'scoped memory for tpu_custom_call.1']
    #allocation5 [shape = 'u8[4096]{0}', space=vmem, size = 0x1000, scoped, tag = 'output window, operand 0, single buffered']
    %13 = vsyncpa [#allocation3], 0
    %14 = vsyncpa [#allocation4], 0
    // Predicated region
    $region2: #{tpu_custom_call.1} parent=1 // pred_check
      _
    $region3: #{tpu_custom_call.1} parent=1 // pred_check_branch
      %16 = sbr.rel (0) target = $region5
    $region4: #{tpu_custom_call.1} parent=1 // pred_region
      _
    $region5: #{tpu_custom_call.1} parent=1 // pred_fallthru
      _
    // Predicated region
    $region6: #{tpu_custom_call.1} parent=1 // pred_check
      _
    $region7: #{tpu_custom_call.1} parent=1 // pred_check_branch
      %18 = sbr.rel (0) target = $region9
    $region8: #{tpu_custom_call.1} parent=1 // pred_region
      _
    $region9: #{tpu_custom_call.1} parent=1 // pred_fallthru
      _
    // Predicated region
    $region10: #{tpu_custom_call.1} parent=1 // pred_check
      _
    $region11: #{tpu_custom_call.1} parent=1 // pred_check_branch
      %20 = sbr.rel (0) target = $region13
    $region12: #{tpu_custom_call.1} parent=1 // pred_region
      _
    $region13: #{tpu_custom_call.1} parent=1 // pred_fallthru
      _
    // Predicated region
    $region14: #{tpu_custom_call.1} parent=1 // pred_check
      _
    $region15: #{tpu_custom_call.1} parent=1 // pred_check_branch
      %22 = sbr.rel (0) target = $region17
    $region16: #{tpu_custom_call.1} parent=1 // pred_region
      _
    $region17: #{tpu_custom_call.1} parent=1 // pred_fallthru
      _
    // Predicated region
    $region18: #{tpu_custom_call.1} parent=1 // pred_check
      _
    $region19: #{tpu_custom_call.1} parent=1 // pred_check_branch
      %24 = sbr.rel (0) target = $region21
    $region20: #{tpu_custom_call.1} parent=1 // pred_region
      %s26 = ssub.s32 4096, 4096
      %27 = vsyncadd [#allocation3], %s26
      %s28 = sshll.u32 [#allocation2], 4
      %s29 = int_to_ptr.vmem [resolvable:$true] %s28
      %34 = dma.hbm_to_vmem [thread:$0]  %s4, 4096, %s29, [#allocation3], 256, 256, 16
    $region21: #{tpu_custom_call.1} parent=1 // pred_fallthru
      _
    // Predicated region
    $region22: #{tpu_custom_call.1} parent=1 // pred_check
      _
    $region23: #{tpu_custom_call.1} parent=1 // pred_check_branch
      %36 = sbr.rel (0) target = $region25
    $region24: #{tpu_custom_call.1} parent=1 // pred_region
      _
    $region25: #{tpu_custom_call.1} parent=1 // pred_fallthru
      _
    // Predicated region
    $region26: #{tpu_custom_call.1} parent=1 // pred_check
      _
    $region27: #{tpu_custom_call.1} parent=1 // pred_check_branch
      %38 = sbr.rel (0) target = $region29
    $region28: #{tpu_custom_call.1} parent=1 // pred_region
      _
    $region29: #{tpu_custom_call.1} parent=1 // pred_fallthru
      _
    // Predicated region
    $region30: #{tpu_custom_call.1} parent=1 // pred_check
      _
    $region31: #{tpu_custom_call.1} parent=1 // pred_check_branch
      %40 = sbr.rel (0) target = $region33
    $region32: #{tpu_custom_call.1} parent=1 // pred_region
      _
    $region33: #{tpu_custom_call.1} parent=1 // pred_fallthru
      _
    // Predicated region
    $region34: #{tpu_custom_call.1} parent=1 // pred_check
      _
    $region35: #{tpu_custom_call.1} parent=1 // pred_check_branch
      %42 = sbr.rel (0) target = $region37
    $region36: #{tpu_custom_call.1} parent=1 // pred_region
      %43 = dma.done [#allocation3], 4096
    $region37: #{tpu_custom_call.1} parent=1 // pred_fallthru
      _
    %v45 = vld [vmem:[%s1] sm:$0xff]
    %v46 = vld [vmem:[%s1 + $0x8] sm:$0xff]
    %v47 = vld [vmem:[%s2] sm:$0xff]
    %v48 = vld [vmem:[%s2 + $0x8] sm:$0xff]
    %v49 = vld [vmem:[%s2 + $0x10] sm:$0xff]
    %v50 = vld [vmem:[%s2 + $0x18] sm:$0xff]
    %v51 = vld [vmem:[%s2 + $0x20] sm:$0xff]
    %v52 = vld [vmem:[%s2 + $0x28] sm:$0xff]
    %v53 = vld [vmem:[%s2 + $0x30] sm:$0xff]
    %v54 = vld [vmem:[%s2 + $0x38] sm:$0xff]
    %v55 = vld [vmem:[%s2 + $0x40] sm:$0xff]
    %v56 = vld [vmem:[%s2 + $0x48] sm:$0xff]
    %v57 = vld [vmem:[%s2 + $0x50] sm:$0xff]
    %v58 = vld [vmem:[%s2 + $0x58] sm:$0xff]
    %v59 = vld [vmem:[%s2 + $0x60] sm:$0xff]
    %v60 = vld [vmem:[%s2 + $0x68] sm:$0xff]
    %v61 = vld [vmem:[%s2 + $0x70] sm:$0xff]
    %v62 = vld [vmem:[%s2 + $0x78] sm:$0xff]
    %v63 = vld [vmem:[%s2 + $0x80] sm:$0xff]
    %v64 = vld [vmem:[%s2 + $0x88] sm:$0xff]
    %v65 = vld [vmem:[%s2 + $0x90] sm:$0xff]
    %v66 = vld [vmem:[%s2 + $0x98] sm:$0xff]
    %v67 = vld [vmem:[%s2 + $0xa0] sm:$0xff]
    %v68 = vld [vmem:[%s2 + $0xa8] sm:$0xff]
    %v69 = vld [vmem:[%s2 + $0xb0] sm:$0xff]
    %v70 = vld [vmem:[%s2 + $0xb8] sm:$0xff]
    %v71 = vld [vmem:[%s2 + $0xc0] sm:$0xff]
    %v72 = vld [vmem:[%s2 + $0xc8] sm:$0xff]
    %v73 = vld [vmem:[%s2 + $0xd0] sm:$0xff]
    %v74 = vld [vmem:[%s2 + $0xd8] sm:$0xff]
    %v75 = vld [vmem:[%s2 + $0xe0] sm:$0xff]
    %v76 = vld [vmem:[%s2 + $0xe8] sm:$0xff]
    %v77 = vld [vmem:[%s2 + $0xf0] sm:$0xff]
    %v78 = vld [vmem:[%s2 + $0xf8] sm:$0xff]
    %v79 = vld [vmem:[%s3] sm:$0xff]
    %v80 = vld [vmem:[%s3 + $0x8] sm:$0xff]
    %v81 = vld [vmem:[#allocation2] sm:$0xff]
    %v82 = vld [vmem:[#allocation2 + $0x8] sm:$0xff]
    %v83 = vld [vmem:[#allocation2 + $0x10] sm:$0xff]
    %v84 = vld [vmem:[#allocation2 + $0x18] sm:$0xff]
    %v85 = vld [vmem:[#allocation2 + $0x20] sm:$0xff]
    %v86 = vld [vmem:[#allocation2 + $0x28] sm:$0xff]
    %v87 = vld [vmem:[#allocation2 + $0x30] sm:$0xff]
    %v88 = vld [vmem:[#allocation2 + $0x38] sm:$0xff]
    %v89 = vld [vmem:[#allocation2 + $0x40] sm:$0xff]
    %v90 = vld [vmem:[#allocation2 + $0x48] sm:$0xff]
    %v91 = vld [vmem:[#allocation2 + $0x50] sm:$0xff]
    %v92 = vld [vmem:[#allocation2 + $0x58] sm:$0xff]
    %v93 = vld [vmem:[#allocation2 + $0x60] sm:$0xff]
    %v94 = vld [vmem:[#allocation2 + $0x68] sm:$0xff]
    %v95 = vld [vmem:[#allocation2 + $0x70] sm:$0xff]
    %v96 = vld [vmem:[#allocation2 + $0x78] sm:$0xff]
    %v97 = vld [vmem:[#allocation2 + $0x80] sm:$0xff]
    %v98 = vld [vmem:[#allocation2 + $0x88] sm:$0xff]
    %v99 = vld [vmem:[#allocation2 + $0x90] sm:$0xff]
    %v100 = vld [vmem:[#allocation2 + $0x98] sm:$0xff]
    %v101 = vld [vmem:[#allocation2 + $0xa0] sm:$0xff]
    %v102 = vld [vmem:[#allocation2 + $0xa8] sm:$0xff]
    %v103 = vld [vmem:[#allocation2 + $0xb0] sm:$0xff]
    %v104 = vld [vmem:[#allocation2 + $0xb8] sm:$0xff]
    %v105 = vld [vmem:[#allocation2 + $0xc0] sm:$0xff]
    %v106 = vld [vmem:[#allocation2 + $0xc8] sm:$0xff]
    %v107 = vld [vmem:[#allocation2 + $0xd0] sm:$0xff]
    %v108 = vld [vmem:[#allocation2 + $0xd8] sm:$0xff]
    %v109 = vld [vmem:[#allocation2 + $0xe0] sm:$0xff]
    %v110 = vld [vmem:[#allocation2 + $0xe8] sm:$0xff]
    %v111 = vld [vmem:[#allocation2 + $0xf0] sm:$0xff]
    %v112 = vld [vmem:[#allocation2 + $0xf8] sm:$0xff]
    %v113 = vld [vmem:[%s0] sm:$0xff]
    %v114 = vpack.c.bf16 %v113, %v113
    %v117 = vunpack.c.l.b16 %v45
    %v118 = vunpack.c.h.b16 %v45
    %v119 = vunpack.c.l.b16 %v46
    %v120 = vunpack.c.h.b16 %v46
    %v121 = vpack.c.b16 %v117, %v117
    %v122 = vpack.c.b16 %v118, %v118
    %v123 = vpack.c.b16 %v119, %v119
    %v124 = vpack.c.b16 %v120, %v120
    %vm125 = vcmask 64512
    %v127 = vsel %vm125, %v114, 0
    %vm129 = vcmask 1043456
    %v131 = vsel %vm129, %v121, 0
    %v134 = vsel %vm129, %v122, 0
    %v137 = vsel %vm129, %v123, 0
    %v140 = vsel %vm129, %v124, 0
    %142 = vmatprep.subr.bf16.mxu0 %v134
    %143 = vmatpush1.bf16.msra.mxu0 %v131
    %144 = vmatprep.subr.bf16.mxu0 0
    %145 = vmatpush1.bf16.msra.mxu0 0
    %146 = vmatprep.subr.bf16.mxu0 0
    %147 = vmatpush1.bf16.msra.mxu0 0
    %148 = vmatprep.subr.bf16.mxu0 0
    %149 = vmatpush1.bf16.msra.mxu0 0
    %150 = vmatprep.subr.bf16.mxu0 0
    %151 = vmatpush1.bf16.msra.mxu0 0
    %152 = vmatprep.subr.bf16.mxu0 0
    %153 = vmatpush1.bf16.msra.mxu0 0
    %154 = vmatprep.subr.bf16.mxu0 0
    %155 = vmatpush1.bf16.msra.mxu0 0
    %156 = vmatprep.subr.bf16.mxu0 0
    %157 = vmatpush1.bf16.msra.mxu0 0
    %158 = vmatprep.subr.bf16.mxu0 0
    %159 = vmatpush1.bf16.msra.mxu0 0
    %160 = vmatprep.subr.bf16.mxu0 0
    %161 = vmatpush1.bf16.msra.mxu0 0
    %162 = vmatprep.subr.bf16.mxu0 0
    %163 = vmatpush1.bf16.msra.mxu0 0
    %164 = vmatprep.subr.bf16.mxu0 0
    %165 = vmatpush1.bf16.msra.mxu0 0
    %166 = vmatprep.subr.bf16.mxu0 0
    %167 = vmatpush1.bf16.msra.mxu0 0
    %168 = vmatprep.subr.bf16.mxu0 0
    %169 = vmatpush1.bf16.msra.mxu0 0
    %170 = vmatprep.subr.bf16.mxu0 0
    %171 = vmatpush1.bf16.msra.mxu0 0
    %172 = vmatprep.subr.bf16.mxu0 0
    %173 = vmatpush1.bf16.msra.mxu0 0
    %174 = vmatprep.mubr.bf16.mxu0 0
    %175 = vmatmul.mubr.bf16.gmra.mrb[0].mxu0 %v127
    %v176 = vpop.f32.mrb[0].mxu0
    %v177 = vadd.f32 0.0, %v176
    %v178 = vpop.f32.mrb[0].mxu0
    %v179 = vadd.f32 0.0, %v178
    %v180 = vpop.f32.mrb[0].mxu0
    %v181 = vpop.f32.mrb[0].mxu0
    %182 = vdwg.mxu0
    %183 = vmatprep.subr.bf16.mxu0 %v140
    %184 = vmatpush1.bf16.msra.mxu0 %v137
    %185 = vmatprep.subr.bf16.mxu0 0
    %186 = vmatpush1.bf16.msra.mxu0 0
    %187 = vmatprep.subr.bf16.mxu0 0
    %188 = vmatpush1.bf16.msra.mxu0 0
    %189 = vmatprep.subr.bf16.mxu0 0
    %190 = vmatpush1.bf16.msra.mxu0 0
    %191 = vmatprep.subr.bf16.mxu0 0
    %192 = vmatpush1.bf16.msra.mxu0 0
    %193 = vmatprep.subr.bf16.mxu0 0
    %194 = vmatpush1.bf16.msra.mxu0 0
    %195 = vmatprep.subr.bf16.mxu0 0
    %196 = vmatpush1.bf16.msra.mxu0 0
    %197 = vmatprep.subr.bf16.mxu0 0
    %198 = vmatpush1.bf16.msra.mxu0 0
    %199 = vmatprep.subr.bf16.mxu0 0
    %200 = vmatpush1.bf16.msra.mxu0 0
    %201 = vmatprep.subr.bf16.mxu0 0
    %202 = vmatpush1.bf16.msra.mxu0 0
    %203 = vmatprep.subr.bf16.mxu0 0
    %204 = vmatpush1.bf16.msra.mxu0 0
    %205 = vmatprep.subr.bf16.mxu0 0
    %206 = vmatpush1.bf16.msra.mxu0 0
    %207 = vmatprep.subr.bf16.mxu0 0
    %208 = vmatpush1.bf16.msra.mxu0 0
    %209 = vmatprep.subr.bf16.mxu0 0
    %210 = vmatpush1.bf16.msra.mxu0 0
    %211 = vmatprep.subr.bf16.mxu0 0
    %212 = vmatpush1.bf16.msra.mxu0 0
    %213 = vmatprep.subr.bf16.mxu0 0
    %214 = vmatpush1.bf16.msra.mxu0 0
    %215 = vmatprep.mubr.bf16.mxu0 0
    %216 = vmatmul.mubr.bf16.gmra.mrb[0].mxu0 %v127
    %v217 = vpop.f32.mrb[0].mxu0
    %v218 = vadd.f32 0.0, %v217
    %v219 = vpop.f32.mrb[0].mxu0
    %v220 = vadd.f32 0.0, %v219
    %v221 = vpop.f32.mrb[0].mxu0
    %v222 = vpop.f32.mrb[0].mxu0
    %223 = vdwg.mxu0
    %v256 = vunpack.c.l.b16 %v47
    %v257 = vunpack.c.h.b16 %v47
    %v258 = vunpack.c.l.b16 %v48
    %v259 = vunpack.c.h.b16 %v48
    %v260 = vunpack.c.l.b16 %v49
    %v261 = vunpack.c.h.b16 %v49
    %v262 = vunpack.c.l.b16 %v50
    %v263 = vunpack.c.h.b16 %v50
    %v264 = vunpack.c.l.b16 %v51
    %v265 = vunpack.c.h.b16 %v51
    %v266 = vunpack.c.l.b16 %v52
    %v267 = vunpack.c.h.b16 %v52
    %v268 = vunpack.c.l.b16 %v53
    %v269 = vunpack.c.h.b16 %v53
    %v270 = vunpack.c.l.b16 %v54
    %v271 = vunpack.c.h.b16 %v54
    %v272 = vunpack.c.l.b16 %v55
    %v273 = vunpack.c.h.b16 %v55
    %v274 = vunpack.c.l.b16 %v56
    %v275 = vunpack.c.h.b16 %v56
    %v276 = vunpack.c.l.b16 %v57
    %v277 = vunpack.c.h.b16 %v57
    %v278 = vunpack.c.l.b16 %v58
    %v279 = vunpack.c.h.b16 %v58
    %v280 = vunpack.c.l.b16 %v59
    %v281 = vunpack.c.h.b16 %v59
    %v282 = vunpack.c.l.b16 %v60
    %v283 = vunpack.c.h.b16 %v60
    %v284 = vunpack.c.l.b16 %v61
    %v285 = vunpack.c.h.b16 %v61
    %v286 = vunpack.c.l.b16 %v62
    %v287 = vunpack.c.h.b16 %v62
    %v288 = vunpack.c.l.b16 %v63
    %v289 = vunpack.c.h.b16 %v63
    %v290 = vunpack.c.l.b16 %v64
    %v291 = vunpack.c.h.b16 %v64
    %v292 = vunpack.c.l.b16 %v65
    %v293 = vunpack.c.h.b16 %v65
    %v294 = vunpack.c.l.b16 %v66
    %v295 = vunpack.c.h.b16 %v66
    %v296 = vunpack.c.l.b16 %v67
    %v297 = vunpack.c.h.b16 %v67
    %v298 = vunpack.c.l.b16 %v68
    %v299 = vunpack.c.h.b16 %v68
    %v300 = vunpack.c.l.b16 %v69
    %v301 = vunpack.c.h.b16 %v69
    %v302 = vunpack.c.l.b16 %v70
    %v303 = vunpack.c.h.b16 %v70
    %v304 = vunpack.c.l.b16 %v71
    %v305 = vunpack.c.h.b16 %v71
    %v306 = vunpack.c.l.b16 %v72
    %v307 = vunpack.c.h.b16 %v72
    %v308 = vunpack.c.l.b16 %v73
    %v309 = vunpack.c.h.b16 %v73
    %v310 = vunpack.c.l.b16 %v74
    %v311 = vunpack.c.h.b16 %v74
    %v312 = vunpack.c.l.b16 %v75
    %v313 = vunpack.c.h.b16 %v75
    %v314 = vunpack.c.l.b16 %v76
    %v315 = vunpack.c.h.b16 %v76
    %v316 = vunpack.c.l.b16 %v77
    %v317 = vunpack.c.h.b16 %v77
    %v318 = vunpack.c.l.b16 %v78
    %v319 = vunpack.c.h.b16 %v78
    %v320 = vpack.c.b16 %v260, %v256
    %v321 = vpack.c.b16 %v261, %v257
    %v322 = vpack.c.b16 %v262, %v258
    %v323 = vpack.c.b16 %v263, %v259
    %v324 = vpack.c.b16 %v268, %v264
    %v325 = vpack.c.b16 %v269, %v265
    %v326 = vpack.c.b16 %v270, %v266
    %v327 = vpack.c.b16 %v271, %v267
    %v328 = vpack.c.b16 %v276, %v272
    %v329 = vpack.c.b16 %v277, %v273
    %v330 = vpack.c.b16 %v278, %v274
    %v331 = vpack.c.b16 %v279, %v275
    %v332 = vpack.c.b16 %v284, %v280
    %v333 = vpack.c.b16 %v285, %v281
    %v334 = vpack.c.b16 %v286, %v282
    %v335 = vpack.c.b16 %v287, %v283
    %v336 = vpack.c.b16 %v292, %v288
    %v337 = vpack.c.b16 %v293, %v289
    %v338 = vpack.c.b16 %v294, %v290
    %v339 = vpack.c.b16 %v295, %v291
    %v340 = vpack.c.b16 %v300, %v296
    %v341 = vpack.c.b16 %v301, %v297
    %v342 = vpack.c.b16 %v302, %v298
    %v343 = vpack.c.b16 %v303, %v299
    %v344 = vpack.c.b16 %v308, %v304
    %v345 = vpack.c.b16 %v309, %v305
    %v346 = vpack.c.b16 %v310, %v306
    %v347 = vpack.c.b16 %v311, %v307
    %v348 = vpack.c.b16 %v316, %v312
    %v349 = vpack.c.b16 %v317, %v313
    %v350 = vpack.c.b16 %v318, %v314
    %v351 = vpack.c.b16 %v319, %v315
    %384 = vmatprep.subr.bf16.mxu0 %v321
    %385 = vmatpush1.bf16.msra.mxu0 %v320
    %386 = vmatprep.subr.bf16.mxu0 %v325
    %387 = vmatpush1.bf16.msra.mxu0 %v324
    %388 = vmatprep.subr.bf16.mxu0 %v329
    %389 = vmatpush1.bf16.msra.mxu0 %v328
    %390 = vmatprep.subr.bf16.mxu0 %v333
    %391 = vmatpush1.bf16.msra.mxu0 %v332
    %392 = vmatprep.subr.bf16.mxu0 %v337
    %393 = vmatpush1.bf16.msra.mxu0 %v336
    %394 = vmatprep.subr.bf16.mxu0 %v341
    %395 = vmatpush1.bf16.msra.mxu0 %v340
    %396 = vmatprep.subr.bf16.mxu0 %v345
    %397 = vmatpush1.bf16.msra.mxu0 %v344
    %398 = vmatprep.subr.bf16.mxu0 %v349
    %399 = vmatpush1.bf16.msra.mxu0 %v348
    %400 = vmatprep.subr.bf16.mxu0 0
    %401 = vmatpush1.bf16.msra.mxu0 0
    %402 = vmatprep.subr.bf16.mxu0 0
    %403 = vmatpush1.bf16.msra.mxu0 0
    %404 = vmatprep.subr.bf16.mxu0 0
    %405 = vmatpush1.bf16.msra.mxu0 0
    %406 = vmatprep.subr.bf16.mxu0 0
    %407 = vmatpush1.bf16.msra.mxu0 0
    %408 = vmatprep.subr.bf16.mxu0 0
    %409 = vmatpush1.bf16.msra.mxu0 0
    %410 = vmatprep.subr.bf16.mxu0 0
    %411 = vmatpush1.bf16.msra.mxu0 0
    %412 = vmatprep.subr.bf16.mxu0 0
    %413 = vmatpush1.bf16.msra.mxu0 0
    %414 = vmatprep.subr.bf16.mxu0 0
    %415 = vmatpush1.bf16.msra.mxu0 0
    %416 = vmatprep.mubr.bf16.mxu0 0
    %417 = vmatmul.mubr.bf16.gmra.mrb[0].mxu0 0
    %v418 = vpop.f32.mrb[0].mxu0
    %v419 = vadd.f32 %v177, %v418
    %v420 = vpop.f32.mrb[0].mxu0
    %v421 = vadd.f32 %v179, %v420
    %v422 = vpop.f32.mrb[0].mxu0
    %v423 = vpop.f32.mrb[0].mxu0
    %424 = vdwg.mxu0
    %425 = vmatprep.subr.bf16.mxu0 %v323
    %426 = vmatpush1.bf16.msra.mxu0 %v322
    %427 = vmatprep.subr.bf16.mxu0 %v327
    %428 = vmatpush1.bf16.msra.mxu0 %v326
    %429 = vmatprep.subr.bf16.mxu0 %v331
    %430 = vmatpush1.bf16.msra.mxu0 %v330
    %431 = vmatprep.subr.bf16.mxu0 %v335
    %432 = vmatpush1.bf16.msra.mxu0 %v334
    %433 = vmatprep.subr.bf16.mxu0 %v339
    %434 = vmatpush1.bf16.msra.mxu0 %v338
    %435 = vmatprep.subr.bf16.mxu0 %v343
    %436 = vmatpush1.bf16.msra.mxu0 %v342
    %437 = vmatprep.subr.bf16.mxu0 %v347
    %438 = vmatpush1.bf16.msra.mxu0 %v346
    %439 = vmatprep.subr.bf16.mxu0 %v351
    %440 = vmatpush1.bf16.msra.mxu0 %v350
    %441 = vmatprep.subr.bf16.mxu0 0
    %442 = vmatpush1.bf16.msra.mxu0 0
    %443 = vmatprep.subr.bf16.mxu0 0
    %444 = vmatpush1.bf16.msra.mxu0 0
    %445 = vmatprep.subr.bf16.mxu0 0
    %446 = vmatpush1.bf16.msra.mxu0 0
    %447 = vmatprep.subr.bf16.mxu0 0
    %448 = vmatpush1.bf16.msra.mxu0 0
    %449 = vmatprep.subr.bf16.mxu0 0
    %450 = vmatpush1.bf16.msra.mxu0 0
    %451 = vmatprep.subr.bf16.mxu0 0
    %452 = vmatpush1.bf16.msra.mxu0 0
    %453 = vmatprep.subr.bf16.mxu0 0
    %454 = vmatpush1.bf16.msra.mxu0 0
    %455 = vmatprep.subr.bf16.mxu0 0
    %456 = vmatpush1.bf16.msra.mxu0 0
    %457 = vmatprep.mubr.bf16.mxu0 0
    %458 = vmatmul.mubr.bf16.gmra.mrb[0].mxu0 0
    %v459 = vpop.f32.mrb[0].mxu0
    %v460 = vadd.f32 %v218, %v459
    %v461 = vpop.f32.mrb[0].mxu0
    %v462 = vadd.f32 %v220, %v461
    %v463 = vpop.f32.mrb[0].mxu0
    %v464 = vpop.f32.mrb[0].mxu0
    %465 = vdwg.mxu0
    %v466 = vmul.f32 %v419, 0.5
    %v467 = vtanh.pop %v466
    %v468 = vmul.f32 %v467, 0.5
    %v469 = vadd.f32 %v468, 0.5
    %v470 = vmul.f32 %v421, 0.5
    %v471 = vtanh.pop %v470
    %v472 = vmul.f32 %v471, 0.5
    %v473 = vadd.f32 %v472, 0.5
    %v474 = vtanh.pop %v460
    %v475 = vmul.f32 %v462, 0.5
    %v476 = vtanh.pop %v475
    %v477 = vmul.f32 %v476, 0.5
    %v478 = vadd.f32 %v477, 0.5
    %v479 = vmul.f32 %v473, 0.0
    %v480 = vmul.f32 %v469, %v474
    %v481 = vadd.f32 %v479, %v480
    %v482 = vtanh.pop %v481
    %v483 = vmul.f32 %v478, %v482
    %s484 = scalar_lea.vmem %s0, 64
    %v485 = vld [vmem:[%s484] sm:$0xff]
    %v486 = vpack.c.bf16 %v485, %v485
    %v489 = vunpack.c.l.b16 %v79
    %v490 = vunpack.c.h.b16 %v79
    %v491 = vunpack.c.l.b16 %v80
    %v492 = vunpack.c.h.b16 %v80
    %v493 = vpack.c.b16 %v489, %v489
    %v494 = vpack.c.b16 %v490, %v490
    %v495 = vpack.c.b16 %v491, %v491
    %v496 = vpack.c.b16 %v492, %v492
    %v498 = vsel %vm125, %v486, 0
    %v501 = vsel %vm129, %v493, 0
    %v504 = vsel %vm129, %v494, 0
    %v507 = vsel %vm129, %v495, 0
    %v510 = vsel %vm129, %v496, 0
    %512 = vmatprep.subr.bf16.mxu0 %v504
    %513 = vmatpush1.bf16.msra.mxu0 %v501
    %514 = vmatprep.subr.bf16.mxu0 0
    %515 = vmatpush1.bf16.msra.mxu0 0
    %516 = vmatprep.subr.bf16.mxu0 0
    %517 = vmatpush1.bf16.msra.mxu0 0
    %518 = vmatprep.subr.bf16.mxu0 0
    %519 = vmatpush1.bf16.msra.mxu0 0
    %520 = vmatprep.subr.bf16.mxu0 0
    %521 = vmatpush1.bf16.msra.mxu0 0
    %522 = vmatprep.subr.bf16.mxu0 0
    %523 = vmatpush1.bf16.msra.mxu0 0
    %524 = vmatprep.subr.bf16.mxu0 0
    %525 = vmatpush1.bf16.msra.mxu0 0
    %526 = vmatprep.subr.bf16.mxu0 0
    %527 = vmatpush1.bf16.msra.mxu0 0
    %528 = vmatprep.subr.bf16.mxu0 0
    %529 = vmatpush1.bf16.msra.mxu0 0
    %530 = vmatprep.subr.bf16.mxu0 0
    %531 = vmatpush1.bf16.msra.mxu0 0
    %532 = vmatprep.subr.bf16.mxu0 0
    %533 = vmatpush1.bf16.msra.mxu0 0
    %534 = vmatprep.subr.bf16.mxu0 0
    %535 = vmatpush1.bf16.msra.mxu0 0
    %536 = vmatprep.subr.bf16.mxu0 0
    %537 = vmatpush1.bf16.msra.mxu0 0
    %538 = vmatprep.subr.bf16.mxu0 0
    %539 = vmatpush1.bf16.msra.mxu0 0
    %540 = vmatprep.subr.bf16.mxu0 0
    %541 = vmatpush1.bf16.msra.mxu0 0
    %542 = vmatprep.subr.bf16.mxu0 0
    %543 = vmatpush1.bf16.msra.mxu0 0
    %544 = vmatprep.mubr.bf16.mxu0 0
    %545 = vmatmul.mubr.bf16.gmra.mrb[0].mxu0 %v498
    %v546 = vpop.f32.mrb[0].mxu0
    %v547 = vadd.f32 0.0, %v546
    %v548 = vpop.f32.mrb[0].mxu0
    %v549 = vadd.f32 0.0, %v548
    %v550 = vpop.f32.mrb[0].mxu0
    %v551 = vpop.f32.mrb[0].mxu0
    %552 = vdwg.mxu0
    %553 = vmatprep.subr.bf16.mxu0 %v510
    %554 = vmatpush1.bf16.msra.mxu0 %v507
    %555 = vmatprep.subr.bf16.mxu0 0
    %556 = vmatpush1.bf16.msra.mxu0 0
    %557 = vmatprep.subr.bf16.mxu0 0
    %558 = vmatpush1.bf16.msra.mxu0 0
    %559 = vmatprep.subr.bf16.mxu0 0
    %560 = vmatpush1.bf16.msra.mxu0 0
    %561 = vmatprep.subr.bf16.mxu0 0
    %562 = vmatpush1.bf16.msra.mxu0 0
    %563 = vmatprep.subr.bf16.mxu0 0
    %564 = vmatpush1.bf16.msra.mxu0 0
    %565 = vmatprep.subr.bf16.mxu0 0
    %566 = vmatpush1.bf16.msra.mxu0 0
    %567 = vmatprep.subr.bf16.mxu0 0
    %568 = vmatpush1.bf16.msra.mxu0 0
    %569 = vmatprep.subr.bf16.mxu0 0
    %570 = vmatpush1.bf16.msra.mxu0 0
    %571 = vmatprep.subr.bf16.mxu0 0
    %572 = vmatpush1.bf16.msra.mxu0 0
    %573 = vmatprep.subr.bf16.mxu0 0
    %574 = vmatpush1.bf16.msra.mxu0 0
    %575 = vmatprep.subr.bf16.mxu0 0
    %576 = vmatpush1.bf16.msra.mxu0 0
    %577 = vmatprep.subr.bf16.mxu0 0
    %578 = vmatpush1.bf16.msra.mxu0 0
    %579 = vmatprep.subr.bf16.mxu0 0
    %580 = vmatpush1.bf16.msra.mxu0 0
    %581 = vmatprep.subr.bf16.mxu0 0
    %582 = vmatpush1.bf16.msra.mxu0 0
    %583 = vmatprep.subr.bf16.mxu0 0
    %584 = vmatpush1.bf16.msra.mxu0 0
    %585 = vmatprep.mubr.bf16.mxu0 0
    %586 = vmatmul.mubr.bf16.gmra.mrb[0].mxu0 %v498
    %v587 = vpop.f32.mrb[0].mxu0
    %v588 = vadd.f32 0.0, %v587
    %v589 = vpop.f32.mrb[0].mxu0
    %v590 = vadd.f32 0.0, %v589
    %v591 = vpop.f32.mrb[0].mxu0
    %v592 = vpop.f32.mrb[0].mxu0
    %593 = vdwg.mxu0
    %v626 = vunpack.c.l.b16 %v81
    %v627 = vunpack.c.h.b16 %v81
    %v628 = vunpack.c.l.b16 %v82
    %v629 = vunpack.c.h.b16 %v82
    %v630 = vunpack.c.l.b16 %v83
    %v631 = vunpack.c.h.b16 %v83
    %v632 = vunpack.c.l.b16 %v84
    %v633 = vunpack.c.h.b16 %v84
    %v634 = vunpack.c.l.b16 %v85
    %v635 = vunpack.c.h.b16 %v85
    %v636 = vunpack.c.l.b16 %v86
    %v637 = vunpack.c.h.b16 %v86
    %v638 = vunpack.c.l.b16 %v87
    %v639 = vunpack.c.h.b16 %v87
    %v640 = vunpack.c.l.b16 %v88
    %v641 = vunpack.c.h.b16 %v88
    %v642 = vunpack.c.l.b16 %v89
    %v643 = vunpack.c.h.b16 %v89
    %v644 = vunpack.c.l.b16 %v90
    %v645 = vunpack.c.h.b16 %v90
    %v646 = vunpack.c.l.b16 %v91
    %v647 = vunpack.c.h.b16 %v91
    %v648 = vunpack.c.l.b16 %v92
    %v649 = vunpack.c.h.b16 %v92
    %v650 = vunpack.c.l.b16 %v93
    %v651 = vunpack.c.h.b16 %v93
    %v652 = vunpack.c.l.b16 %v94
    %v653 = vunpack.c.h.b16 %v94
    %v654 = vunpack.c.l.b16 %v95
    %v655 = vunpack.c.h.b16 %v95
    %v656 = vunpack.c.l.b16 %v96
    %v657 = vunpack.c.h.b16 %v96
    %v658 = vunpack.c.l.b16 %v97
    %v659 = vunpack.c.h.b16 %v97
    %v660 = vunpack.c.l.b16 %v98
    %v661 = vunpack.c.h.b16 %v98
    %v662 = vunpack.c.l.b16 %v99
    %v663 = vunpack.c.h.b16 %v99
    %v664 = vunpack.c.l.b16 %v100
    %v665 = vunpack.c.h.b16 %v100
    %v666 = vunpack.c.l.b16 %v101
    %v667 = vunpack.c.h.b16 %v101
    %v668 = vunpack.c.l.b16 %v102
    %v669 = vunpack.c.h.b16 %v102
    %v670 = vunpack.c.l.b16 %v103
    %v671 = vunpack.c.h.b16 %v103
    %v672 = vunpack.c.l.b16 %v104
    %v673 = vunpack.c.h.b16 %v104
    %v674 = vunpack.c.l.b16 %v105
    %v675 = vunpack.c.h.b16 %v105
    %v676 = vunpack.c.l.b16 %v106
    %v677 = vunpack.c.h.b16 %v106
    %v678 = vunpack.c.l.b16 %v107
    %v679 = vunpack.c.h.b16 %v107
    %v680 = vunpack.c.l.b16 %v108
    %v681 = vunpack.c.h.b16 %v108
    %v682 = vunpack.c.l.b16 %v109
    %v683 = vunpack.c.h.b16 %v109
    %v684 = vunpack.c.l.b16 %v110
    %v685 = vunpack.c.h.b16 %v110
    %v686 = vunpack.c.l.b16 %v111
    %v687 = vunpack.c.h.b16 %v111
    %v688 = vunpack.c.l.b16 %v112
    %v689 = vunpack.c.h.b16 %v112
    %v690 = vpack.c.b16 %v630, %v626
    %v691 = vpack.c.b16 %v631, %v627
    %v692 = vpack.c.b16 %v632, %v628
    %v693 = vpack.c.b16 %v633, %v629
    %v694 = vpack.c.b16 %v638, %v634
    %v695 = vpack.c.b16 %v639, %v635
    %v696 = vpack.c.b16 %v640, %v636
    %v697 = vpack.c.b16 %v641, %v637
    %v698 = vpack.c.b16 %v646, %v642
    %v699 = vpack.c.b16 %v647, %v643
    %v700 = vpack.c.b16 %v648, %v644
    %v701 = vpack.c.b16 %v649, %v645
    %v702 = vpack.c.b16 %v654, %v650
    %v703 = vpack.c.b16 %v655, %v651
    %v704 = vpack.c.b16 %v656, %v652
    %v705 = vpack.c.b16 %v657, %v653
    %v706 = vpack.c.b16 %v662, %v658
    %v707 = vpack.c.b16 %v663, %v659
    %v708 = vpack.c.b16 %v664, %v660
    %v709 = vpack.c.b16 %v665, %v661
    %v710 = vpack.c.b16 %v670, %v666
    %v711 = vpack.c.b16 %v671, %v667
    %v712 = vpack.c.b16 %v672, %v668
    %v713 = vpack.c.b16 %v673, %v669
    %v714 = vpack.c.b16 %v678, %v674
    %v715 = vpack.c.b16 %v679, %v675
    %v716 = vpack.c.b16 %v680, %v676
    %v717 = vpack.c.b16 %v681, %v677
    %v718 = vpack.c.b16 %v686, %v682
    %v719 = vpack.c.b16 %v687, %v683
    %v720 = vpack.c.b16 %v688, %v684
    %v721 = vpack.c.b16 %v689, %v685
    %754 = vmatprep.subr.bf16.mxu0 %v691
    %755 = vmatpush1.bf16.msra.mxu0 %v690
    %756 = vmatprep.subr.bf16.mxu0 %v695
    %757 = vmatpush1.bf16.msra.mxu0 %v694
    %758 = vmatprep.subr.bf16.mxu0 %v699
    %759 = vmatpush1.bf16.msra.mxu0 %v698
    %760 = vmatprep.subr.bf16.mxu0 %v703
    %761 = vmatpush1.bf16.msra.mxu0 %v702
    %762 = vmatprep.subr.bf16.mxu0 %v707
    %763 = vmatpush1.bf16.msra.mxu0 %v706
    %764 = vmatprep.subr.bf16.mxu0 %v711
    %765 = vmatpush1.bf16.msra.mxu0 %v710
    %766 = vmatprep.subr.bf16.mxu0 %v715
    %767 = vmatpush1.bf16.msra.mxu0 %v714
    %768 = vmatprep.subr.bf16.mxu0 %v719
    %769 = vmatpush1.bf16.msra.mxu0 %v718
    %770 = vmatprep.subr.bf16.mxu0 0
    %771 = vmatpush1.bf16.msra.mxu0 0
    %772 = vmatprep.subr.bf16.mxu0 0
    %773 = vmatpush1.bf16.msra.mxu0 0
    %774 = vmatprep.subr.bf16.mxu0 0
    %775 = vmatpush1.bf16.msra.mxu0 0
    %776 = vmatprep.subr.bf16.mxu0 0
    %777 = vmatpush1.bf16.msra.mxu0 0
    %778 = vmatprep.subr.bf16.mxu0 0
    %779 = vmatpush1.bf16.msra.mxu0 0
    %780 = vmatprep.subr.bf16.mxu0 0
    %781 = vmatpush1.bf16.msra.mxu0 0
    %782 = vmatprep.subr.bf16.mxu0 0
    %783 = vmatpush1.bf16.msra.mxu0 0
    %784 = vmatprep.subr.bf16.mxu0 0
    %785 = vmatpush1.bf16.msra.mxu0 0
    %786 = vmatprep.mubr.bf16.mxu0 0
    %787 = vmatmul.mubr.bf16.gmra.mrb[0].mxu0 0
    %v788 = vpop.f32.mrb[0].mxu0
    %v789 = vadd.f32 %v547, %v788
    %v790 = vpop.f32.mrb[0].mxu0
    %v791 = vadd.f32 %v549, %v790
    %v792 = vpop.f32.mrb[0].mxu0
    %v793 = vpop.f32.mrb[0].mxu0
    %794 = vdwg.mxu0
    %795 = vmatprep.subr.bf16.mxu0 %v693
    %796 = vmatpush1.bf16.msra.mxu0 %v692
    %797 = vmatprep.subr.bf16.mxu0 %v697
    %798 = vmatpush1.bf16.msra.mxu0 %v696
    %799 = vmatprep.subr.bf16.mxu0 %v701
    %800 = vmatpush1.bf16.msra.mxu0 %v700
    %801 = vmatprep.subr.bf16.mxu0 %v705
    %802 = vmatpush1.bf16.msra.mxu0 %v704
    %803 = vmatprep.subr.bf16.mxu0 %v709
    %804 = vmatpush1.bf16.msra.mxu0 %v708
    %805 = vmatprep.subr.bf16.mxu0 %v713
    %806 = vmatpush1.bf16.msra.mxu0 %v712
    %807 = vmatprep.subr.bf16.mxu0 %v717
    %808 = vmatpush1.bf16.msra.mxu0 %v716
    %809 = vmatprep.subr.bf16.mxu0 %v721
    %810 = vmatpush1.bf16.msra.mxu0 %v720
    %811 = vmatprep.subr.bf16.mxu0 0
    %812 = vmatpush1.bf16.msra.mxu0 0
    %813 = vmatprep.subr.bf16.mxu0 0
    %814 = vmatpush1.bf16.msra.mxu0 0
    %815 = vmatprep.subr.bf16.mxu0 0
    %816 = vmatpush1.bf16.msra.mxu0 0
    %817 = vmatprep.subr.bf16.mxu0 0
    %818 = vmatpush1.bf16.msra.mxu0 0
    %819 = vmatprep.subr.bf16.mxu0 0
    %820 = vmatpush1.bf16.msra.mxu0 0
    %821 = vmatprep.subr.bf16.mxu0 0
    %822 = vmatpush1.bf16.msra.mxu0 0
    %823 = vmatprep.subr.bf16.mxu0 0
    %824 = vmatpush1.bf16.msra.mxu0 0
    %825 = vmatprep.subr.bf16.mxu0 0
    %826 = vmatpush1.bf16.msra.mxu0 0
    %827 = vmatprep.mubr.bf16.mxu0 0
    %828 = vmatmul.mubr.bf16.gmra.mrb[0].mxu0 0
    %v829 = vpop.f32.mrb[0].mxu0
    %v830 = vadd.f32 %v588, %v829
    %v831 = vpop.f32.mrb[0].mxu0
    %v832 = vadd.f32 %v590, %v831
    %v833 = vpop.f32.mrb[0].mxu0
    %v834 = vpop.f32.mrb[0].mxu0
    %835 = vdwg.mxu0
    %v836 = vmul.f32 %v789, 0.5
    %v837 = vtanh.pop %v836
    %v838 = vmul.f32 %v837, 0.5
    %v839 = vadd.f32 %v838, 0.5
    %v840 = vmul.f32 %v791, 0.5
    %v841 = vtanh.pop %v840
    %v842 = vmul.f32 %v841, 0.5
    %v843 = vadd.f32 %v842, 0.5
    %v844 = vtanh.pop %v830
    %v845 = vmul.f32 %v832, 0.5
    %v846 = vtanh.pop %v845
    %v847 = vmul.f32 %v846, 0.5
    %v848 = vadd.f32 %v847, 0.5
    %v849 = vmul.f32 %v843, 0.0
    %v850 = vmul.f32 %v839, %v844
    %v851 = vadd.f32 %v849, %v850
    %v852 = vtanh.pop %v851
    %v853 = vmul.f32 %v848, %v852
    %s854 = scalar_lea.vmem %s0, 8
    %v855 = vld [vmem:[%s854] sm:$0xff]
    %v856 = vpack.c.bf16 %v855, %v855
    %v857 = vpack.c.bf16 %v483, %v483
    %v859 = vsel %vm125, %v856, 0
    %861 = vmatprep.subr.bf16.mxu0 %v134
    %862 = vmatpush1.bf16.msra.mxu0 %v131
    %863 = vmatprep.subr.bf16.mxu0 0
    %864 = vmatpush1.bf16.msra.mxu0 0
    %865 = vmatprep.subr.bf16.mxu0 0
    %866 = vmatpush1.bf16.msra.mxu0 0
    %867 = vmatprep.subr.bf16.mxu0 0
    %868 = vmatpush1.bf16.msra.mxu0 0
    %869 = vmatprep.subr.bf16.mxu0 0
    %870 = vmatpush1.bf16.msra.mxu0 0
    %871 = vmatprep.subr.bf16.mxu0 0
    %872 = vmatpush1.bf16.msra.mxu0 0
    %873 = vmatprep.subr.bf16.mxu0 0
    %874 = vmatpush1.bf16.msra.mxu0 0
    %875 = vmatprep.subr.bf16.mxu0 0
    %876 = vmatpush1.bf16.msra.mxu0 0
    %877 = vmatprep.subr.bf16.mxu0 0
    %878 = vmatpush1.bf16.msra.mxu0 0
    %879 = vmatprep.subr.bf16.mxu0 0
    %880 = vmatpush1.bf16.msra.mxu0 0
    %881 = vmatprep.subr.bf16.mxu0 0
    %882 = vmatpush1.bf16.msra.mxu0 0
    %883 = vmatprep.subr.bf16.mxu0 0
    %884 = vmatpush1.bf16.msra.mxu0 0
    %885 = vmatprep.subr.bf16.mxu0 0
    %886 = vmatpush1.bf16.msra.mxu0 0
    %887 = vmatprep.subr.bf16.mxu0 0
    %888 = vmatpush1.bf16.msra.mxu0 0
    %889 = vmatprep.subr.bf16.mxu0 0
    %890 = vmatpush1.bf16.msra.mxu0 0
    %891 = vmatprep.subr.bf16.mxu0 0
    %892 = vmatpush1.bf16.msra.mxu0 0
    %893 = vmatprep.mubr.bf16.mxu0 0
    %894 = vmatmul.mubr.bf16.gmra.mrb[0].mxu0 %v859
    %v895 = vpop.f32.mrb[0].mxu0
    %v896 = vadd.f32 0.0, %v895
    %v897 = vpop.f32.mrb[0].mxu0
    %v898 = vadd.f32 0.0, %v897
    %v899 = vpop.f32.mrb[0].mxu0
    %v900 = vpop.f32.mrb[0].mxu0
    %901 = vdwg.mxu0
    %902 = vmatprep.subr.bf16.mxu0 %v140
    %903 = vmatpush1.bf16.msra.mxu0 %v137
    %904 = vmatprep.subr.bf16.mxu0 0
    %905 = vmatpush1.bf16.msra.mxu0 0
    %906 = vmatprep.subr.bf16.mxu0 0
    %907 = vmatpush1.bf16.msra.mxu0 0
    %908 = vmatprep.subr.bf16.mxu0 0
    %909 = vmatpush1.bf16.msra.mxu0 0
    %910 = vmatprep.subr.bf16.mxu0 0
    %911 = vmatpush1.bf16.msra.mxu0 0
    %912 = vmatprep.subr.bf16.mxu0 0
    %913 = vmatpush1.bf16.msra.mxu0 0
    %914 = vmatprep.subr.bf16.mxu0 0
    %915 = vmatpush1.bf16.msra.mxu0 0
    %916 = vmatprep.subr.bf16.mxu0 0
    %917 = vmatpush1.bf16.msra.mxu0 0
    %918 = vmatprep.subr.bf16.mxu0 0
    %919 = vmatpush1.bf16.msra.mxu0 0
    %920 = vmatprep.subr.bf16.mxu0 0
    %921 = vmatpush1.bf16.msra.mxu0 0
    %922 = vmatprep.subr.bf16.mxu0 0
    %923 = vmatpush1.bf16.msra.mxu0 0
    %924 = vmatprep.subr.bf16.mxu0 0
    %925 = vmatpush1.bf16.msra.mxu0 0
    %926 = vmatprep.subr.bf16.mxu0 0
    %927 = vmatpush1.bf16.msra.mxu0 0
    %928 = vmatprep.subr.bf16.mxu0 0
    %929 = vmatpush1.bf16.msra.mxu0 0
    %930 = vmatprep.subr.bf16.mxu0 0
    %931 = vmatpush1.bf16.msra.mxu0 0
    %932 = vmatprep.subr.bf16.mxu0 0
    %933 = vmatpush1.bf16.msra.mxu0 0
    %934 = vmatprep.mubr.bf16.mxu0 0
    %935 = vmatmul.mubr.bf16.gmra.mrb[0].mxu0 %v859
    %v936 = vpop.f32.mrb[0].mxu0
    %v937 = vadd.f32 0.0, %v936
    %v938 = vpop.f32.mrb[0].mxu0
    %v939 = vadd.f32 0.0, %v938
    %v940 = vpop.f32.mrb[0].mxu0
    %v941 = vpop.f32.mrb[0].mxu0
    %942 = vdwg.mxu0
    %943 = vmatprep.subr.bf16.mxu0 %v321
    %944 = vmatpush1.bf16.msra.mxu0 %v320
    %945 = vmatprep.subr.bf16.mxu0 %v325
    %946 = vmatpush1.bf16.msra.mxu0 %v324
    %947 = vmatprep.subr.bf16.mxu0 %v329
    %948 = vmatpush1.bf16.msra.mxu0 %v328
    %949 = vmatprep.subr.bf16.mxu0 %v333
    %950 = vmatpush1.bf16.msra.mxu0 %v332
    %951 = vmatprep.subr.bf16.mxu0 %v337
    %952 = vmatpush1.bf16.msra.mxu0 %v336
    %953 = vmatprep.subr.bf16.mxu0 %v341
    %954 = vmatpush1.bf16.msra.mxu0 %v340
    %955 = vmatprep.subr.bf16.mxu0 %v345
    %956 = vmatpush1.bf16.msra.mxu0 %v344
    %957 = vmatprep.subr.bf16.mxu0 %v349
    %958 = vmatpush1.bf16.msra.mxu0 %v348
    %959 = vmatprep.subr.bf16.mxu0 0
    %960 = vmatpush1.bf16.msra.mxu0 0
    %961 = vmatprep.subr.bf16.mxu0 0
    %962 = vmatpush1.bf16.msra.mxu0 0
    %963 = vmatprep.subr.bf16.mxu0 0
    %964 = vmatpush1.bf16.msra.mxu0 0
    %965 = vmatprep.subr.bf16.mxu0 0
    %966 = vmatpush1.bf16.msra.mxu0 0
    %967 = vmatprep.subr.bf16.mxu0 0
    %968 = vmatpush1.bf16.msra.mxu0 0
    %969 = vmatprep.subr.bf16.mxu0 0
    %970 = vmatpush1.bf16.msra.mxu0 0
    %971 = vmatprep.subr.bf16.mxu0 0
    %972 = vmatpush1.bf16.msra.mxu0 0
    %973 = vmatprep.subr.bf16.mxu0 0
    %974 = vmatpush1.bf16.msra.mxu0 0
    %975 = vmatprep.mubr.bf16.mxu0 0
    %976 = vmatmul.mubr.bf16.gmra.mrb[0].mxu0 %v857
    %v977 = vpop.f32.mrb[0].mxu0
    %v978 = vadd.f32 %v896, %v977
    %v979 = vpop.f32.mrb[0].mxu0
    %v980 = vadd.f32 %v898, %v979
    %v981 = vpop.f32.mrb[0].mxu0
    %v982 = vpop.f32.mrb[0].mxu0
    %983 = vdwg.mxu0
    %984 = vmatprep.subr.bf16.mxu0 %v323
    %985 = vmatpush1.bf16.msra.mxu0 %v322
    %986 = vmatprep.subr.bf16.mxu0 %v327
    %987 = vmatpush1.bf16.msra.mxu0 %v326
    %988 = vmatprep.subr.bf16.mxu0 %v331
    %989 = vmatpush1.bf16.msra.mxu0 %v330
    %990 = vmatprep.subr.bf16.mxu0 %v335
    %991 = vmatpush1.bf16.msra.mxu0 %v334
    %992 = vmatprep.subr.bf16.mxu0 %v339
    %993 = vmatpush1.bf16.msra.mxu0 %v338
    %994 = vmatprep.subr.bf16.mxu0 %v343
    %995 = vmatpush1.bf16.msra.mxu0 %v342
    %996 = vmatprep.subr.bf16.mxu0 %v347
    %997 = vmatpush1.bf16.msra.mxu0 %v346
    %998 = vmatprep.subr.bf16.mxu0 %v351
    %999 = vmatpush1.bf16.msra.mxu0 %v350
    %1000 = vmatprep.subr.bf16.mxu0 0
    %1001 = vmatpush1.bf16.msra.mxu0 0
    %1002 = vmatprep.subr.bf16.mxu0 0
    %1003 = vmatpush1.bf16.msra.mxu0 0
    %1004 = vmatprep.subr.bf16.mxu0 0
    %1005 = vmatpush1.bf16.msra.mxu0 0
    %1006 = vmatprep.subr.bf16.mxu0 0
    %1007 = vmatpush1.bf16.msra.mxu0 0
    %1008 = vmatprep.subr.bf16.mxu0 0
    %1009 = vmatpush1.bf16.msra.mxu0 0
    %1010 = vmatprep.subr.bf16.mxu0 0
    %1011 = vmatpush1.bf16.msra.mxu0 0
    %1012 = vmatprep.subr.bf16.mxu0 0
    %1013 = vmatpush1.bf16.msra.mxu0 0
    %1014 = vmatprep.subr.bf16.mxu0 0
    %1015 = vmatpush1.bf16.msra.mxu0 0
    %1016 = vmatprep.mubr.bf16.mxu0 0
    %1017 = vmatmul.mubr.bf16.gmra.mrb[0].mxu0 %v857
    %v1018 = vpop.f32.mrb[0].mxu0
    %v1019 = vadd.f32 %v937, %v1018
    %v1020 = vpop.f32.mrb[0].mxu0
    %v1021 = vadd.f32 %v939, %v1020
    %v1022 = vpop.f32.mrb[0].mxu0
    %v1023 = vpop.f32.mrb[0].mxu0
    %1024 = vdwg.mxu0
    %v1025 = vmul.f32 %v978, 0.5
    %v1026 = vtanh.pop %v1025
    %v1027 = vmul.f32 %v1026, 0.5
    %v1028 = vadd.f32 %v1027, 0.5
    %v1029 = vmul.f32 %v980, 0.5
    %v1030 = vtanh.pop %v1029
    %v1031 = vmul.f32 %v1030, 0.5
    %v1032 = vadd.f32 %v1031, 0.5
    %v1033 = vtanh.pop %v1019
    %v1034 = vmul.f32 %v1021, 0.5
    %v1035 = vtanh.pop %v1034
    %v1036 = vmul.f32 %v1035, 0.5
    %v1037 = vadd.f32 %v1036, 0.5
    %v1038 = vmul.f32 %v1032, %v481
    %v1039 = vmul.f32 %v1028, %v1033
    %v1040 = vadd.f32 %v1038, %v1039
    %v1041 = vtanh.pop %v1040
    %v1042 = vmul.f32 %v1037, %v1041
    %s1043 = scalar_lea.vmem %s0, 56
    %v1044 = vld [vmem:[%s1043] sm:$0xff]
    %v1045 = vpack.c.bf16 %v1044, %v1044
    %v1046 = vpack.c.bf16 %v853, %v853
    %v1048 = vsel %vm125, %v1045, 0
    %1050 = vmatprep.subr.bf16.mxu0 %v504
    %1051 = vmatpush1.bf16.msra.mxu0 %v501
    %1052 = vmatprep.subr.bf16.mxu0 0
    %1053 = vmatpush1.bf16.msra.mxu0 0
    %1054 = vmatprep.subr.bf16.mxu0 0
    %1055 = vmatpush1.bf16.msra.mxu0 0
    %1056 = vmatprep.subr.bf16.mxu0 0
    %1057 = vmatpush1.bf16.msra.mxu0 0
    %1058 = vmatprep.subr.bf16.mxu0 0
    %1059 = vmatpush1.bf16.msra.mxu0 0
    %1060 = vmatprep.subr.bf16.mxu0 0
    %1061 = vmatpush1.bf16.msra.mxu0 0
    %1062 = vmatprep.subr.bf16.mxu0 0
    %1063 = vmatpush1.bf16.msra.mxu0 0
    %1064 = vmatprep.subr.bf16.mxu0 0
    %1065 = vmatpush1.bf16.msra.mxu0 0
    %1066 = vmatprep.subr.bf16.mxu0 0
    %1067 = vmatpush1.bf16.msra.mxu0 0
    %1068 = vmatprep.subr.bf16.mxu0 0
    %1069 = vmatpush1.bf16.msra.mxu0 0
    %1070 = vmatprep.subr.bf16.mxu0 0
    %1071 = vmatpush1.bf16.msra.mxu0 0
    %1072 = vmatprep.subr.bf16.mxu0 0
    %1073 = vmatpush1.bf16.msra.mxu0 0
    %1074 = vmatprep.subr.bf16.mxu0 0
    %1075 = vmatpush1.bf16.msra.mxu0 0
    %1076 = vmatprep.subr.bf16.mxu0 0
    %1077 = vmatpush1.bf16.msra.mxu0 0
    %1078 = vmatprep.subr.bf16.mxu0 0
    %1079 = vmatpush1.bf16.msra.mxu0 0
    %1080 = vmatprep.subr.bf16.mxu0 0
    %1081 = vmatpush1.bf16.msra.mxu0 0
    %1082 = vmatprep.mubr.bf16.mxu0 0
    %1083 = vmatmul.mubr.bf16.gmra.mrb[0].mxu0 %v1048
    %v1084 = vpop.f32.mrb[0].mxu0
    %v1085 = vadd.f32 0.0, %v1084
    %v1086 = vpop.f32.mrb[0].mxu0
    %v1087 = vadd.f32 0.0, %v1086
    %v1088 = vpop.f32.mrb[0].mxu0
    %v1089 = vpop.f32.mrb[0].mxu0
    %1090 = vdwg.mxu0
    %1091 = vmatprep.subr.bf16.mxu0 %v510
    %1092 = vmatpush1.bf16.msra.mxu0 %v507
    %1093 = vmatprep.subr.bf16.mxu0 0
    %1094 = vmatpush1.bf16.msra.mxu0 0
    %1095 = vmatprep.subr.bf16.mxu0 0
    %1096 = vmatpush1.bf16.msra.mxu0 0
    %1097 = vmatprep.subr.bf16.mxu0 0
    %1098 = vmatpush1.bf16.msra.mxu0 0
    %1099 = vmatprep.subr.bf16.mxu0 0
    %1100 = vmatpush1.bf16.msra.mxu0 0
    %1101 = vmatprep.subr.bf16.mxu0 0
    %1102 = vmatpush1.bf16.msra.mxu0 0
    %1103 = vmatprep.subr.bf16.mxu0 0
    %1104 = vmatpush1.bf16.msra.mxu0 0
    %1105 = vmatprep.subr.bf16.mxu0 0
    %1106 = vmatpush1.bf16.msra.mxu0 0
    %1107 = vmatprep.subr.bf16.mxu0 0
    %1108 = vmatpush1.bf16.msra.mxu0 0
    %1109 = vmatprep.subr.bf16.mxu0 0
    %1110 = vmatpush1.bf16.msra.mxu0 0
    %1111 = vmatprep.subr.bf16.mxu0 0
    %1112 = vmatpush1.bf16.msra.mxu0 0
    %1113 = vmatprep.subr.bf16.mxu0 0
    %1114 = vmatpush1.bf16.msra.mxu0 0
    %1115 = vmatprep.subr.bf16.mxu0 0
    %1116 = vmatpush1.bf16.msra.mxu0 0
    %1117 = vmatprep.subr.bf16.mxu0 0
    %1118 = vmatpush1.bf16.msra.mxu0 0
    %1119 = vmatprep.subr.bf16.mxu0 0
    %1120 = vmatpush1.bf16.msra.mxu0 0
    %1121 = vmatprep.subr.bf16.mxu0 0
    %1122 = vmatpush1.bf16.msra.mxu0 0
    %1123 = vmatprep.mubr.bf16.mxu0 0
    %1124 = vmatmul.mubr.bf16.gmra.mrb[0].mxu0 %v1048
    %v1125 = vpop.f32.mrb[0].mxu0
    %v1126 = vadd.f32 0.0, %v1125
    %v1127 = vpop.f32.mrb[0].mxu0
    %v1128 = vadd.f32 0.0, %v1127
    %v1129 = vpop.f32.mrb[0].mxu0
    %v1130 = vpop.f32.mrb[0].mxu0
    %1131 = vdwg.mxu0
    %1132 = vmatprep.subr.bf16.mxu0 %v691
    %1133 = vmatpush1.bf16.msra.mxu0 %v690
    %1134 = vmatprep.subr.bf16.mxu0 %v695
    %1135 = vmatpush1.bf16.msra.mxu0 %v694
    %1136 = vmatprep.subr.bf16.mxu0 %v699
    %1137 = vmatpush1.bf16.msra.mxu0 %v698
    %1138 = vmatprep.subr.bf16.mxu0 %v703
    %1139 = vmatpush1.bf16.msra.mxu0 %v702
    %1140 = vmatprep.subr.bf16.mxu0 %v707
    %1141 = vmatpush1.bf16.msra.mxu0 %v706
    %1142 = vmatprep.subr.bf16.mxu0 %v711
    %1143 = vmatpush1.bf16.msra.mxu0 %v710
    %1144 = vmatprep.subr.bf16.mxu0 %v715
    %1145 = vmatpush1.bf16.msra.mxu0 %v714
    %1146 = vmatprep.subr.bf16.mxu0 %v719
    %1147 = vmatpush1.bf16.msra.mxu0 %v718
    %1148 = vmatprep.subr.bf16.mxu0 0
    %1149 = vmatpush1.bf16.msra.mxu0 0
    %1150 = vmatprep.subr.bf16.mxu0 0
    %1151 = vmatpush1.bf16.msra.mxu0 0
    %1152 = vmatprep.subr.bf16.mxu0 0
    %1153 = vmatpush1.bf16.msra.mxu0 0
    %1154 = vmatprep.subr.bf16.mxu0 0
    %1155 = vmatpush1.bf16.msra.mxu0 0
    %1156 = vmatprep.subr.bf16.mxu0 0
    %1157 = vmatpush1.bf16.msra.mxu0 0
    %1158 = vmatprep.subr.bf16.mxu0 0
    %1159 = vmatpush1.bf16.msra.mxu0 0
    %1160 = vmatprep.subr.bf16.mxu0 0
    %1161 = vmatpush1.bf16.msra.mxu0 0
    %1162 = vmatprep.subr.bf16.mxu0 0
    %1163 = vmatpush1.bf16.msra.mxu0 0
    %1164 = vmatprep.mubr.bf16.mxu0 0
    %1165 = vmatmul.mubr.bf16.gmra.mrb[0].mxu0 %v1046
    %v1166 = vpop.f32.mrb[0].mxu0
    %v1167 = vadd.f32 %v1085, %v1166
    %v1168 = vpop.f32.mrb[0].mxu0
    %v1169 = vadd.f32 %v1087, %v1168
    %v1170 = vpop.f32.mrb[0].mxu0
    %v1171 = vpop.f32.mrb[0].mxu0
    %1172 = vdwg.mxu0
    %1173 = vmatprep.subr.bf16.mxu0 %v693
    %1174 = vmatpush1.bf16.msra.mxu0 %v692
    %1175 = vmatprep.subr.bf16.mxu0 %v697
    %1176 = vmatpush1.bf16.msra.mxu0 %v696
    %1177 = vmatprep.subr.bf16.mxu0 %v701
    %1178 = vmatpush1.bf16.msra.mxu0 %v700
    %1179 = vmatprep.subr.bf16.mxu0 %v705
    %1180 = vmatpush1.bf16.msra.mxu0 %v704
    %1181 = vmatprep.subr.bf16.mxu0 %v709
    %1182 = vmatpush1.bf16.msra.mxu0 %v708
    %1183 = vmatprep.subr.bf16.mxu0 %v713
    %1184 = vmatpush1.bf16.msra.mxu0 %v712
    %1185 = vmatprep.subr.bf16.mxu0 %v717
    %1186 = vmatpush1.bf16.msra.mxu0 %v716
    %1187 = vmatprep.subr.bf16.mxu0 %v721
    %1188 = vmatpush1.bf16.msra.mxu0 %v720
    %1189 = vmatprep.subr.bf16.mxu0 0
    %1190 = vmatpush1.bf16.msra.mxu0 0
    %1191 = vmatprep.subr.bf16.mxu0 0
    %1192 = vmatpush1.bf16.msra.mxu0 0
    %1193 = vmatprep.subr.bf16.mxu0 0
    %1194 = vmatpush1.bf16.msra.mxu0 0
    %1195 = vmatprep.subr.bf16.mxu0 0
    %1196 = vmatpush1.bf16.msra.mxu0 0
    %1197 = vmatprep.subr.bf16.mxu0 0
    %1198 = vmatpush1.bf16.msra.mxu0 0
    %1199 = vmatprep.subr.bf16.mxu0 0
    %1200 = vmatpush1.bf16.msra.mxu0 0
    %1201 = vmatprep.subr.bf16.mxu0 0
    %1202 = vmatpush1.bf16.msra.mxu0 0
    %1203 = vmatprep.subr.bf16.mxu0 0
    %1204 = vmatpush1.bf16.msra.mxu0 0
    %1205 = vmatprep.mubr.bf16.mxu0 0
    %1206 = vmatmul.mubr.bf16.gmra.mrb[0].mxu0 %v1046
    %v1207 = vpop.f32.mrb[0].mxu0
    %v1208 = vadd.f32 %v1126, %v1207
    %v1209 = vpop.f32.mrb[0].mxu0
    %v1210 = vadd.f32 %v1128, %v1209
    %v1211 = vpop.f32.mrb[0].mxu0
    %v1212 = vpop.f32.mrb[0].mxu0
    %1213 = vdwg.mxu0
    %v1214 = vmul.f32 %v1167, 0.5
    %v1215 = vtanh.pop %v1214
    %v1216 = vmul.f32 %v1215, 0.5
    %v1217 = vadd.f32 %v1216, 0.5
    %v1218 = vmul.f32 %v1169, 0.5
    %v1219 = vtanh.pop %v1218
    %v1220 = vmul.f32 %v1219, 0.5
    %v1221 = vadd.f32 %v1220, 0.5
    %v1222 = vtanh.pop %v1208
    %v1223 = vmul.f32 %v1210, 0.5
    %v1224 = vtanh.pop %v1223
    %v1225 = vmul.f32 %v1224, 0.5
    %v1226 = vadd.f32 %v1225, 0.5
    %v1227 = vmul.f32 %v1221, %v851
    %v1228 = vmul.f32 %v1217, %v1222
    %v1229 = vadd.f32 %v1227, %v1228
    %v1230 = vtanh.pop %v1229
    %v1231 = vmul.f32 %v1226, %v1230
    %s1232 = scalar_lea.vmem %s0, 16
    %v1233 = vld [vmem:[%s1232] sm:$0xff]
    %v1234 = vpack.c.bf16 %v1233, %v1233
    %v1235 = vpack.c.bf16 %v1042, %v1042
    %v1237 = vsel %vm125, %v1234, 0
    %1239 = vmatprep.subr.bf16.mxu0 %v134
    %1240 = vmatpush1.bf16.msra.mxu0 %v131
    %1241 = vmatprep.subr.bf16.mxu0 0
    %1242 = vmatpush1.bf16.msra.mxu0 0
    %1243 = vmatprep.subr.bf16.mxu0 0
    %1244 = vmatpush1.bf16.msra.mxu0 0
    %1245 = vmatprep.subr.bf16.mxu0 0
    %1246 = vmatpush1.bf16.msra.mxu0 0
    %1247 = vmatprep.subr.bf16.mxu0 0
    %1248 = vmatpush1.bf16.msra.mxu0 0
    %1249 = vmatprep.subr.bf16.mxu0 0
    %1250 = vmatpush1.bf16.msra.mxu0 0
    %1251 = vmatprep.subr.bf16.mxu0 0
    %1252 = vmatpush1.bf16.msra.mxu0 0
    %1253 = vmatprep.subr.bf16.mxu0 0
    %1254 = vmatpush1.bf16.msra.mxu0 0
    %1255 = vmatprep.subr.bf16.mxu0 0
    %1256 = vmatpush1.bf16.msra.mxu0 0
    %1257 = vmatprep.subr.bf16.mxu0 0
    %1258 = vmatpush1.bf16.msra.mxu0 0
    %1259 = vmatprep.subr.bf16.mxu0 0
    %1260 = vmatpush1.bf16.msra.mxu0 0
    %1261 = vmatprep.subr.bf16.mxu0 0
    %1262 = vmatpush1.bf16.msra.mxu0 0
    %1263 = vmatprep.subr.bf16.mxu0 0
    %1264 = vmatpush1.bf16.msra.mxu0 0
    %1265 = vmatprep.subr.bf16.mxu0 0
    %1266 = vmatpush1.bf16.msra.mxu0 0
    %1267 = vmatprep.subr.bf16.mxu0 0
    %1268 = vmatpush1.bf16.msra.mxu0 0
    %1269 = vmatprep.subr.bf16.mxu0 0
    %1270 = vmatpush1.bf16.msra.mxu0 0
    %1271 = vmatprep.mubr.bf16.mxu0 0
    %1272 = vmatmul.mubr.bf16.gmra.mrb[0].mxu0 %v1237
    %v1273 = vpop.f32.mrb[0].mxu0
    %v1274 = vadd.f32 0.0, %v1273
    %v1275 = vpop.f32.mrb[0].mxu0
    %v1276 = vadd.f32 0.0, %v1275
    %v1277 = vpop.f32.mrb[0].mxu0
    %v1278 = vpop.f32.mrb[0].mxu0
    %1279 = vdwg.mxu0
    %1280 = vmatprep.subr.bf16.mxu0 %v140
    %1281 = vmatpush1.bf16.msra.mxu0 %v137
    %1282 = vmatprep.subr.bf16.mxu0 0
    %1283 = vmatpush1.bf16.msra.mxu0 0
    %1284 = vmatprep.subr.bf16.mxu0 0
    %1285 = vmatpush1.bf16.msra.mxu0 0
    %1286 = vmatprep.subr.bf16.mxu0 0
    %1287 = vmatpush1.bf16.msra.mxu0 0
    %1288 = vmatprep.subr.bf16.mxu0 0
    %1289 = vmatpush1.bf16.msra.mxu0 0
    %1290 = vmatprep.subr.bf16.mxu0 0
    %1291 = vmatpush1.bf16.msra.mxu0 0
    %1292 = vmatprep.subr.bf16.mxu0 0
    %1293 = vmatpush1.bf16.msra.mxu0 0
    %1294 = vmatprep.subr.bf16.mxu0 0
    %1295 = vmatpush1.bf16.msra.mxu0 0
    %1296 = vmatprep.subr.bf16.mxu0 0
    %1297 = vmatpush1.bf16.msra.mxu0 0
    %1298 = vmatprep.subr.bf16.mxu0 0
    %1299 = vmatpush1.bf16.msra.mxu0 0
    %1300 = vmatprep.subr.bf16.mxu0 0
    %1301 = vmatpush1.bf16.msra.mxu0 0
    %1302 = vmatprep.subr.bf16.mxu0 0
    %1303 = vmatpush1.bf16.msra.mxu0 0
    %1304 = vmatprep.subr.bf16.mxu0 0
    %1305 = vmatpush1.bf16.msra.mxu0 0
    %1306 = vmatprep.subr.bf16.mxu0 0
    %1307 = vmatpush1.bf16.msra.mxu0 0
    %1308 = vmatprep.subr.bf16.mxu0 0
    %1309 = vmatpush1.bf16.msra.mxu0 0
    %1310 = vmatprep.subr.bf16.mxu0 0
    %1311 = vmatpush1.bf16.msra.mxu0 0
    %1312 = vmatprep.mubr.bf16.mxu0 0
    %1313 = vmatmul.mubr.bf16.gmra.mrb[0].mxu0 %v1237
    %v1314 = vpop.f32.mrb[0].mxu0
    %v1315 = vadd.f32 0.0, %v1314
    %v1316 = vpop.f32.mrb[0].mxu0
    %v1317 = vadd.f32 0.0, %v1316
    %v1318 = vpop.f32.mrb[0].mxu0
    %v1319 = vpop.f32.mrb[0].mxu0
    %1320 = vdwg.mxu0
    %1321 = vmatprep.subr.bf16.mxu0 %v321
    %1322 = vmatpush1.bf16.msra.mxu0 %v320
    %1323 = vmatprep.subr.bf16.mxu0 %v325
    %1324 = vmatpush1.bf16.msra.mxu0 %v324
    %1325 = vmatprep.subr.bf16.mxu0 %v329
    %1326 = vmatpush1.bf16.msra.mxu0 %v328
    %1327 = vmatprep.subr.bf16.mxu0 %v333
    %1328 = vmatpush1.bf16.msra.mxu0 %v332
    %1329 = vmatprep.subr.bf16.mxu0 %v337
    %1330 = vmatpush1.bf16.msra.mxu0 %v336
    %1331 = vmatprep.subr.bf16.mxu0 %v341
    %1332 = vmatpush1.bf16.msra.mxu0 %v340
    %1333 = vmatprep.subr.bf16.mxu0 %v345
    %1334 = vmatpush1.bf16.msra.mxu0 %v344
    %1335 = vmatprep.subr.bf16.mxu0 %v349
    %1336 = vmatpush1.bf16.msra.mxu0 %v348
    %1337 = vmatprep.subr.bf16.mxu0 0
    %1338 = vmatpush1.bf16.msra.mxu0 0
    %1339 = vmatprep.subr.bf16.mxu0 0
    %1340 = vmatpush1.bf16.msra.mxu0 0
    %1341 = vmatprep.subr.bf16.mxu0 0
    %1342 = vmatpush1.bf16.msra.mxu0 0
    %1343 = vmatprep.subr.bf16.mxu0 0
    %1344 = vmatpush1.bf16.msra.mxu0 0
    %1345 = vmatprep.subr.bf16.mxu0 0
    %1346 = vmatpush1.bf16.msra.mxu0 0
    %1347 = vmatprep.subr.bf16.mxu0 0
    %1348 = vmatpush1.bf16.msra.mxu0 0
    %1349 = vmatprep.subr.bf16.mxu0 0
    %1350 = vmatpush1.bf16.msra.mxu0 0
    %1351 = vmatprep.subr.bf16.mxu0 0
    %1352 = vmatpush1.bf16.msra.mxu0 0
    %1353 = vmatprep.mubr.bf16.mxu0 0
    %1354 = vmatmul.mubr.bf16.gmra.mrb[0].mxu0 %v1235
    %v1355 = vpop.f32.mrb[0].mxu0
    %v1356 = vadd.f32 %v1274, %v1355
    %v1357 = vpop.f32.mrb[0].mxu0
    %v1358 = vadd.f32 %v1276, %v1357
    %v1359 = vpop.f32.mrb[0].mxu0
    %v1360 = vpop.f32.mrb[0].mxu0
    %1361 = vdwg.mxu0
    %1362 = vmatprep.subr.bf16.mxu0 %v323
    %1363 = vmatpush1.bf16.msra.mxu0 %v322
    %1364 = vmatprep.subr.bf16.mxu0 %v327
    %1365 = vmatpush1.bf16.msra.mxu0 %v326
    %1366 = vmatprep.subr.bf16.mxu0 %v331
    %1367 = vmatpush1.bf16.msra.mxu0 %v330
    %1368 = vmatprep.subr.bf16.mxu0 %v335
    %1369 = vmatpush1.bf16.msra.mxu0 %v334
    %1370 = vmatprep.subr.bf16.mxu0 %v339
    %1371 = vmatpush1.bf16.msra.mxu0 %v338
    %1372 = vmatprep.subr.bf16.mxu0 %v343
    %1373 = vmatpush1.bf16.msra.mxu0 %v342
    %1374 = vmatprep.subr.bf16.mxu0 %v347
    %1375 = vmatpush1.bf16.msra.mxu0 %v346
    %1376 = vmatprep.subr.bf16.mxu0 %v351
    %1377 = vmatpush1.bf16.msra.mxu0 %v350
    %1378 = vmatprep.subr.bf16.mxu0 0
    %1379 = vmatpush1.bf16.msra.mxu0 0
    %1380 = vmatprep.subr.bf16.mxu0 0
    %1381 = vmatpush1.bf16.msra.mxu0 0
    %1382 = vmatprep.subr.bf16.mxu0 0
    %1383 = vmatpush1.bf16.msra.mxu0 0
    %1384 = vmatprep.subr.bf16.mxu0 0
    %1385 = vmatpush1.bf16.msra.mxu0 0
    %1386 = vmatprep.subr.bf16.mxu0 0
    %1387 = vmatpush1.bf16.msra.mxu0 0
    %1388 = vmatprep.subr.bf16.mxu0 0
    %1389 = vmatpush1.bf16.msra.mxu0 0
    %1390 = vmatprep.subr.bf16.mxu0 0
    %1391 = vmatpush1.bf16.msra.mxu0 0
    %1392 = vmatprep.subr.bf16.mxu0 0
    %1393 = vmatpush1.bf16.msra.mxu0 0
    %1394 = vmatprep.mubr.bf16.mxu0 0
    %1395 = vmatmul.mubr.bf16.gmra.mrb[0].mxu0 %v1235
    %v1396 = vpop.f32.mrb[0].mxu0
    %v1397 = vadd.f32 %v1315, %v1396
    %v1398 = vpop.f32.mrb[0].mxu0
    %v1399 = vadd.f32 %v1317, %v1398
    %v1400 = vpop.f32.mrb[0].mxu0
    %v1401 = vpop.f32.mrb[0].mxu0
    %1402 = vdwg.mxu0
    %v1403 = vmul.f32 %v1356, 0.5
    %v1404 = vtanh.pop %v1403
    %v1405 = vmul.f32 %v1404, 0.5
    %v1406 = vadd.f32 %v1405, 0.5
    %v1407 = vmul.f32 %v1358, 0.5
    %v1408 = vtanh.pop %v1407
    %v1409 = vmul.f32 %v1408, 0.5
    %v1410 = vadd.f32 %v1409, 0.5
    %v1411 = vtanh.pop %v1397
    %v1412 = vmul.f32 %v1399, 0.5
    %v1413 = vtanh.pop %v1412
    %v1414 = vmul.f32 %v1413, 0.5
    %v1415 = vadd.f32 %v1414, 0.5
    %v1416 = vmul.f32 %v1410, %v1040
    %v1417 = vmul.f32 %v1406, %v1411
    %v1418 = vadd.f32 %v1416, %v1417
    %v1419 = vtanh.pop %v1418
    %v1420 = vmul.f32 %v1415, %v1419
    %s1421 = scalar_lea.vmem %s0, 48
    %v1422 = vld [vmem:[%s1421] sm:$0xff]
    %v1423 = vpack.c.bf16 %v1422, %v1422
    %v1424 = vpack.c.bf16 %v1231, %v1231
    %v1426 = vsel %vm125, %v1423, 0
    %1428 = vmatprep.subr.bf16.mxu0 %v504
    %1429 = vmatpush1.bf16.msra.mxu0 %v501
    %1430 = vmatprep.subr.bf16.mxu0 0
    %1431 = vmatpush1.bf16.msra.mxu0 0
    %1432 = vmatprep.subr.bf16.mxu0 0
    %1433 = vmatpush1.bf16.msra.mxu0 0
    %1434 = vmatprep.subr.bf16.mxu0 0
    %1435 = vmatpush1.bf16.msra.mxu0 0
    %1436 = vmatprep.subr.bf16.mxu0 0
    %1437 = vmatpush1.bf16.msra.mxu0 0
    %1438 = vmatprep.subr.bf16.mxu0 0
    %1439 = vmatpush1.bf16.msra.mxu0 0
    %1440 = vmatprep.subr.bf16.mxu0 0
    %1441 = vmatpush1.bf16.msra.mxu0 0
    %1442 = vmatprep.subr.bf16.mxu0 0
    %1443 = vmatpush1.bf16.msra.mxu0 0
    %1444 = vmatprep.subr.bf16.mxu0 0
    %1445 = vmatpush1.bf16.msra.mxu0 0
    %1446 = vmatprep.subr.bf16.mxu0 0
    %1447 = vmatpush1.bf16.msra.mxu0 0
    %1448 = vmatprep.subr.bf16.mxu0 0
    %1449 = vmatpush1.bf16.msra.mxu0 0
    %1450 = vmatprep.subr.bf16.mxu0 0
    %1451 = vmatpush1.bf16.msra.mxu0 0
    %1452 = vmatprep.subr.bf16.mxu0 0
    %1453 = vmatpush1.bf16.msra.mxu0 0
    %1454 = vmatprep.subr.bf16.mxu0 0
    %1455 = vmatpush1.bf16.msra.mxu0 0
    %1456 = vmatprep.subr.bf16.mxu0 0
    %1457 = vmatpush1.bf16.msra.mxu0 0
    %1458 = vmatprep.subr.bf16.mxu0 0
    %1459 = vmatpush1.bf16.msra.mxu0 0
    %1460 = vmatprep.mubr.bf16.mxu0 0
    %1461 = vmatmul.mubr.bf16.gmra.mrb[0].mxu0 %v1426
    %v1462 = vpop.f32.mrb[0].mxu0
    %v1463 = vadd.f32 0.0, %v1462
    %v1464 = vpop.f32.mrb[0].mxu0
    %v1465 = vadd.f32 0.0, %v1464
    %v1466 = vpop.f32.mrb[0].mxu0
    %v1467 = vpop.f32.mrb[0].mxu0
    %1468 = vdwg.mxu0
    %1469 = vmatprep.subr.bf16.mxu0 %v510
    %1470 = vmatpush1.bf16.msra.mxu0 %v507
    %1471 = vmatprep.subr.bf16.mxu0 0
    %1472 = vmatpush1.bf16.msra.mxu0 0
    %1473 = vmatprep.subr.bf16.mxu0 0
    %1474 = vmatpush1.bf16.msra.mxu0 0
    %1475 = vmatprep.subr.bf16.mxu0 0
    %1476 = vmatpush1.bf16.msra.mxu0 0
    %1477 = vmatprep.subr.bf16.mxu0 0
    %1478 = vmatpush1.bf16.msra.mxu0 0
    %1479 = vmatprep.subr.bf16.mxu0 0
    %1480 = vmatpush1.bf16.msra.mxu0 0
    %1481 = vmatprep.subr.bf16.mxu0 0
    %1482 = vmatpush1.bf16.msra.mxu0 0
    %1483 = vmatprep.subr.bf16.mxu0 0
    %1484 = vmatpush1.bf16.msra.mxu0 0
    %1485 = vmatprep.subr.bf16.mxu0 0
    %1486 = vmatpush1.bf16.msra.mxu0 0
    %1487 = vmatprep.subr.bf16.mxu0 0
    %1488 = vmatpush1.bf16.msra.mxu0 0
    %1489 = vmatprep.subr.bf16.mxu0 0
    %1490 = vmatpush1.bf16.msra.mxu0 0
    %1491 = vmatprep.subr.bf16.mxu0 0
    %1492 = vmatpush1.bf16.msra.mxu0 0
    %1493 = vmatprep.subr.bf16.mxu0 0
    %1494 = vmatpush1.bf16.msra.mxu0 0
    %1495 = vmatprep.subr.bf16.mxu0 0
    %1496 = vmatpush1.bf16.msra.mxu0 0
    %1497 = vmatprep.subr.bf16.mxu0 0
    %1498 = vmatpush1.bf16.msra.mxu0 0
    %1499 = vmatprep.subr.bf16.mxu0 0
    %1500 = vmatpush1.bf16.msra.mxu0 0
    %1501 = vmatprep.mubr.bf16.mxu0 0
    %1502 = vmatmul.mubr.bf16.gmra.mrb[0].mxu0 %v1426
    %v1503 = vpop.f32.mrb[0].mxu0
    %v1504 = vadd.f32 0.0, %v1503
    %v1505 = vpop.f32.mrb[0].mxu0
    %v1506 = vadd.f32 0.0, %v1505
    %v1507 = vpop.f32.mrb[0].mxu0
    %v1508 = vpop.f32.mrb[0].mxu0
    %1509 = vdwg.mxu0
    %1510 = vmatprep.subr.bf16.mxu0 %v691
    %1511 = vmatpush1.bf16.msra.mxu0 %v690
    %1512 = vmatprep.subr.bf16.mxu0 %v695
    %1513 = vmatpush1.bf16.msra.mxu0 %v694
    %1514 = vmatprep.subr.bf16.mxu0 %v699
    %1515 = vmatpush1.bf16.msra.mxu0 %v698
    %1516 = vmatprep.subr.bf16.mxu0 %v703
    %1517 = vmatpush1.bf16.msra.mxu0 %v702
    %1518 = vmatprep.subr.bf16.mxu0 %v707
    %1519 = vmatpush1.bf16.msra.mxu0 %v706
    %1520 = vmatprep.subr.bf16.mxu0 %v711
    %1521 = vmatpush1.bf16.msra.mxu0 %v710
    %1522 = vmatprep.subr.bf16.mxu0 %v715
    %1523 = vmatpush1.bf16.msra.mxu0 %v714
    %1524 = vmatprep.subr.bf16.mxu0 %v719
    %1525 = vmatpush1.bf16.msra.mxu0 %v718
    %1526 = vmatprep.subr.bf16.mxu0 0
    %1527 = vmatpush1.bf16.msra.mxu0 0
    %1528 = vmatprep.subr.bf16.mxu0 0
    %1529 = vmatpush1.bf16.msra.mxu0 0
    %1530 = vmatprep.subr.bf16.mxu0 0
    %1531 = vmatpush1.bf16.msra.mxu0 0
    %1532 = vmatprep.subr.bf16.mxu0 0
    %1533 = vmatpush1.bf16.msra.mxu0 0
    %1534 = vmatprep.subr.bf16.mxu0 0
    %1535 = vmatpush1.bf16.msra.mxu0 0
    %1536 = vmatprep.subr.bf16.mxu0 0
    %1537 = vmatpush1.bf16.msra.mxu0 0
    %1538 = vmatprep.subr.bf16.mxu0 0
    %1539 = vmatpush1.bf16.msra.mxu0 0
    %1540 = vmatprep.subr.bf16.mxu0 0
    %1541 = vmatpush1.bf16.msra.mxu0 0
    %1542 = vmatprep.mubr.bf16.mxu0 0
    %1543 = vmatmul.mubr.bf16.gmra.mrb[0].mxu0 %v1424
    %v1544 = vpop.f32.mrb[0].mxu0
    %v1545 = vadd.f32 %v1463, %v1544
    %v1546 = vpop.f32.mrb[0].mxu0
    %v1547 = vadd.f32 %v1465, %v1546
    %v1548 = vpop.f32.mrb[0].mxu0
    %v1549 = vpop.f32.mrb[0].mxu0
    %1550 = vdwg.mxu0
    %1551 = vmatprep.subr.bf16.mxu0 %v693
    %1552 = vmatpush1.bf16.msra.mxu0 %v692
    %1553 = vmatprep.subr.bf16.mxu0 %v697
    %1554 = vmatpush1.bf16.msra.mxu0 %v696
    %1555 = vmatprep.subr.bf16.mxu0 %v701
    %1556 = vmatpush1.bf16.msra.mxu0 %v700
    %1557 = vmatprep.subr.bf16.mxu0 %v705
    %1558 = vmatpush1.bf16.msra.mxu0 %v704
    %1559 = vmatprep.subr.bf16.mxu0 %v709
    %1560 = vmatpush1.bf16.msra.mxu0 %v708
    %1561 = vmatprep.subr.bf16.mxu0 %v713
    %1562 = vmatpush1.bf16.msra.mxu0 %v712
    %1563 = vmatprep.subr.bf16.mxu0 %v717
    %1564 = vmatpush1.bf16.msra.mxu0 %v716
    %1565 = vmatprep.subr.bf16.mxu0 %v721
    %1566 = vmatpush1.bf16.msra.mxu0 %v720
    %1567 = vmatprep.subr.bf16.mxu0 0
    %1568 = vmatpush1.bf16.msra.mxu0 0
    %1569 = vmatprep.subr.bf16.mxu0 0
    %1570 = vmatpush1.bf16.msra.mxu0 0
    %1571 = vmatprep.subr.bf16.mxu0 0
    %1572 = vmatpush1.bf16.msra.mxu0 0
    %1573 = vmatprep.subr.bf16.mxu0 0
    %1574 = vmatpush1.bf16.msra.mxu0 0
    %1575 = vmatprep.subr.bf16.mxu0 0
    %1576 = vmatpush1.bf16.msra.mxu0 0
    %1577 = vmatprep.subr.bf16.mxu0 0
    %1578 = vmatpush1.bf16.msra.mxu0 0
    %1579 = vmatprep.subr.bf16.mxu0 0
    %1580 = vmatpush1.bf16.msra.mxu0 0
    %1581 = vmatprep.subr.bf16.mxu0 0
    %1582 = vmatpush1.bf16.msra.mxu0 0
    %1583 = vmatprep.mubr.bf16.mxu0 0
    %1584 = vmatmul.mubr.bf16.gmra.mrb[0].mxu0 %v1424
    %v1585 = vpop.f32.mrb[0].mxu0
    %v1586 = vadd.f32 %v1504, %v1585
    %v1587 = vpop.f32.mrb[0].mxu0
    %v1588 = vadd.f32 %v1506, %v1587
    %v1589 = vpop.f32.mrb[0].mxu0
    %v1590 = vpop.f32.mrb[0].mxu0
    %1591 = vdwg.mxu0
    %v1592 = vmul.f32 %v1545, 0.5
    %v1593 = vtanh.pop %v1592
    %v1594 = vmul.f32 %v1593, 0.5
    %v1595 = vadd.f32 %v1594, 0.5
    %v1596 = vmul.f32 %v1547, 0.5
    %v1597 = vtanh.pop %v1596
    %v1598 = vmul.f32 %v1597, 0.5
    %v1599 = vadd.f32 %v1598, 0.5
    %v1600 = vtanh.pop %v1586
    %v1601 = vmul.f32 %v1588, 0.5
    %v1602 = vtanh.pop %v1601
    %v1603 = vmul.f32 %v1602, 0.5
    %v1604 = vadd.f32 %v1603, 0.5
    %v1605 = vmul.f32 %v1599, %v1229
    %v1606 = vmul.f32 %v1595, %v1600
    %v1607 = vadd.f32 %v1605, %v1606
    %v1608 = vtanh.pop %v1607
    %v1609 = vmul.f32 %v1604, %v1608
    %s1610 = scalar_lea.vmem %s0, 24
    %v1611 = vld [vmem:[%s1610] sm:$0xff]
    %v1612 = vpack.c.bf16 %v1611, %v1611
    %v1613 = vpack.c.bf16 %v1420, %v1420
    %v1615 = vsel %vm125, %v1612, 0
    %1617 = vmatprep.subr.bf16.mxu0 %v134
    %1618 = vmatpush1.bf16.msra.mxu0 %v131
    %1619 = vmatprep.subr.bf16.mxu0 0
    %1620 = vmatpush1.bf16.msra.mxu0 0
    %1621 = vmatprep.subr.bf16.mxu0 0
    %1622 = vmatpush1.bf16.msra.mxu0 0
    %1623 = vmatprep.subr.bf16.mxu0 0
    %1624 = vmatpush1.bf16.msra.mxu0 0
    %1625 = vmatprep.subr.bf16.mxu0 0
    %1626 = vmatpush1.bf16.msra.mxu0 0
    %1627 = vmatprep.subr.bf16.mxu0 0
    %1628 = vmatpush1.bf16.msra.mxu0 0
    %1629 = vmatprep.subr.bf16.mxu0 0
    %1630 = vmatpush1.bf16.msra.mxu0 0
    %1631 = vmatprep.subr.bf16.mxu0 0
    %1632 = vmatpush1.bf16.msra.mxu0 0
    %1633 = vmatprep.subr.bf16.mxu0 0
    %1634 = vmatpush1.bf16.msra.mxu0 0
    %1635 = vmatprep.subr.bf16.mxu0 0
    %1636 = vmatpush1.bf16.msra.mxu0 0
    %1637 = vmatprep.subr.bf16.mxu0 0
    %1638 = vmatpush1.bf16.msra.mxu0 0
    %1639 = vmatprep.subr.bf16.mxu0 0
    %1640 = vmatpush1.bf16.msra.mxu0 0
    %1641 = vmatprep.subr.bf16.mxu0 0
    %1642 = vmatpush1.bf16.msra.mxu0 0
    %1643 = vmatprep.subr.bf16.mxu0 0
    %1644 = vmatpush1.bf16.msra.mxu0 0
    %1645 = vmatprep.subr.bf16.mxu0 0
    %1646 = vmatpush1.bf16.msra.mxu0 0
    %1647 = vmatprep.subr.bf16.mxu0 0
    %1648 = vmatpush1.bf16.msra.mxu0 0
    %1649 = vmatprep.mubr.bf16.mxu0 0
    %1650 = vmatmul.mubr.bf16.gmra.mrb[0].mxu0 %v1615
    %v1651 = vpop.f32.mrb[0].mxu0
    %v1652 = vadd.f32 0.0, %v1651
    %v1653 = vpop.f32.mrb[0].mxu0
    %v1654 = vadd.f32 0.0, %v1653
    %v1655 = vpop.f32.mrb[0].mxu0
    %v1656 = vpop.f32.mrb[0].mxu0
    %1657 = vdwg.mxu0
    %1658 = vmatprep.subr.bf16.mxu0 %v140
    %1659 = vmatpush1.bf16.msra.mxu0 %v137
    %1660 = vmatprep.subr.bf16.mxu0 0
    %1661 = vmatpush1.bf16.msra.mxu0 0
    %1662 = vmatprep.subr.bf16.mxu0 0
    %1663 = vmatpush1.bf16.msra.mxu0 0
    %1664 = vmatprep.subr.bf16.mxu0 0
    %1665 = vmatpush1.bf16.msra.mxu0 0
    %1666 = vmatprep.subr.bf16.mxu0 0
    %1667 = vmatpush1.bf16.msra.mxu0 0
    %1668 = vmatprep.subr.bf16.mxu0 0
    %1669 = vmatpush1.bf16.msra.mxu0 0
    %1670 = vmatprep.subr.bf16.mxu0 0
    %1671 = vmatpush1.bf16.msra.mxu0 0
    %1672 = vmatprep.subr.bf16.mxu0 0
    %1673 = vmatpush1.bf16.msra.mxu0 0
    %1674 = vmatprep.subr.bf16.mxu0 0
    %1675 = vmatpush1.bf16.msra.mxu0 0
    %1676 = vmatprep.subr.bf16.mxu0 0
    %1677 = vmatpush1.bf16.msra.mxu0 0
    %1678 = vmatprep.subr.bf16.mxu0 0
    %1679 = vmatpush1.bf16.msra.mxu0 0
    %1680 = vmatprep.subr.bf16.mxu0 0
    %1681 = vmatpush1.bf16.msra.mxu0 0
    %1682 = vmatprep.subr.bf16.mxu0 0
    %1683 = vmatpush1.bf16.msra.mxu0 0
    %1684 = vmatprep.subr.bf16.mxu0 0
    %1685 = vmatpush1.bf16.msra.mxu0 0
    %1686 = vmatprep.subr.bf16.mxu0 0
    %1687 = vmatpush1.bf16.msra.mxu0 0
    %1688 = vmatprep.subr.bf16.mxu0 0
    %1689 = vmatpush1.bf16.msra.mxu0 0
    %1690 = vmatprep.mubr.bf16.mxu0 0
    %1691 = vmatmul.mubr.bf16.gmra.mrb[0].mxu0 %v1615
    %v1692 = vpop.f32.mrb[0].mxu0
    %v1693 = vadd.f32 0.0, %v1692
    %v1694 = vpop.f32.mrb[0].mxu0
    %v1695 = vadd.f32 0.0, %v1694
    %v1696 = vpop.f32.mrb[0].mxu0
    %v1697 = vpop.f32.mrb[0].mxu0
    %1698 = vdwg.mxu0
    %1699 = vmatprep.subr.bf16.mxu0 %v321
    %1700 = vmatpush1.bf16.msra.mxu0 %v320
    %1701 = vmatprep.subr.bf16.mxu0 %v325
    %1702 = vmatpush1.bf16.msra.mxu0 %v324
    %1703 = vmatprep.subr.bf16.mxu0 %v329
    %1704 = vmatpush1.bf16.msra.mxu0 %v328
    %1705 = vmatprep.subr.bf16.mxu0 %v333
    %1706 = vmatpush1.bf16.msra.mxu0 %v332
    %1707 = vmatprep.subr.bf16.mxu0 %v337
    %1708 = vmatpush1.bf16.msra.mxu0 %v336
    %1709 = vmatprep.subr.bf16.mxu0 %v341
    %1710 = vmatpush1.bf16.msra.mxu0 %v340
    %1711 = vmatprep.subr.bf16.mxu0 %v345
    %1712 = vmatpush1.bf16.msra.mxu0 %v344
    %1713 = vmatprep.subr.bf16.mxu0 %v349
    %1714 = vmatpush1.bf16.msra.mxu0 %v348
    %1715 = vmatprep.subr.bf16.mxu0 0
    %1716 = vmatpush1.bf16.msra.mxu0 0
    %1717 = vmatprep.subr.bf16.mxu0 0
    %1718 = vmatpush1.bf16.msra.mxu0 0
    %1719 = vmatprep.subr.bf16.mxu0 0
    %1720 = vmatpush1.bf16.msra.mxu0 0
    %1721 = vmatprep.subr.bf16.mxu0 0
    %1722 = vmatpush1.bf16.msra.mxu0 0
    %1723 = vmatprep.subr.bf16.mxu0 0
    %1724 = vmatpush1.bf16.msra.mxu0 0
    %1725 = vmatprep.subr.bf16.mxu0 0
    %1726 = vmatpush1.bf16.msra.mxu0 0
    %1727 = vmatprep.subr.bf16.mxu0 0
    %1728 = vmatpush1.bf16.msra.mxu0 0
    %1729 = vmatprep.subr.bf16.mxu0 0
    %1730 = vmatpush1.bf16.msra.mxu0 0
    %1731 = vmatprep.mubr.bf16.mxu0 0
    %1732 = vmatmul.mubr.bf16.gmra.mrb[0].mxu0 %v1613
    %v1733 = vpop.f32.mrb[0].mxu0
    %v1734 = vadd.f32 %v1652, %v1733
    %v1735 = vpop.f32.mrb[0].mxu0
    %v1736 = vadd.f32 %v1654, %v1735
    %v1737 = vpop.f32.mrb[0].mxu0
    %v1738 = vpop.f32.mrb[0].mxu0
    %1739 = vdwg.mxu0
    %1740 = vmatprep.subr.bf16.mxu0 %v323
    %1741 = vmatpush1.bf16.msra.mxu0 %v322
    %1742 = vmatprep.subr.bf16.mxu0 %v327
    %1743 = vmatpush1.bf16.msra.mxu0 %v326
    %1744 = vmatprep.subr.bf16.mxu0 %v331
    %1745 = vmatpush1.bf16.msra.mxu0 %v330
    %1746 = vmatprep.subr.bf16.mxu0 %v335
    %1747 = vmatpush1.bf16.msra.mxu0 %v334
    %1748 = vmatprep.subr.bf16.mxu0 %v339
    %1749 = vmatpush1.bf16.msra.mxu0 %v338
    %1750 = vmatprep.subr.bf16.mxu0 %v343
    %1751 = vmatpush1.bf16.msra.mxu0 %v342
    %1752 = vmatprep.subr.bf16.mxu0 %v347
    %1753 = vmatpush1.bf16.msra.mxu0 %v346
    %1754 = vmatprep.subr.bf16.mxu0 %v351
    %1755 = vmatpush1.bf16.msra.mxu0 %v350
    %1756 = vmatprep.subr.bf16.mxu0 0
    %1757 = vmatpush1.bf16.msra.mxu0 0
    %1758 = vmatprep.subr.bf16.mxu0 0
    %1759 = vmatpush1.bf16.msra.mxu0 0
    %1760 = vmatprep.subr.bf16.mxu0 0
    %1761 = vmatpush1.bf16.msra.mxu0 0
    %1762 = vmatprep.subr.bf16.mxu0 0
    %1763 = vmatpush1.bf16.msra.mxu0 0
    %1764 = vmatprep.subr.bf16.mxu0 0
    %1765 = vmatpush1.bf16.msra.mxu0 0
    %1766 = vmatprep.subr.bf16.mxu0 0
    %1767 = vmatpush1.bf16.msra.mxu0 0
    %1768 = vmatprep.subr.bf16.mxu0 0
    %1769 = vmatpush1.bf16.msra.mxu0 0
    %1770 = vmatprep.subr.bf16.mxu0 0
    %1771 = vmatpush1.bf16.msra.mxu0 0
    %1772 = vmatprep.mubr.bf16.mxu0 0
    %1773 = vmatmul.mubr.bf16.gmra.mrb[0].mxu0 %v1613
    %v1774 = vpop.f32.mrb[0].mxu0
    %v1775 = vadd.f32 %v1693, %v1774
    %v1776 = vpop.f32.mrb[0].mxu0
    %v1777 = vadd.f32 %v1695, %v1776
    %v1778 = vpop.f32.mrb[0].mxu0
    %v1779 = vpop.f32.mrb[0].mxu0
    %1780 = vdwg.mxu0
    %v1781 = vmul.f32 %v1734, 0.5
    %v1782 = vtanh.pop %v1781
    %v1783 = vmul.f32 %v1782, 0.5
    %v1784 = vadd.f32 %v1783, 0.5
    %v1785 = vmul.f32 %v1736, 0.5
    %v1786 = vtanh.pop %v1785
    %v1787 = vmul.f32 %v1786, 0.5
    %v1788 = vadd.f32 %v1787, 0.5
    %v1789 = vtanh.pop %v1775
    %v1790 = vmul.f32 %v1777, 0.5
    %v1791 = vtanh.pop %v1790
    %v1792 = vmul.f32 %v1791, 0.5
    %v1793 = vadd.f32 %v1792, 0.5
    %v1794 = vmul.f32 %v1788, %v1418
    %v1795 = vmul.f32 %v1784, %v1789
    %v1796 = vadd.f32 %v1794, %v1795
    %v1797 = vtanh.pop %v1796
    %v1798 = vmul.f32 %v1793, %v1797
    %s1799 = scalar_lea.vmem %s0, 40
    %v1800 = vld [vmem:[%s1799] sm:$0xff]
    %v1801 = vpack.c.bf16 %v1800, %v1800
    %v1802 = vpack.c.bf16 %v1609, %v1609
    %v1804 = vsel %vm125, %v1801, 0
    %1806 = vmatprep.subr.bf16.mxu0 %v504
    %1807 = vmatpush1.bf16.msra.mxu0 %v501
    %1808 = vmatprep.subr.bf16.mxu0 0
    %1809 = vmatpush1.bf16.msra.mxu0 0
    %1810 = vmatprep.subr.bf16.mxu0 0
    %1811 = vmatpush1.bf16.msra.mxu0 0
    %1812 = vmatprep.subr.bf16.mxu0 0
    %1813 = vmatpush1.bf16.msra.mxu0 0
    %1814 = vmatprep.subr.bf16.mxu0 0
    %1815 = vmatpush1.bf16.msra.mxu0 0
    %1816 = vmatprep.subr.bf16.mxu0 0
    %1817 = vmatpush1.bf16.msra.mxu0 0
    %1818 = vmatprep.subr.bf16.mxu0 0
    %1819 = vmatpush1.bf16.msra.mxu0 0
    %1820 = vmatprep.subr.bf16.mxu0 0
    %1821 = vmatpush1.bf16.msra.mxu0 0
    %1822 = vmatprep.subr.bf16.mxu0 0
    %1823 = vmatpush1.bf16.msra.mxu0 0
    %1824 = vmatprep.subr.bf16.mxu0 0
    %1825 = vmatpush1.bf16.msra.mxu0 0
    %1826 = vmatprep.subr.bf16.mxu0 0
    %1827 = vmatpush1.bf16.msra.mxu0 0
    %1828 = vmatprep.subr.bf16.mxu0 0
    %1829 = vmatpush1.bf16.msra.mxu0 0
    %1830 = vmatprep.subr.bf16.mxu0 0
    %1831 = vmatpush1.bf16.msra.mxu0 0
    %1832 = vmatprep.subr.bf16.mxu0 0
    %1833 = vmatpush1.bf16.msra.mxu0 0
    %1834 = vmatprep.subr.bf16.mxu0 0
    %1835 = vmatpush1.bf16.msra.mxu0 0
    %1836 = vmatprep.subr.bf16.mxu0 0
    %1837 = vmatpush1.bf16.msra.mxu0 0
    %1838 = vmatprep.mubr.bf16.mxu0 0
    %1839 = vmatmul.mubr.bf16.gmra.mrb[0].mxu0 %v1804
    %v1840 = vpop.f32.mrb[0].mxu0
    %v1841 = vadd.f32 0.0, %v1840
    %v1842 = vpop.f32.mrb[0].mxu0
    %v1843 = vadd.f32 0.0, %v1842
    %v1844 = vpop.f32.mrb[0].mxu0
    %v1845 = vpop.f32.mrb[0].mxu0
    %1846 = vdwg.mxu0
    %1847 = vmatprep.subr.bf16.mxu0 %v510
    %1848 = vmatpush1.bf16.msra.mxu0 %v507
    %1849 = vmatprep.subr.bf16.mxu0 0
    %1850 = vmatpush1.bf16.msra.mxu0 0
    %1851 = vmatprep.subr.bf16.mxu0 0
    %1852 = vmatpush1.bf16.msra.mxu0 0
    %1853 = vmatprep.subr.bf16.mxu0 0
    %1854 = vmatpush1.bf16.msra.mxu0 0
    %1855 = vmatprep.subr.bf16.mxu0 0
    %1856 = vmatpush1.bf16.msra.mxu0 0
    %1857 = vmatprep.subr.bf16.mxu0 0
    %1858 = vmatpush1.bf16.msra.mxu0 0
    %1859 = vmatprep.subr.bf16.mxu0 0
    %1860 = vmatpush1.bf16.msra.mxu0 0
    %1861 = vmatprep.subr.bf16.mxu0 0
    %1862 = vmatpush1.bf16.msra.mxu0 0
    %1863 = vmatprep.subr.bf16.mxu0 0
    %1864 = vmatpush1.bf16.msra.mxu0 0
    %1865 = vmatprep.subr.bf16.mxu0 0
    %1866 = vmatpush1.bf16.msra.mxu0 0
    %1867 = vmatprep.subr.bf16.mxu0 0
    %1868 = vmatpush1.bf16.msra.mxu0 0
    %1869 = vmatprep.subr.bf16.mxu0 0
    %1870 = vmatpush1.bf16.msra.mxu0 0
    %1871 = vmatprep.subr.bf16.mxu0 0
    %1872 = vmatpush1.bf16.msra.mxu0 0
    %1873 = vmatprep.subr.bf16.mxu0 0
    %1874 = vmatpush1.bf16.msra.mxu0 0
    %1875 = vmatprep.subr.bf16.mxu0 0
    %1876 = vmatpush1.bf16.msra.mxu0 0
    %1877 = vmatprep.subr.bf16.mxu0 0
    %1878 = vmatpush1.bf16.msra.mxu0 0
    %1879 = vmatprep.mubr.bf16.mxu0 0
    %1880 = vmatmul.mubr.bf16.gmra.mrb[0].mxu0 %v1804
    %v1881 = vpop.f32.mrb[0].mxu0
    %v1882 = vadd.f32 0.0, %v1881
    %v1883 = vpop.f32.mrb[0].mxu0
    %v1884 = vadd.f32 0.0, %v1883
    %v1885 = vpop.f32.mrb[0].mxu0
    %v1886 = vpop.f32.mrb[0].mxu0
    %1887 = vdwg.mxu0
    %1888 = vmatprep.subr.bf16.mxu0 %v691
    %1889 = vmatpush1.bf16.msra.mxu0 %v690
    %1890 = vmatprep.subr.bf16.mxu0 %v695
    %1891 = vmatpush1.bf16.msra.mxu0 %v694
    %1892 = vmatprep.subr.bf16.mxu0 %v699
    %1893 = vmatpush1.bf16.msra.mxu0 %v698
    %1894 = vmatprep.subr.bf16.mxu0 %v703
    %1895 = vmatpush1.bf16.msra.mxu0 %v702
    %1896 = vmatprep.subr.bf16.mxu0 %v707
    %1897 = vmatpush1.bf16.msra.mxu0 %v706
    %1898 = vmatprep.subr.bf16.mxu0 %v711
    %1899 = vmatpush1.bf16.msra.mxu0 %v710
    %1900 = vmatprep.subr.bf16.mxu0 %v715
    %1901 = vmatpush1.bf16.msra.mxu0 %v714
    %1902 = vmatprep.subr.bf16.mxu0 %v719
    %1903 = vmatpush1.bf16.msra.mxu0 %v718
    %1904 = vmatprep.subr.bf16.mxu0 0
    %1905 = vmatpush1.bf16.msra.mxu0 0
    %1906 = vmatprep.subr.bf16.mxu0 0
    %1907 = vmatpush1.bf16.msra.mxu0 0
    %1908 = vmatprep.subr.bf16.mxu0 0
    %1909 = vmatpush1.bf16.msra.mxu0 0
    %1910 = vmatprep.subr.bf16.mxu0 0
    %1911 = vmatpush1.bf16.msra.mxu0 0
    %1912 = vmatprep.subr.bf16.mxu0 0
    %1913 = vmatpush1.bf16.msra.mxu0 0
    %1914 = vmatprep.subr.bf16.mxu0 0
    %1915 = vmatpush1.bf16.msra.mxu0 0
    %1916 = vmatprep.subr.bf16.mxu0 0
    %1917 = vmatpush1.bf16.msra.mxu0 0
    %1918 = vmatprep.subr.bf16.mxu0 0
    %1919 = vmatpush1.bf16.msra.mxu0 0
    %1920 = vmatprep.mubr.bf16.mxu0 0
    %1921 = vmatmul.mubr.bf16.gmra.mrb[0].mxu0 %v1802
    %v1922 = vpop.f32.mrb[0].mxu0
    %v1923 = vadd.f32 %v1841, %v1922
    %v1924 = vpop.f32.mrb[0].mxu0
    %v1925 = vadd.f32 %v1843, %v1924
    %v1926 = vpop.f32.mrb[0].mxu0
    %v1927 = vpop.f32.mrb[0].mxu0
    %1928 = vdwg.mxu0
    %1929 = vmatprep.subr.bf16.mxu0 %v693
    %1930 = vmatpush1.bf16.msra.mxu0 %v692
    %1931 = vmatprep.subr.bf16.mxu0 %v697
    %1932 = vmatpush1.bf16.msra.mxu0 %v696
    %1933 = vmatprep.subr.bf16.mxu0 %v701
    %1934 = vmatpush1.bf16.msra.mxu0 %v700
    %1935 = vmatprep.subr.bf16.mxu0 %v705
    %1936 = vmatpush1.bf16.msra.mxu0 %v704
    %1937 = vmatprep.subr.bf16.mxu0 %v709
    %1938 = vmatpush1.bf16.msra.mxu0 %v708
    %1939 = vmatprep.subr.bf16.mxu0 %v713
    %1940 = vmatpush1.bf16.msra.mxu0 %v712
    %1941 = vmatprep.subr.bf16.mxu0 %v717
    %1942 = vmatpush1.bf16.msra.mxu0 %v716
    %1943 = vmatprep.subr.bf16.mxu0 %v721
    %1944 = vmatpush1.bf16.msra.mxu0 %v720
    %1945 = vmatprep.subr.bf16.mxu0 0
    %1946 = vmatpush1.bf16.msra.mxu0 0
    %1947 = vmatprep.subr.bf16.mxu0 0
    %1948 = vmatpush1.bf16.msra.mxu0 0
    %1949 = vmatprep.subr.bf16.mxu0 0
    %1950 = vmatpush1.bf16.msra.mxu0 0
    %1951 = vmatprep.subr.bf16.mxu0 0
    %1952 = vmatpush1.bf16.msra.mxu0 0
    %1953 = vmatprep.subr.bf16.mxu0 0
    %1954 = vmatpush1.bf16.msra.mxu0 0
    %1955 = vmatprep.subr.bf16.mxu0 0
    %1956 = vmatpush1.bf16.msra.mxu0 0
    %1957 = vmatprep.subr.bf16.mxu0 0
    %1958 = vmatpush1.bf16.msra.mxu0 0
    %1959 = vmatprep.subr.bf16.mxu0 0
    %1960 = vmatpush1.bf16.msra.mxu0 0
    %1961 = vmatprep.mubr.bf16.mxu0 0
    %1962 = vmatmul.mubr.bf16.gmra.mrb[0].mxu0 %v1802
    %v1963 = vpop.f32.mrb[0].mxu0
    %v1964 = vadd.f32 %v1882, %v1963
    %v1965 = vpop.f32.mrb[0].mxu0
    %v1966 = vadd.f32 %v1884, %v1965
    %v1967 = vpop.f32.mrb[0].mxu0
    %v1968 = vpop.f32.mrb[0].mxu0
    %1969 = vdwg.mxu0
    %v1970 = vmul.f32 %v1923, 0.5
    %v1971 = vtanh.pop %v1970
    %v1972 = vmul.f32 %v1971, 0.5
    %v1973 = vadd.f32 %v1972, 0.5
    %v1974 = vmul.f32 %v1925, 0.5
    %v1975 = vtanh.pop %v1974
    %v1976 = vmul.f32 %v1975, 0.5
    %v1977 = vadd.f32 %v1976, 0.5
    %v1978 = vtanh.pop %v1964
    %v1979 = vmul.f32 %v1966, 0.5
    %v1980 = vtanh.pop %v1979
    %v1981 = vmul.f32 %v1980, 0.5
    %v1982 = vadd.f32 %v1981, 0.5
    %v1983 = vmul.f32 %v1977, %v1607
    %v1984 = vmul.f32 %v1973, %v1978
    %v1985 = vadd.f32 %v1983, %v1984
    %v1986 = vtanh.pop %v1985
    %v1987 = vmul.f32 %v1982, %v1986
    %s1988 = scalar_lea.vmem %s0, 32
    %v1989 = vld [vmem:[%s1988] sm:$0xff]
    %v1990 = vpack.c.bf16 %v1989, %v1989
    %v1991 = vpack.c.bf16 %v1798, %v1798
    %v1993 = vsel %vm125, %v1990, 0
    %1995 = vmatprep.subr.bf16.mxu0 %v134
    %1996 = vmatpush1.bf16.msra.mxu0 %v131
    %1997 = vmatprep.subr.bf16.mxu0 0
    %1998 = vmatpush1.bf16.msra.mxu0 0
    %1999 = vmatprep.subr.bf16.mxu0 0
    %2000 = vmatpush1.bf16.msra.mxu0 0
    %2001 = vmatprep.subr.bf16.mxu0 0
    %2002 = vmatpush1.bf16.msra.mxu0 0
    %2003 = vmatprep.subr.bf16.mxu0 0
    %2004 = vmatpush1.bf16.msra.mxu0 0
    %2005 = vmatprep.subr.bf16.mxu0 0
    %2006 = vmatpush1.bf16.msra.mxu0 0
    %2007 = vmatprep.subr.bf16.mxu0 0
    %2008 = vmatpush1.bf16.msra.mxu0 0
    %2009 = vmatprep.subr.bf16.mxu0 0
    %2010 = vmatpush1.bf16.msra.mxu0 0
    %2011 = vmatprep.subr.bf16.mxu0 0
    %2012 = vmatpush1.bf16.msra.mxu0 0
    %2013 = vmatprep.subr.bf16.mxu0 0
    %2014 = vmatpush1.bf16.msra.mxu0 0
    %2015 = vmatprep.subr.bf16.mxu0 0
    %2016 = vmatpush1.bf16.msra.mxu0 0
    %2017 = vmatprep.subr.bf16.mxu0 0
    %2018 = vmatpush1.bf16.msra.mxu0 0
    %2019 = vmatprep.subr.bf16.mxu0 0
    %2020 = vmatpush1.bf16.msra.mxu0 0
    %2021 = vmatprep.subr.bf16.mxu0 0
    %2022 = vmatpush1.bf16.msra.mxu0 0
    %2023 = vmatprep.subr.bf16.mxu0 0
    %2024 = vmatpush1.bf16.msra.mxu0 0
    %2025 = vmatprep.subr.bf16.mxu0 0
    %2026 = vmatpush1.bf16.msra.mxu0 0
    %2027 = vmatprep.mubr.bf16.mxu0 0
    %2028 = vmatmul.mubr.bf16.gmra.mrb[0].mxu0 %v1993
    %v2029 = vpop.f32.mrb[0].mxu0
    %v2030 = vadd.f32 0.0, %v2029
    %v2031 = vpop.f32.mrb[0].mxu0
    %v2032 = vadd.f32 0.0, %v2031
    %v2033 = vpop.f32.mrb[0].mxu0
    %v2034 = vpop.f32.mrb[0].mxu0
    %2035 = vdwg.mxu0
    %2036 = vmatprep.subr.bf16.mxu0 %v140
    %2037 = vmatpush1.bf16.msra.mxu0 %v137
    %2038 = vmatprep.subr.bf16.mxu0 0
    %2039 = vmatpush1.bf16.msra.mxu0 0
    %2040 = vmatprep.subr.bf16.mxu0 0
    %2041 = vmatpush1.bf16.msra.mxu0 0
    %2042 = vmatprep.subr.bf16.mxu0 0
    %2043 = vmatpush1.bf16.msra.mxu0 0
    %2044 = vmatprep.subr.bf16.mxu0 0
    %2045 = vmatpush1.bf16.msra.mxu0 0
    %2046 = vmatprep.subr.bf16.mxu0 0
    %2047 = vmatpush1.bf16.msra.mxu0 0
    %2048 = vmatprep.subr.bf16.mxu0 0
    %2049 = vmatpush1.bf16.msra.mxu0 0
    %2050 = vmatprep.subr.bf16.mxu0 0
    %2051 = vmatpush1.bf16.msra.mxu0 0
    %2052 = vmatprep.subr.bf16.mxu0 0
    %2053 = vmatpush1.bf16.msra.mxu0 0
    %2054 = vmatprep.subr.bf16.mxu0 0
    %2055 = vmatpush1.bf16.msra.mxu0 0
    %2056 = vmatprep.subr.bf16.mxu0 0
    %2057 = vmatpush1.bf16.msra.mxu0 0
    %2058 = vmatprep.subr.bf16.mxu0 0
    %2059 = vmatpush1.bf16.msra.mxu0 0
    %2060 = vmatprep.subr.bf16.mxu0 0
    %2061 = vmatpush1.bf16.msra.mxu0 0
    %2062 = vmatprep.subr.bf16.mxu0 0
    %2063 = vmatpush1.bf16.msra.mxu0 0
    %2064 = vmatprep.subr.bf16.mxu0 0
    %2065 = vmatpush1.bf16.msra.mxu0 0
    %2066 = vmatprep.subr.bf16.mxu0 0
    %2067 = vmatpush1.bf16.msra.mxu0 0
    %2068 = vmatprep.mubr.bf16.mxu0 0
    %2069 = vmatmul.mubr.bf16.gmra.mrb[0].mxu0 %v1993
    %v2070 = vpop.f32.mrb[0].mxu0
    %v2071 = vadd.f32 0.0, %v2070
    %v2072 = vpop.f32.mrb[0].mxu0
    %v2073 = vadd.f32 0.0, %v2072
    %v2074 = vpop.f32.mrb[0].mxu0
    %v2075 = vpop.f32.mrb[0].mxu0
    %2076 = vdwg.mxu0
    %2077 = vmatprep.subr.bf16.mxu0 %v321
    %2078 = vmatpush1.bf16.msra.mxu0 %v320
    %2079 = vmatprep.subr.bf16.mxu0 %v325
    %2080 = vmatpush1.bf16.msra.mxu0 %v324
    %2081 = vmatprep.subr.bf16.mxu0 %v329
    %2082 = vmatpush1.bf16.msra.mxu0 %v328
    %2083 = vmatprep.subr.bf16.mxu0 %v333
    %2084 = vmatpush1.bf16.msra.mxu0 %v332
    %2085 = vmatprep.subr.bf16.mxu0 %v337
    %2086 = vmatpush1.bf16.msra.mxu0 %v336
    %2087 = vmatprep.subr.bf16.mxu0 %v341
    %2088 = vmatpush1.bf16.msra.mxu0 %v340
    %2089 = vmatprep.subr.bf16.mxu0 %v345
    %2090 = vmatpush1.bf16.msra.mxu0 %v344
    %2091 = vmatprep.subr.bf16.mxu0 %v349
    %2092 = vmatpush1.bf16.msra.mxu0 %v348
    %2093 = vmatprep.subr.bf16.mxu0 0
    %2094 = vmatpush1.bf16.msra.mxu0 0
    %2095 = vmatprep.subr.bf16.mxu0 0
    %2096 = vmatpush1.bf16.msra.mxu0 0
    %2097 = vmatprep.subr.bf16.mxu0 0
    %2098 = vmatpush1.bf16.msra.mxu0 0
    %2099 = vmatprep.subr.bf16.mxu0 0
    %2100 = vmatpush1.bf16.msra.mxu0 0
    %2101 = vmatprep.subr.bf16.mxu0 0
    %2102 = vmatpush1.bf16.msra.mxu0 0
    %2103 = vmatprep.subr.bf16.mxu0 0
    %2104 = vmatpush1.bf16.msra.mxu0 0
    %2105 = vmatprep.subr.bf16.mxu0 0
    %2106 = vmatpush1.bf16.msra.mxu0 0
    %2107 = vmatprep.subr.bf16.mxu0 0
    %2108 = vmatpush1.bf16.msra.mxu0 0
    %2109 = vmatprep.mubr.bf16.mxu0 0
    %2110 = vmatmul.mubr.bf16.gmra.mrb[0].mxu0 %v1991
    %v2111 = vpop.f32.mrb[0].mxu0
    %v2112 = vadd.f32 %v2030, %v2111
    %v2113 = vpop.f32.mrb[0].mxu0
    %v2114 = vadd.f32 %v2032, %v2113
    %v2115 = vpop.f32.mrb[0].mxu0
    %v2116 = vpop.f32.mrb[0].mxu0
    %2117 = vdwg.mxu0
    %2118 = vmatprep.subr.bf16.mxu0 %v323
    %2119 = vmatpush1.bf16.msra.mxu0 %v322
    %2120 = vmatprep.subr.bf16.mxu0 %v327
    %2121 = vmatpush1.bf16.msra.mxu0 %v326
    %2122 = vmatprep.subr.bf16.mxu0 %v331
    %2123 = vmatpush1.bf16.msra.mxu0 %v330
    %2124 = vmatprep.subr.bf16.mxu0 %v335
    %2125 = vmatpush1.bf16.msra.mxu0 %v334
    %2126 = vmatprep.subr.bf16.mxu0 %v339
    %2127 = vmatpush1.bf16.msra.mxu0 %v338
    %2128 = vmatprep.subr.bf16.mxu0 %v343
    %2129 = vmatpush1.bf16.msra.mxu0 %v342
    %2130 = vmatprep.subr.bf16.mxu0 %v347
    %2131 = vmatpush1.bf16.msra.mxu0 %v346
    %2132 = vmatprep.subr.bf16.mxu0 %v351
    %2133 = vmatpush1.bf16.msra.mxu0 %v350
    %2134 = vmatprep.subr.bf16.mxu0 0
    %2135 = vmatpush1.bf16.msra.mxu0 0
    %2136 = vmatprep.subr.bf16.mxu0 0
    %2137 = vmatpush1.bf16.msra.mxu0 0
    %2138 = vmatprep.subr.bf16.mxu0 0
    %2139 = vmatpush1.bf16.msra.mxu0 0
    %2140 = vmatprep.subr.bf16.mxu0 0
    %2141 = vmatpush1.bf16.msra.mxu0 0
    %2142 = vmatprep.subr.bf16.mxu0 0
    %2143 = vmatpush1.bf16.msra.mxu0 0
    %2144 = vmatprep.subr.bf16.mxu0 0
    %2145 = vmatpush1.bf16.msra.mxu0 0
    %2146 = vmatprep.subr.bf16.mxu0 0
    %2147 = vmatpush1.bf16.msra.mxu0 0
    %2148 = vmatprep.subr.bf16.mxu0 0
    %2149 = vmatpush1.bf16.msra.mxu0 0
    %2150 = vmatprep.mubr.bf16.mxu0 0
    %2151 = vmatmul.mubr.bf16.gmra.mrb[0].mxu0 %v1991
    %v2152 = vpop.f32.mrb[0].mxu0
    %v2153 = vadd.f32 %v2071, %v2152
    %v2154 = vpop.f32.mrb[0].mxu0
    %v2155 = vadd.f32 %v2073, %v2154
    %v2156 = vpop.f32.mrb[0].mxu0
    %v2157 = vpop.f32.mrb[0].mxu0
    %2158 = vdwg.mxu0
    %v2159 = vmul.f32 %v2112, 0.5
    %v2160 = vtanh.pop %v2159
    %v2161 = vmul.f32 %v2160, 0.5
    %v2162 = vadd.f32 %v2161, 0.5
    %v2163 = vmul.f32 %v2114, 0.5
    %v2164 = vtanh.pop %v2163
    %v2165 = vmul.f32 %v2164, 0.5
    %v2166 = vadd.f32 %v2165, 0.5
    %v2167 = vtanh.pop %v2153
    %v2168 = vmul.f32 %v2155, 0.5
    %v2169 = vtanh.pop %v2168
    %v2170 = vmul.f32 %v2169, 0.5
    %v2171 = vadd.f32 %v2170, 0.5
    %v2172 = vmul.f32 %v2166, %v1796
    %v2173 = vmul.f32 %v2162, %v2167
    %v2174 = vadd.f32 %v2172, %v2173
    %v2175 = vtanh.pop %v2174
    %v2176 = vmul.f32 %v2171, %v2175
    %v2177 = vpack.c.bf16 %v1987, %v1987
    %2178 = vmatprep.subr.bf16.mxu0 %v504
    %2179 = vmatpush1.bf16.msra.mxu0 %v501
    %2180 = vmatprep.subr.bf16.mxu0 0
    %2181 = vmatpush1.bf16.msra.mxu0 0
    %2182 = vmatprep.subr.bf16.mxu0 0
    %2183 = vmatpush1.bf16.msra.mxu0 0
    %2184 = vmatprep.subr.bf16.mxu0 0
    %2185 = vmatpush1.bf16.msra.mxu0 0
    %2186 = vmatprep.subr.bf16.mxu0 0
    %2187 = vmatpush1.bf16.msra.mxu0 0
    %2188 = vmatprep.subr.bf16.mxu0 0
    %2189 = vmatpush1.bf16.msra.mxu0 0
    %2190 = vmatprep.subr.bf16.mxu0 0
    %2191 = vmatpush1.bf16.msra.mxu0 0
    %2192 = vmatprep.subr.bf16.mxu0 0
    %2193 = vmatpush1.bf16.msra.mxu0 0
    %2194 = vmatprep.subr.bf16.mxu0 0
    %2195 = vmatpush1.bf16.msra.mxu0 0
    %2196 = vmatprep.subr.bf16.mxu0 0
    %2197 = vmatpush1.bf16.msra.mxu0 0
    %2198 = vmatprep.subr.bf16.mxu0 0
    %2199 = vmatpush1.bf16.msra.mxu0 0
    %2200 = vmatprep.subr.bf16.mxu0 0
    %2201 = vmatpush1.bf16.msra.mxu0 0
    %2202 = vmatprep.subr.bf16.mxu0 0
    %2203 = vmatpush1.bf16.msra.mxu0 0
    %2204 = vmatprep.subr.bf16.mxu0 0
    %2205 = vmatpush1.bf16.msra.mxu0 0
    %2206 = vmatprep.subr.bf16.mxu0 0
    %2207 = vmatpush1.bf16.msra.mxu0 0
    %2208 = vmatprep.subr.bf16.mxu0 0
    %2209 = vmatpush1.bf16.msra.mxu0 0
    %2210 = vmatprep.mubr.bf16.mxu0 0
    %2211 = vmatmul.mubr.bf16.gmra.mrb[0].mxu0 %v1993
    %v2212 = vpop.f32.mrb[0].mxu0
    %v2213 = vadd.f32 0.0, %v2212
    %v2214 = vpop.f32.mrb[0].mxu0
    %v2215 = vadd.f32 0.0, %v2214
    %v2216 = vpop.f32.mrb[0].mxu0
    %v2217 = vpop.f32.mrb[0].mxu0
    %2218 = vdwg.mxu0
    %2219 = vmatprep.subr.bf16.mxu0 %v510
    %2220 = vmatpush1.bf16.msra.mxu0 %v507
    %2221 = vmatprep.subr.bf16.mxu0 0
    %2222 = vmatpush1.bf16.msra.mxu0 0
    %2223 = vmatprep.subr.bf16.mxu0 0
    %2224 = vmatpush1.bf16.msra.mxu0 0
    %2225 = vmatprep.subr.bf16.mxu0 0
    %2226 = vmatpush1.bf16.msra.mxu0 0
    %2227 = vmatprep.subr.bf16.mxu0 0
    %2228 = vmatpush1.bf16.msra.mxu0 0
    %2229 = vmatprep.subr.bf16.mxu0 0
    %2230 = vmatpush1.bf16.msra.mxu0 0
    %2231 = vmatprep.subr.bf16.mxu0 0
    %2232 = vmatpush1.bf16.msra.mxu0 0
    %2233 = vmatprep.subr.bf16.mxu0 0
    %2234 = vmatpush1.bf16.msra.mxu0 0
    %2235 = vmatprep.subr.bf16.mxu0 0
    %2236 = vmatpush1.bf16.msra.mxu0 0
    %2237 = vmatprep.subr.bf16.mxu0 0
    %2238 = vmatpush1.bf16.msra.mxu0 0
    %2239 = vmatprep.subr.bf16.mxu0 0
    %2240 = vmatpush1.bf16.msra.mxu0 0
    %2241 = vmatprep.subr.bf16.mxu0 0
    %2242 = vmatpush1.bf16.msra.mxu0 0
    %2243 = vmatprep.subr.bf16.mxu0 0
    %2244 = vmatpush1.bf16.msra.mxu0 0
    %2245 = vmatprep.subr.bf16.mxu0 0
    %2246 = vmatpush1.bf16.msra.mxu0 0
    %2247 = vmatprep.subr.bf16.mxu0 0
    %2248 = vmatpush1.bf16.msra.mxu0 0
    %2249 = vmatprep.subr.bf16.mxu0 0
    %2250 = vmatpush1.bf16.msra.mxu0 0
    %2251 = vmatprep.mubr.bf16.mxu0 0
    %2252 = vmatmul.mubr.bf16.gmra.mrb[0].mxu0 %v1993
    %v2253 = vpop.f32.mrb[0].mxu0
    %v2254 = vadd.f32 0.0, %v2253
    %v2255 = vpop.f32.mrb[0].mxu0
    %v2256 = vadd.f32 0.0, %v2255
    %v2257 = vpop.f32.mrb[0].mxu0
    %v2258 = vpop.f32.mrb[0].mxu0
    %2259 = vdwg.mxu0
    %2260 = vmatprep.subr.bf16.mxu0 %v691
    %2261 = vmatpush1.bf16.msra.mxu0 %v690
    %2262 = vmatprep.subr.bf16.mxu0 %v695
    %2263 = vmatpush1.bf16.msra.mxu0 %v694
    %2264 = vmatprep.subr.bf16.mxu0 %v699
    %2265 = vmatpush1.bf16.msra.mxu0 %v698
    %2266 = vmatprep.subr.bf16.mxu0 %v703
    %2267 = vmatpush1.bf16.msra.mxu0 %v702
    %2268 = vmatprep.subr.bf16.mxu0 %v707
    %2269 = vmatpush1.bf16.msra.mxu0 %v706
    %2270 = vmatprep.subr.bf16.mxu0 %v711
    %2271 = vmatpush1.bf16.msra.mxu0 %v710
    %2272 = vmatprep.subr.bf16.mxu0 %v715
    %2273 = vmatpush1.bf16.msra.mxu0 %v714
    %2274 = vmatprep.subr.bf16.mxu0 %v719
    %2275 = vmatpush1.bf16.msra.mxu0 %v718
    %2276 = vmatprep.subr.bf16.mxu0 0
    %2277 = vmatpush1.bf16.msra.mxu0 0
    %2278 = vmatprep.subr.bf16.mxu0 0
    %2279 = vmatpush1.bf16.msra.mxu0 0
    %2280 = vmatprep.subr.bf16.mxu0 0
    %2281 = vmatpush1.bf16.msra.mxu0 0
    %2282 = vmatprep.subr.bf16.mxu0 0
    %2283 = vmatpush1.bf16.msra.mxu0 0
    %2284 = vmatprep.subr.bf16.mxu0 0
    %2285 = vmatpush1.bf16.msra.mxu0 0
    %2286 = vmatprep.subr.bf16.mxu0 0
    %2287 = vmatpush1.bf16.msra.mxu0 0
    %2288 = vmatprep.subr.bf16.mxu0 0
    %2289 = vmatpush1.bf16.msra.mxu0 0
    %2290 = vmatprep.subr.bf16.mxu0 0
    %2291 = vmatpush1.bf16.msra.mxu0 0
    %2292 = vmatprep.mubr.bf16.mxu0 0
    %2293 = vmatmul.mubr.bf16.gmra.mrb[0].mxu0 %v2177
    %v2294 = vpop.f32.mrb[0].mxu0
    %v2295 = vadd.f32 %v2213, %v2294
    %v2296 = vpop.f32.mrb[0].mxu0
    %v2297 = vadd.f32 %v2215, %v2296
    %v2298 = vpop.f32.mrb[0].mxu0
    %v2299 = vpop.f32.mrb[0].mxu0
    %2300 = vdwg.mxu0
    %2301 = vmatprep.subr.bf16.mxu0 %v693
    %2302 = vmatpush1.bf16.msra.mxu0 %v692
    %2303 = vmatprep.subr.bf16.mxu0 %v697
    %2304 = vmatpush1.bf16.msra.mxu0 %v696
    %2305 = vmatprep.subr.bf16.mxu0 %v701
    %2306 = vmatpush1.bf16.msra.mxu0 %v700
    %2307 = vmatprep.subr.bf16.mxu0 %v705
    %2308 = vmatpush1.bf16.msra.mxu0 %v704
    %2309 = vmatprep.subr.bf16.mxu0 %v709
    %2310 = vmatpush1.bf16.msra.mxu0 %v708
    %2311 = vmatprep.subr.bf16.mxu0 %v713
    %2312 = vmatpush1.bf16.msra.mxu0 %v712
    %2313 = vmatprep.subr.bf16.mxu0 %v717
    %2314 = vmatpush1.bf16.msra.mxu0 %v716
    %2315 = vmatprep.subr.bf16.mxu0 %v721
    %2316 = vmatpush1.bf16.msra.mxu0 %v720
    %2317 = vmatprep.subr.bf16.mxu0 0
    %2318 = vmatpush1.bf16.msra.mxu0 0
    %2319 = vmatprep.subr.bf16.mxu0 0
    %2320 = vmatpush1.bf16.msra.mxu0 0
    %2321 = vmatprep.subr.bf16.mxu0 0
    %2322 = vmatpush1.bf16.msra.mxu0 0
    %2323 = vmatprep.subr.bf16.mxu0 0
    %2324 = vmatpush1.bf16.msra.mxu0 0
    %2325 = vmatprep.subr.bf16.mxu0 0
    %2326 = vmatpush1.bf16.msra.mxu0 0
    %2327 = vmatprep.subr.bf16.mxu0 0
    %2328 = vmatpush1.bf16.msra.mxu0 0
    %2329 = vmatprep.subr.bf16.mxu0 0
    %2330 = vmatpush1.bf16.msra.mxu0 0
    %2331 = vmatprep.subr.bf16.mxu0 0
    %2332 = vmatpush1.bf16.msra.mxu0 0
    %2333 = vmatprep.mubr.bf16.mxu0 0
    %2334 = vmatmul.mubr.bf16.gmra.mrb[0].mxu0 %v2177
    %v2335 = vpop.f32.mrb[0].mxu0
    %v2336 = vadd.f32 %v2254, %v2335
    %v2337 = vpop.f32.mrb[0].mxu0
    %v2338 = vadd.f32 %v2256, %v2337
    %v2339 = vpop.f32.mrb[0].mxu0
    %v2340 = vpop.f32.mrb[0].mxu0
    %2341 = vdwg.mxu0
    %v2342 = vmul.f32 %v2295, 0.5
    %v2343 = vtanh.pop %v2342
    %v2344 = vmul.f32 %v2343, 0.5
    %v2345 = vadd.f32 %v2344, 0.5
    %v2346 = vmul.f32 %v2297, 0.5
    %v2347 = vtanh.pop %v2346
    %v2348 = vmul.f32 %v2347, 0.5
    %v2349 = vadd.f32 %v2348, 0.5
    %v2350 = vtanh.pop %v2336
    %v2351 = vmul.f32 %v2338, 0.5
    %v2352 = vtanh.pop %v2351
    %v2353 = vmul.f32 %v2352, 0.5
    %v2354 = vadd.f32 %v2353, 0.5
    %v2355 = vmul.f32 %v2349, %v1985
    %v2356 = vmul.f32 %v2345, %v2350
    %v2357 = vadd.f32 %v2355, %v2356
    %v2358 = vtanh.pop %v2357
    %v2359 = vmul.f32 %v2354, %v2358
    %v2360 = vld [vmem:[%s5] sm:$0xff]
    %v2361 = vld [vmem:[%s5 + $0x8] sm:$0xff]
    %v2362 = vld [vmem:[%s5 + $0x10] sm:$0xff]
    %v2363 = vld [vmem:[%s5 + $0x18] sm:$0xff]
    %v2364 = vld [vmem:[%s5 + $0x20] sm:$0xff]
    %v2365 = vld [vmem:[%s5 + $0x28] sm:$0xff]
    %v2366 = vld [vmem:[%s5 + $0x30] sm:$0xff]
    %v2367 = vld [vmem:[%s5 + $0x38] sm:$0xff]
    %v2368 = vld [vmem:[%s5 + $0x40] sm:$0xff]
    %v2369 = vld [vmem:[%s5 + $0x48] sm:$0xff]
    %v2370 = vld [vmem:[%s5 + $0x50] sm:$0xff]
    %v2371 = vld [vmem:[%s5 + $0x58] sm:$0xff]
    %v2372 = vld [vmem:[%s5 + $0x60] sm:$0xff]
    %v2373 = vld [vmem:[%s5 + $0x68] sm:$0xff]
    %v2374 = vld [vmem:[%s5 + $0x70] sm:$0xff]
    %v2375 = vld [vmem:[%s5 + $0x78] sm:$0xff]
    %v2376 = vld [vmem:[%s6] sm:$0xff]
    %v2377 = vld [vmem:[%s6 + $0x8] sm:$0xff]
    %v2378 = vld [vmem:[%s6 + $0x10] sm:$0xff]
    %v2379 = vld [vmem:[%s6 + $0x18] sm:$0xff]
    %v2380 = vld [vmem:[%s6 + $0x20] sm:$0xff]
    %v2381 = vld [vmem:[%s6 + $0x28] sm:$0xff]
    %v2382 = vld [vmem:[%s6 + $0x30] sm:$0xff]
    %v2383 = vld [vmem:[%s6 + $0x38] sm:$0xff]
    %v2384 = vld [vmem:[%s6 + $0x40] sm:$0xff]
    %v2385 = vld [vmem:[%s6 + $0x48] sm:$0xff]
    %v2386 = vld [vmem:[%s6 + $0x50] sm:$0xff]
    %v2387 = vld [vmem:[%s6 + $0x58] sm:$0xff]
    %v2388 = vld [vmem:[%s6 + $0x60] sm:$0xff]
    %v2389 = vld [vmem:[%s6 + $0x68] sm:$0xff]
    %v2390 = vld [vmem:[%s6 + $0x70] sm:$0xff]
    %v2391 = vld [vmem:[%s6 + $0x78] sm:$0xff]
    %2392 = vmatprep.subr.mxu0 0.0
    %2393 = vmatpush1.msra.mxu0 %v2376
    %2394 = vmatprep.subr.mxu0 0.0
    %2395 = vmatpush1.msra.mxu0 %v2377
    %2396 = vmatprep.subr.mxu0 0.0
    %2397 = vmatpush1.msra.mxu0 %v2378
    %2398 = vmatprep.subr.mxu0 0.0
    %2399 = vmatpush1.msra.mxu0 %v2379
    %2400 = vmatprep.subr.mxu0 0.0
    %2401 = vmatpush1.msra.mxu0 %v2380
    %2402 = vmatprep.subr.mxu0 0.0
    %2403 = vmatpush1.msra.mxu0 %v2381
    %2404 = vmatprep.subr.mxu0 0.0
    %2405 = vmatpush1.msra.mxu0 %v2382
    %2406 = vmatprep.subr.mxu0 0.0
    %2407 = vmatpush1.msra.mxu0 %v2383
    %2408 = vmatprep.subr.mxu0 0.0
    %2409 = vmatpush1.msra.mxu0 %v2384
    %2410 = vmatprep.subr.mxu0 0.0
    %2411 = vmatpush1.msra.mxu0 %v2385
    %2412 = vmatprep.subr.mxu0 0.0
    %2413 = vmatpush1.msra.mxu0 %v2386
    %2414 = vmatprep.subr.mxu0 0.0
    %2415 = vmatpush1.msra.mxu0 %v2387
    %2416 = vmatprep.subr.mxu0 0.0
    %2417 = vmatpush1.msra.mxu0 %v2388
    %2418 = vmatprep.subr.mxu0 0.0
    %2419 = vmatpush1.msra.mxu0 %v2389
    %2420 = vmatprep.subr.mxu0 0.0
    %2421 = vmatpush1.msra.mxu0 %v2390
    %2422 = vmatprep.subr.mxu0 0.0
    %2423 = vmatpush1.msra.mxu0 %v2391
    %2424 = vmatprep.subr.mxu0 0.0
    %2425 = vmatpush1.msra.mxu0 0.0
    %2426 = vmatprep.subr.mxu0 0.0
    %2427 = vmatpush1.msra.mxu0 0.0
    %2428 = vmatprep.subr.mxu0 0.0
    %2429 = vmatpush1.msra.mxu0 0.0
    %2430 = vmatprep.subr.mxu0 0.0
    %2431 = vmatpush1.msra.mxu0 0.0
    %2432 = vmatprep.subr.mxu0 0.0
    %2433 = vmatpush1.msra.mxu0 0.0
    %2434 = vmatprep.subr.mxu0 0.0
    %2435 = vmatpush1.msra.mxu0 0.0
    %2436 = vmatprep.subr.mxu0 0.0
    %2437 = vmatpush1.msra.mxu0 0.0
    %2438 = vmatprep.subr.mxu0 0.0
    %2439 = vmatpush1.msra.mxu0 0.0
    %2440 = vmatprep.subr.mxu0 0.0
    %2441 = vmatpush1.msra.mxu0 0.0
    %2442 = vmatprep.subr.mxu0 0.0
    %2443 = vmatpush1.msra.mxu0 0.0
    %2444 = vmatprep.subr.mxu0 0.0
    %2445 = vmatpush1.msra.mxu0 0.0
    %2446 = vmatprep.subr.mxu0 0.0
    %2447 = vmatpush1.msra.mxu0 0.0
    %2448 = vmatprep.subr.mxu0 0.0
    %2449 = vmatpush1.msra.mxu0 0.0
    %2450 = vmatprep.subr.mxu0 0.0
    %2451 = vmatpush1.msra.mxu0 0.0
    %2452 = vmatprep.subr.mxu0 0.0
    %2453 = vmatpush1.msra.mxu0 0.0
    %2454 = vmatprep.subr.mxu0 0.0
    %2455 = vmatpush1.msra.mxu0 0.0
    %2456 = vmatprep.mubr.f32.mxu0 0.0
    %2457 = vmatmul.mubr.f32.gmra.mrb[0].mxu0 %v2359
    %v2458 = vpop.f32.mrb[0].mxu0
    %v2459 = vadd.f32 0.0, %v2458
    %v2460 = vpop.f32.mrb[0].mxu0
    %2461 = vdwg.mxu0
    %2462 = vmatprep.subr.mxu0 0.0
    %2463 = vmatpush1.msra.mxu0 %v2360
    %2464 = vmatprep.subr.mxu0 0.0
    %2465 = vmatpush1.msra.mxu0 %v2361
    %2466 = vmatprep.subr.mxu0 0.0
    %2467 = vmatpush1.msra.mxu0 %v2362
    %2468 = vmatprep.subr.mxu0 0.0
    %2469 = vmatpush1.msra.mxu0 %v2363
    %2470 = vmatprep.subr.mxu0 0.0
    %2471 = vmatpush1.msra.mxu0 %v2364
    %2472 = vmatprep.subr.mxu0 0.0
    %2473 = vmatpush1.msra.mxu0 %v2365
    %2474 = vmatprep.subr.mxu0 0.0
    %2475 = vmatpush1.msra.mxu0 %v2366
    %2476 = vmatprep.subr.mxu0 0.0
    %2477 = vmatpush1.msra.mxu0 %v2367
    %2478 = vmatprep.subr.mxu0 0.0
    %2479 = vmatpush1.msra.mxu0 %v2368
    %2480 = vmatprep.subr.mxu0 0.0
    %2481 = vmatpush1.msra.mxu0 %v2369
    %2482 = vmatprep.subr.mxu0 0.0
    %2483 = vmatpush1.msra.mxu0 %v2370
    %2484 = vmatprep.subr.mxu0 0.0
    %2485 = vmatpush1.msra.mxu0 %v2371
    %2486 = vmatprep.subr.mxu0 0.0
    %2487 = vmatpush1.msra.mxu0 %v2372
    %2488 = vmatprep.subr.mxu0 0.0
    %2489 = vmatpush1.msra.mxu0 %v2373
    %2490 = vmatprep.subr.mxu0 0.0
    %2491 = vmatpush1.msra.mxu0 %v2374
    %2492 = vmatprep.subr.mxu0 0.0
    %2493 = vmatpush1.msra.mxu0 %v2375
    %2494 = vmatprep.subr.mxu0 0.0
    %2495 = vmatpush1.msra.mxu0 0.0
    %2496 = vmatprep.subr.mxu0 0.0
    %2497 = vmatpush1.msra.mxu0 0.0
    %2498 = vmatprep.subr.mxu0 0.0
    %2499 = vmatpush1.msra.mxu0 0.0
    %2500 = vmatprep.subr.mxu0 0.0
    %2501 = vmatpush1.msra.mxu0 0.0
    %2502 = vmatprep.subr.mxu0 0.0
    %2503 = vmatpush1.msra.mxu0 0.0
    %2504 = vmatprep.subr.mxu0 0.0
    %2505 = vmatpush1.msra.mxu0 0.0
    %2506 = vmatprep.subr.mxu0 0.0
    %2507 = vmatpush1.msra.mxu0 0.0
    %2508 = vmatprep.subr.mxu0 0.0
    %2509 = vmatpush1.msra.mxu0 0.0
    %2510 = vmatprep.subr.mxu0 0.0
    %2511 = vmatpush1.msra.mxu0 0.0
    %2512 = vmatprep.subr.mxu0 0.0
    %2513 = vmatpush1.msra.mxu0 0.0
    %2514 = vmatprep.subr.mxu0 0.0
    %2515 = vmatpush1.msra.mxu0 0.0
    %2516 = vmatprep.subr.mxu0 0.0
    %2517 = vmatpush1.msra.mxu0 0.0
    %2518 = vmatprep.subr.mxu0 0.0
    %2519 = vmatpush1.msra.mxu0 0.0
    %2520 = vmatprep.subr.mxu0 0.0
    %2521 = vmatpush1.msra.mxu0 0.0
    %2522 = vmatprep.subr.mxu0 0.0
    %2523 = vmatpush1.msra.mxu0 0.0
    %2524 = vmatprep.subr.mxu0 0.0
    %2525 = vmatpush1.msra.mxu0 0.0
    %2526 = vmatprep.mubr.f32.mxu0 0.0
    %2527 = vmatmul.mubr.f32.gmra.mrb[0].mxu0 %v2176
    %v2528 = vpop.f32.mrb[0].mxu0
    %v2529 = vadd.f32 %v2459, %v2528
    %v2530 = vpop.f32.mrb[0].mxu0
    %2531 = vdwg.mxu0
    %v2532 = vld [vmem:[%s7] sm:$0x1]
    %v2534 = vlaneseq
    %v2535 = vshrl.u32 %v2534, 7
    %v2536 = vsub.s32 0, %v2535
    %v2537 = vrot.slane %v2532, %v2536
    %v2539 = vadd.f32 %v2529, %v2537
    %vm2540 = vcmask 130048
    %2541 = vst.msk [vmem:[#allocation5] sm:$0xff] %vm2540, %v2539
    // Predicated region
    $region38: #{tpu_custom_call.1} parent=1 // pred_check
      _
    $region39: #{tpu_custom_call.1} parent=1 // pred_check_branch
      %2543 = sbr.rel (0) target = $region41
    $region40: #{tpu_custom_call.1} parent=1 // pred_region
      %s2545 = ssub.s32 128, 128
      %2546 = vsyncadd [#allocation4], %s2545
      %s2548 = sshll.u32 [#allocation5], 4
      %s2549 = int_to_ptr.vmem [resolvable:$true] %s2548
      %2551 = dma.vmem_to_hbm [thread:$0]  %s2549, 128, %s8, [#allocation4]
    $region41: #{tpu_custom_call.1} parent=1 // pred_fallthru
      _
    // Predicated region
    $region42: #{tpu_custom_call.1} parent=1 // pred_check
      _
    $region43: #{tpu_custom_call.1} parent=1 // pred_check_branch
      %2553 = sbr.rel (0) target = $region45
    $region44: #{tpu_custom_call.1} parent=1 // pred_region
      %2554 = dma.done [#allocation4], 128
    $region45: #{tpu_custom_call.1} parent=1 // pred_fallthru
      _
    %2555 = vsyncpa [#allocation3], 1
    %2556 = vsyncpa [#allocation4], 1

</llo_original>
